<compile_context>
chip_gen: v6e
topology: v6e:2x2x1
jax: 0.10.0
libtpu: 0.0.40
codegen_flags: <defaults>
</compile_context>

<pallas_src>
import math
from functools import partial

import numpy as np
import jax
import jax.numpy as jnp
from jax.experimental import pallas as pl
from jax.experimental.pallas import tpu as pltpu


# ----------------------------------------------------------------------------- kernel

def _decoder_kernel(
    dec_in_ref, enc_ref,
    s_wqkv_ref, s_fc_ref,
    e_wq_ref, e_wkv_ref, e_fc_ref,
    w1_ref, b1_ref, w2_ref, b2_ref,
    dec_out_ref, self_attn_ref, enc_attn_ref,
    state_ref, ctx_ref,
    *, b, L, L_enc, d_model, h, d_k, d_v,
):
    layer = pl.program_id(0)
    inv_sqrt_dk = jnp.float32(1.0 / math.sqrt(d_k))

    @pl.when(layer == 0)
    def _():
        state_ref[...] = dec_in_ref[...]

    def add_ln(x, y):
        # LayerNorm(x + y), elementwise_affine=False, eps=1e-5 (kept in f32)
        z = x + y
        mu = jnp.mean(z, axis=-1, keepdims=True)
        var = jnp.mean(jnp.square(z - mu), axis=-1, keepdims=True)
        return (z - mu) * jax.lax.rsqrt(var + jnp.float32(1e-5))

    def softmax_last(s):
        s = s - jnp.max(s, axis=-1, keepdims=True)
        e = jnp.exp(s)
        return e * pl.reciprocal(jnp.sum(e, axis=-1, keepdims=True), approx=True)

    x = state_ref[...]            # (b*L, d_model)   decoder stream (carried across layers)
    enc = enc_ref[...]            # (b*L_enc, d_model)

    # ------------------------------ self attention ------------------------------
    # Fused Q|K|V projection: one MXU pass instead of three.
    qkv = jnp.dot(x, s_wqkv_ref[0], preferred_element_type=jnp.float32)   # (b*L, h*(2dk+dv))
    q_off, k_off, v_off = 0, h * d_k, 2 * h * d_k

    # Context per the reference einsum semantics: broadcast of colsum(V) per batch.
    for bi in range(b):
        v_blk = qkv[bi * L:(bi + 1) * L, v_off:v_off + h * d_v]           # (L, h*dv)
        vsum = jnp.sum(v_blk, axis=0, keepdims=True)                      # (1, h*dv)
        ctx_ref[bi * L:(bi + 1) * L, :] = jnp.broadcast_to(vsum, (L, h * d_v))

    # Attention probabilities (returned); causal mask generated in-kernel.
    row_q = jax.lax.broadcasted_iota(jnp.int32, (L, L), 0)
    col_k = jax.lax.broadcasted_iota(jnp.int32, (L, L), 1)
    causal = col_k > row_q
    for bi in range(b):
        for hi in range(h):
            qh = qkv[bi * L:(bi + 1) * L, q_off + hi * d_k:q_off + (hi + 1) * d_k]
            kh = qkv[bi * L:(bi + 1) * L, k_off + hi * d_k:k_off + (hi + 1) * d_k]
            s = jax.lax.dot_general(qh, kh, (((1,), (1,)), ((), ())),
                                    preferred_element_type=jnp.float32) * inv_sqrt_dk
            s = jnp.where(causal, jnp.float32(-1000000000.0), s)
            self_attn_ref[0, bi * h + hi] = softmax_last(s)

    attn_out = jnp.dot(ctx_ref[...], s_fc_ref[0], preferred_element_type=jnp.float32)
    out1 = add_ln(x, attn_out)

    # --------------------------- encoder-decoder attention ---------------------------
    q2 = jnp.dot(out1, e_wq_ref[0], preferred_element_type=jnp.float32)   # (b*L, h*dk)
    kv2 = jnp.dot(enc, e_wkv_ref[0], preferred_element_type=jnp.float32)  # (b*L_enc, h*(dk+dv))
    kv_k_off, kv_v_off = 0, h * d_k

    for bi in range(b):
        v_blk = kv2[bi * L_enc:(bi + 1) * L_enc, kv_v_off:kv_v_off + h * d_v]
        vsum = jnp.sum(v_blk, axis=0, keepdims=True)
        ctx_ref[bi * L:(bi + 1) * L, :] = jnp.broadcast_to(vsum, (L, h * d_v))

    for bi in range(b):
        for hi in range(h):
            qh = q2[bi * L:(bi + 1) * L, hi * d_k:(hi + 1) * d_k]
            kh = kv2[bi * L_enc:(bi + 1) * L_enc,
                     kv_k_off + hi * d_k:kv_k_off + (hi + 1) * d_k]
            s = jax.lax.dot_general(qh, kh, (((1,), (1,)), ((), ())),
                                    preferred_element_type=jnp.float32) * inv_sqrt_dk
            # dec_enc_attn_mask is None in the reference -> no masking at all
            enc_attn_ref[0, bi * h + hi] = softmax_last(s)

    attn_out2 = jnp.dot(ctx_ref[...], e_fc_ref[0], preferred_element_type=jnp.float32)
    out2 = add_ln(out1, attn_out2)

    # ------------------------------ position-wise FFN ------------------------------
    h1 = jnp.dot(out2, w1_ref[0], preferred_element_type=jnp.float32) + b1_ref[0]
    h1 = jnp.maximum(h1, jnp.float32(0.0))
    ffn = jnp.dot(h1, w2_ref[0], preferred_element_type=jnp.float32) + b2_ref[0]
    out3 = add_ln(out2, ffn)

    state_ref[...] = out3        # carry to next layer
    dec_out_ref[...] = out3      # final decoder output (constant block index -> resident)


# ----------------------------------------------------------------------------- wrapper

def positional_encoding(max_len, d_hid):
    pos = jnp.arange(max_len, dtype=jnp.float32).reshape(-1, 1)
    div = jnp.power(10000.0, jnp.arange(0, d_hid, 2, dtype=jnp.float32) / d_hid)
    X = pos / div
    P = jnp.zeros((1, max_len, d_hid), jnp.float32)
    P = P.at[:, :, 0::2].set(jnp.sin(X))
    P = P.at[:, :, 1::2].set(jnp.cos(X))
    return P


def init_decoder_params(key, d_model, d_ff, d_k, d_v, n_heads, n_layers):
    params = []
    for _ in range(n_layers):
        layer = {}
        for name in ("self", "enc"):
            key, k1, k2, k3, k4 = jax.random.split(key, 5)
            layer[name] = {
                "WQ": 0.02 * jax.random.normal(k1, (d_k * n_heads, d_model), jnp.float32),
                "WK": 0.02 * jax.random.normal(k2, (d_k * n_heads, d_model), jnp.float32),
                "WV": 0.02 * jax.random.normal(k3, (d_v * n_heads, d_model), jnp.float32),
                "fc": 0.02 * jax.random.normal(k4, (d_model, n_heads * d_v), jnp.float32),
            }
        key, k1, k2, k3, k4 = jax.random.split(key, 5)
        layer["ffn"] = {
            "w1": 0.02 * jax.random.normal(k1, (d_ff, d_model), jnp.float32),
            "b1": 0.02 * jax.random.normal(k2, (d_ff,), jnp.float32),
            "w2": 0.02 * jax.random.normal(k3, (d_model, d_ff), jnp.float32),
            "b2": 0.02 * jax.random.normal(k4, (d_model,), jnp.float32),
        }
        params.append(layer)
    return params


def decoder_forward(params, dec_inputs, enc_outputs, n_heads, d_k, d_v):
    b, L, d_model = dec_inputs.shape
    L_enc = enc_outputs.shape[1]
    n_layers = len(params)
    d_ff = params[0]["ffn"]["w1"].shape[0]
    h = n_heads

    # positional encoding + weight packing (cheap glue outside the kernel)
    P = positional_encoding(1000, d_model)
    x2 = (dec_inputs + P[:, :L, :]).reshape(b * L, d_model)
    enc2 = enc_outputs.reshape(b * L_enc, d_model)

    s_wqkv = jnp.stack([jnp.concatenate(
        [p["self"]["WQ"].T, p["self"]["WK"].T, p["self"]["WV"].T], axis=1) for p in params])
    s_fc = jnp.stack([p["self"]["fc"].T for p in params])
    e_wq = jnp.stack([p["enc"]["WQ"].T for p in params])
    e_wkv = jnp.stack([jnp.concatenate(
        [p["enc"]["WK"].T, p["enc"]["WV"].T], axis=1) for p in params])
    e_fc = jnp.stack([p["enc"]["fc"].T for p in params])
    w1t = jnp.stack([p["ffn"]["w1"].T for p in params])
    b1 = jnp.stack([p["ffn"]["b1"].reshape(1, d_ff) for p in params])
    w2t = jnp.stack([p["ffn"]["w2"].T for p in params])
    b2 = jnp.stack([p["ffn"]["b2"].reshape(1, d_model) for p in params])

    qkv_w = h * (2 * d_k + d_v)
    kv_w = h * (d_k + d_v)

    kern = partial(_decoder_kernel, b=b, L=L, L_enc=L_enc, d_model=d_model,
                   h=h, d_k=d_k, d_v=d_v)

    dec_out, self_attn, enc_attn = pl.pallas_call(
        kern,
        out_shape=(
            jax.ShapeDtypeStruct((b * L, d_model), jnp.float32),
            jax.ShapeDtypeStruct((n_layers, b * h, L, L), jnp.float32),
            jax.ShapeDtypeStruct((n_layers, b * h, L, L_enc), jnp.float32),
        ),
        grid_spec=pltpu.PrefetchScalarGridSpec(
            num_scalar_prefetch=0,
            grid=(n_layers,),
            in_specs=[
                pl.BlockSpec((b * L, d_model), lambda l: (0, 0)),         # dec stream (+PE)
                pl.BlockSpec((b * L_enc, d_model), lambda l: (0, 0)),     # encoder outputs
                pl.BlockSpec((1, d_model, qkv_w), lambda l: (l, 0, 0)),   # self fused QKV
                pl.BlockSpec((1, h * d_v, d_model), lambda l: (l, 0, 0)),  # self out proj
                pl.BlockSpec((1, d_model, h * d_k), lambda l: (l, 0, 0)),  # enc Q proj
                pl.BlockSpec((1, d_model, kv_w), lambda l: (l, 0, 0)),    # enc fused K|V
                pl.BlockSpec((1, h * d_v, d_model), lambda l: (l, 0, 0)),  # enc out proj
                pl.BlockSpec((1, d_model, d_ff), lambda l: (l, 0, 0)),    # ffn w1^T
                pl.BlockSpec((1, 1, d_ff), lambda l: (l, 0, 0)),          # ffn b1
                pl.BlockSpec((1, d_ff, d_model), lambda l: (l, 0, 0)),    # ffn w2^T
                pl.BlockSpec((1, 1, d_model), lambda l: (l, 0, 0)),       # ffn b2
            ],
            out_specs=(
                pl.BlockSpec((b * L, d_model), lambda l: (0, 0)),
                pl.BlockSpec((1, b * h, L, L), lambda l: (l, 0, 0, 0)),
                pl.BlockSpec((1, b * h, L, L_enc), lambda l: (l, 0, 0, 0)),
            ),
            scratch_shapes=[
                pltpu.VMEM((b * L, d_model), jnp.float32),   # decoder stream carried across layers
                pltpu.VMEM((b * L, h * d_v), jnp.float32),   # attention-context staging buffer
            ],
        ),
        compiler_params=pltpu.CompilerParams(
            dimension_semantics=("arbitrary",)),   # layer axis carries state -> sequential
    )(x2, enc2, s_wqkv, s_fc, e_wq, e_wkv, e_fc, w1t, b1, w2t, b2)

    dec_out = dec_out.reshape(b, L, d_model)
    self_attns = [self_attn[i].reshape(b, h, L, L) for i in range(n_layers)]
    enc_attns = [enc_attn[i].reshape(b, h, L, L_enc) for i in range(n_layers)]
    return dec_out, self_attns, enc_attns


# ----------------------------------------------------------------------------- reference

def _reference_decoder(params, dec_inputs, enc_outputs, n_heads, d_k, d_v):
    """Pure-JAX transcription of the PyTorch Decoder forward (basic_attn)."""
    b, L, d_model = dec_inputs.shape
    P = positional_encoding(1000, d_model)
    out = dec_inputs + P[:, :L, :]
    sub = jnp.triu(jnp.ones((b, L, L), jnp.int32), k=1)
    self_mask = jnp.broadcast_to(sub[:, None, :, :], (b, n_heads, L, L))

    def ln(z):
        mu = jnp.mean(z, axis=-1, keepdims=True)
        var = jnp.mean(jnp.square(z - mu), axis=-1, keepdims=True)
        return (z - mu) / jnp.sqrt(var + 1e-5)

    def mha(xq, xkv, p, mask):
        Lq, Lk = xq.shape[1], xkv.shape[1]
        q = (xq @ p["WQ"].T).reshape(b, Lq, n_heads, d_k).transpose(0, 2, 1, 3)
        k = (xkv @ p["WK"].T).reshape(b, Lk, n_heads, d_k).transpose(0, 2, 1, 3)
        v = (xkv @ p["WV"].T).reshape(b, Lk, n_heads, d_v).transpose(0, 2, 1, 3)
        scores = jnp.einsum('bhqd,bhkd->bhqk', q, k) / math.sqrt(d_k)
        if mask is not None:
            scores = jnp.where(mask != 0, -1000000000.0, scores)
        attn = jax.nn.softmax(scores, axis=-1)
        ctx = jnp.einsum('bhqk,bhvd->bhqd', attn, v)   # faithful reference einsum
        ctx = ctx.transpose(0, 2, 1, 3).reshape(b, Lq, n_heads * d_v)
        return ctx @ p["fc"].T, attn

    self_attns, enc_attns = [], []
    for layer in params:
        a, sa = mha(out, out, layer["self"], self_mask)
        out1 = ln(out + a)
        a2, ea = mha(out1, enc_outputs, layer["enc"], None)
        out2 = ln(out1 + a2)
        f = jnp.maximum(out2 @ layer["ffn"]["w1"].T + layer["ffn"]["b1"], 0.0)
        f = f @ layer["ffn"]["w2"].T + layer["ffn"]["b2"]
        out = ln(out2 + f)
        self_attns.append(sa)
        enc_attns.append(ea)
    return out, self_attns, enc_attns


# ----------------------------------------------------------------------------- main

if __name__ == "__main__":
    d_model, d_ff, d_k, d_v = 32, 64, 8, 8
    n_heads, n_layers = 4, 2
    batch, L_dec, L_enc = 2, 8, 16

    key = jax.random.PRNGKey(0)
    kp, kx, ke = jax.random.split(key, 3)
    params = init_decoder_params(kp, d_model, d_ff, d_k, d_v, n_heads, n_layers)
    dec_inputs = jax.random.normal(kx, (batch, L_dec, d_model), jnp.float32)
    enc_outputs = jax.random.normal(ke, (batch, L_enc, d_model), jnp.float32)

    dec_out, self_attns, enc_attns = decoder_forward(
        params, dec_inputs, enc_outputs, n_heads, d_k, d_v)

    jax.block_until_ready(dec_out)
    for a in self_attns + enc_attns:
        jax.block_until_ready(a)

    assert dec_out.shape == (batch, L_dec, d_model)
    assert self_attns[0].shape == (batch, n_heads, L_dec, L_dec)
    assert enc_attns[0].shape == (batch, n_heads, L_dec, L_enc)

    # numerical check against the pure-JAX transcription of the PyTorch forward
    ref_out, ref_sa, ref_ea = _reference_decoder(
        params, dec_inputs, enc_outputs, n_heads, d_k, d_v)
    np.testing.assert_allclose(np.asarray(dec_out), np.asarray(ref_out),
                               rtol=2e-2, atol=2e-2)
    for got, ref in zip(self_attns, ref_sa):
        np.testing.assert_allclose(np.asarray(got), np.asarray(ref), rtol=2e-2, atol=2e-2)
    for got, ref in zip(enc_attns, ref_ea):
        np.testing.assert_allclose(np.asarray(got), np.asarray(ref), rtol=2e-2, atol=2e-2)

    print("KERNEL_OK")
</pallas_src>

<mosaic_0001>
module attributes {stable_mosaic.version = 11 : i64} {
  func.func @_decoder_kernel(%arg0: i32, %arg1: memref<16x32xf32, #tpu.memory_space<vmem>>, %arg2: memref<32x32xf32, #tpu.memory_space<vmem>>, %arg3: memref<1x32x96xf32, #tpu.memory_space<vmem>>, %arg4: memref<1x32x32xf32, #tpu.memory_space<vmem>>, %arg5: memref<1x32x32xf32, #tpu.memory_space<vmem>>, %arg6: memref<1x32x64xf32, #tpu.memory_space<vmem>>, %arg7: memref<1x32x32xf32, #tpu.memory_space<vmem>>, %arg8: memref<1x32x64xf32, #tpu.memory_space<vmem>>, %arg9: memref<1x1x64xf32, #tpu.memory_space<vmem>>, %arg10: memref<1x64x32xf32, #tpu.memory_space<vmem>>, %arg11: memref<1x1x32xf32, #tpu.memory_space<vmem>>, %arg12: memref<16x32xf32, #tpu.memory_space<vmem>>, %arg13: memref<1x8x8x8xf32, #tpu.memory_space<vmem>>, %arg14: memref<1x8x8x16xf32, #tpu.memory_space<vmem>>, %arg15: memref<16x32xf32, #tpu.memory_space<vmem>>, %arg16: memref<16x32xf32, #tpu.memory_space<vmem>>) attributes {dimension_semantics = [#tpu.dimension_semantics<arbitrary>], iteration_bounds = array<i64: 2>, scalar_prefetch = 0 : i64, scratch_operands = 2 : i64, tpu.core_type = #tpu.core_type<tc>, window_params = [{pipeline_mode = #tpu.pipeline_mode<synchronous>, transform_indices = @transform_0, window_bounds = array<i64: 16, 32>}, {pipeline_mode = #tpu.pipeline_mode<synchronous>, transform_indices = @transform_1, window_bounds = array<i64: 32, 32>}, {transform_indices = @transform_2, window_bounds = array<i64: 1, 32, 96>}, {transform_indices = @transform_3, window_bounds = array<i64: 1, 32, 32>}, {transform_indices = @transform_4, window_bounds = array<i64: 1, 32, 32>}, {transform_indices = @transform_5, window_bounds = array<i64: 1, 32, 64>}, {transform_indices = @transform_6, window_bounds = array<i64: 1, 32, 32>}, {transform_indices = @transform_7, window_bounds = array<i64: 1, 32, 64>}, {transform_indices = @transform_8, window_bounds = array<i64: 1, 1, 64>}, {transform_indices = @transform_9, window_bounds = array<i64: 1, 64, 32>}, {transform_indices = @transform_10, window_bounds = array<i64: 1, 1, 32>}, {pipeline_mode = #tpu.pipeline_mode<synchronous>, transform_indices = @transform_11, window_bounds = array<i64: 16, 32>}, {transform_indices = @transform_12, window_bounds = array<i64: 1, 8, 8, 8>}, {transform_indices = @transform_13, window_bounds = array<i64: 1, 8, 8, 16>}]} {
    %c0_i32 = arith.constant 0 : i32
    %0 = arith.cmpi eq, %arg0, %c0_i32 : i32
    %1 = arith.extui %0 : i1 to i32
    %c0_i32_0 = arith.constant 0 : i32
    %2 = arith.cmpi ne, %1, %c0_i32_0 : i32
    scf.if %2 {
      %c0_201 = arith.constant 0 : index
      %c0_202 = arith.constant 0 : index
      %428 = vector.load %arg1[%c0_201, %c0_202] : memref<16x32xf32, #tpu.memory_space<vmem>>, vector<16x32xf32>
      %c0_203 = arith.constant 0 : index
      %c0_204 = arith.constant 0 : index
      %429 = vector.load %arg15[%c0_203, %c0_204] : memref<16x32xf32, #tpu.memory_space<vmem>>, vector<16x32xf32>
      tpu.vector_store %arg15[%c0_203, %c0_204], %428 {strides = array<i32>} : memref<16x32xf32, #tpu.memory_space<vmem>>, vector<16x32xf32>,
    } else {
    }
    %c0 = arith.constant 0 : index
    %c0_1 = arith.constant 0 : index
    %3 = vector.load %arg15[%c0, %c0_1] : memref<16x32xf32, #tpu.memory_space<vmem>>, vector<16x32xf32>
    %c0_2 = arith.constant 0 : index
    %c0_3 = arith.constant 0 : index
    %4 = vector.load %arg2[%c0_2, %c0_3] : memref<32x32xf32, #tpu.memory_space<vmem>>, vector<32x32xf32>
    %c0_4 = arith.constant 0 : index
    %c0_5 = arith.constant 0 : index
    %c0_6 = arith.constant 0 : index
    %5 = vector.load %arg3[%c0_4, %c0_5, %c0_6] : memref<1x32x96xf32, #tpu.memory_space<vmem>>, vector<1x32x96xf32>
    %6 = vector.shape_cast %5 : vector<1x32x96xf32> to vector<32x96xf32>
    %cst = arith.constant dense<0.000000e+00> : vector<16x96xf32>
    %7 = tpu.matmul %3, %6, %cst {dimension_numbers = #tpu.dot_dimension_numbers<[1], [0], [0], [1], [0, 0, 1, 1], [], []>} : vector<16x32xf32>, vector<32x96xf32>, vector<16x96xf32> -> vector<16x96xf32>
    %8 = vector.extract_strided_slice %7 {offsets = [0, 64], sizes = [8, 32], strides = [1, 1]} : vector<16x96xf32> to vector<8x32xf32>
    %cst_7 = arith.constant dense<0.000000e+00> : vector<32xf32>
    %9 = vector.multi_reduction <add>, %8, %cst_7 [0] : vector<8x32xf32> to vector<32xf32>
    %10 = vector.shape_cast %9 : vector<32xf32> to vector<1x32xf32>
    %11 = vector.shape_cast %10 : vector<1x32xf32> to vector<1x32xf32>
    %12 = vector.broadcast %11 : vector<1x32xf32> to vector<8x32xf32>
    %c0_8 = arith.constant 0 : index
    %c0_9 = arith.constant 0 : index
    %13 = vector.load %arg16[%c0_8, %c0_9] : memref<16x32xf32, #tpu.memory_space<vmem>>, vector<8x32xf32>
    tpu.vector_store %arg16[%c0_8, %c0_9], %12 {strides = array<i32>} : memref<16x32xf32, #tpu.memory_space<vmem>>, vector<8x32xf32>,
    %14 = vector.extract_strided_slice %7 {offsets = [8, 64], sizes = [8, 32], strides = [1, 1]} : vector<16x96xf32> to vector<8x32xf32>
    %cst_10 = arith.constant dense<0.000000e+00> : vector<32xf32>
    %15 = vector.multi_reduction <add>, %14, %cst_10 [0] : vector<8x32xf32> to vector<32xf32>
    %16 = vector.shape_cast %15 : vector<32xf32> to vector<1x32xf32>
    %17 = vector.shape_cast %16 : vector<1x32xf32> to vector<1x32xf32>
    %18 = vector.broadcast %17 : vector<1x32xf32> to vector<8x32xf32>
    %c8 = arith.constant 8 : index
    %c0_11 = arith.constant 0 : index
    %19 = vector.load %arg16[%c8, %c0_11] : memref<16x32xf32, #tpu.memory_space<vmem>>, vector<8x32xf32>
    tpu.vector_store %arg16[%c8, %c0_11], %18 {strides = array<i32>} : memref<16x32xf32, #tpu.memory_space<vmem>>, vector<8x32xf32>,
    %20 = tpu.iota {dimensions = array<i32: 0>} : vector<8x8xi32>
    %21 = tpu.iota {dimensions = array<i32: 1>} : vector<8x8xi32>
    %22 = arith.cmpi sgt, %21, %20 : vector<8x8xi32>
    %23 = vector.extract_strided_slice %7 {offsets = [0, 0], sizes = [8, 8], strides = [1, 1]} : vector<16x96xf32> to vector<8x8xf32>
    %24 = vector.extract_strided_slice %7 {offsets = [0, 32], sizes = [8, 8], strides = [1, 1]} : vector<16x96xf32> to vector<8x8xf32>
    %cst_12 = arith.constant dense<0.000000e+00> : vector<8x8xf32>
    %25 = tpu.matmul %23, %24, %cst_12 {dimension_numbers = #tpu.dot_dimension_numbers<[1], [1], [0], [0], [0, 0, 1, 0], [], []>} : vector<8x8xf32>, vector<8x8xf32>, vector<8x8xf32> -> vector<8x8xf32>
    %cst_13 = arith.constant 0.353553385 : f32
    %26 = vector.broadcast %cst_13 : f32 to vector<8x8xf32>
    %27 = arith.mulf %25, %26 : vector<8x8xf32>
    %cst_14 = arith.constant -1.000000e+09 : f32
    %28 = vector.broadcast %cst_14 : f32 to vector<8x8xf32>
    %29 = arith.select %22, %28, %27 : vector<8x8xi1>, vector<8x8xf32>
    %cst_15 = arith.constant dense<0xFF800000> : vector<8xf32>
    %30 = vector.multi_reduction <maximumf>, %29, %cst_15 [1] : vector<8x8xf32> to vector<8xf32>
    %31 = vector.shape_cast %30 : vector<8xf32> to vector<8x1xf32>
    %32 = vector.broadcast %31 : vector<8x1xf32> to vector<8x8xf32>
    %33 = arith.subf %29, %32 : vector<8x8xf32>
    %34 = math.exp %33 : vector<8x8xf32>
    %cst_16 = arith.constant dense<0.000000e+00> : vector<8xf32>
    %35 = vector.multi_reduction <add>, %34, %cst_16 [1] : vector<8x8xf32> to vector<8xf32>
    %36 = vector.shape_cast %35 : vector<8xf32> to vector<8x1xf32>
    %37 = tpu.reciprocal %36 {approx = true} : vector<8x1xf32> -> vector<8x1xf32>
    %38 = vector.broadcast %37 : vector<8x1xf32> to vector<8x8xf32>
    %39 = arith.mulf %34, %38 : vector<8x8xf32>
    %c0_17 = arith.constant 0 : index
    %c0_18 = arith.constant 0 : index
    %c0_19 = arith.constant 0 : index
    %c0_20 = arith.constant 0 : index
    %40 = vector.load %arg13[%c0_17, %c0_18, %c0_19, %c0_20] : memref<1x8x8x8xf32, #tpu.memory_space<vmem>>, vector<1x1x8x8xf32>
    %41 = vector.shape_cast %40 : vector<1x1x8x8xf32> to vector<8x8xf32>
    %42 = vector.shape_cast %39 : vector<8x8xf32> to vector<1x1x8x8xf32>
    tpu.vector_store %arg13[%c0_17, %c0_18, %c0_19, %c0_20], %42 {strides = array<i32>} : memref<1x8x8x8xf32, #tpu.memory_space<vmem>>, vector<1x1x8x8xf32>,
    %43 = vector.extract_strided_slice %7 {offsets = [0, 8], sizes = [8, 8], strides = [1, 1]} : vector<16x96xf32> to vector<8x8xf32>
    %44 = vector.extract_strided_slice %7 {offsets = [0, 40], sizes = [8, 8], strides = [1, 1]} : vector<16x96xf32> to vector<8x8xf32>
    %cst_21 = arith.constant dense<0.000000e+00> : vector<8x8xf32>
    %45 = tpu.matmul %43, %44, %cst_21 {dimension_numbers = #tpu.dot_dimension_numbers<[1], [1], [0], [0], [0, 0, 1, 0], [], []>} : vector<8x8xf32>, vector<8x8xf32>, vector<8x8xf32> -> vector<8x8xf32>
    %cst_22 = arith.constant 0.353553385 : f32
    %46 = vector.broadcast %cst_22 : f32 to vector<8x8xf32>
    %47 = arith.mulf %45, %46 : vector<8x8xf32>
    %cst_23 = arith.constant -1.000000e+09 : f32
    %48 = vector.broadcast %cst_23 : f32 to vector<8x8xf32>
    %49 = arith.select %22, %48, %47 : vector<8x8xi1>, vector<8x8xf32>
    %cst_24 = arith.constant dense<0xFF800000> : vector<8xf32>
    %50 = vector.multi_reduction <maximumf>, %49, %cst_24 [1] : vector<8x8xf32> to vector<8xf32>
    %51 = vector.shape_cast %50 : vector<8xf32> to vector<8x1xf32>
    %52 = vector.broadcast %51 : vector<8x1xf32> to vector<8x8xf32>
    %53 = arith.subf %49, %52 : vector<8x8xf32>
    %54 = math.exp %53 : vector<8x8xf32>
    %cst_25 = arith.constant dense<0.000000e+00> : vector<8xf32>
    %55 = vector.multi_reduction <add>, %54, %cst_25 [1] : vector<8x8xf32> to vector<8xf32>
    %56 = vector.shape_cast %55 : vector<8xf32> to vector<8x1xf32>
    %57 = tpu.reciprocal %56 {approx = true} : vector<8x1xf32> -> vector<8x1xf32>
    %58 = vector.broadcast %57 : vector<8x1xf32> to vector<8x8xf32>
    %59 = arith.mulf %54, %58 : vector<8x8xf32>
    %c0_26 = arith.constant 0 : index
    %c1 = arith.constant 1 : index
    %c0_27 = arith.constant 0 : index
    %c0_28 = arith.constant 0 : index
    %60 = vector.load %arg13[%c0_26, %c1, %c0_27, %c0_28] : memref<1x8x8x8xf32, #tpu.memory_space<vmem>>, vector<1x1x8x8xf32>
    %61 = vector.shape_cast %60 : vector<1x1x8x8xf32> to vector<8x8xf32>
    %62 = vector.shape_cast %59 : vector<8x8xf32> to vector<1x1x8x8xf32>
    tpu.vector_store %arg13[%c0_26, %c1, %c0_27, %c0_28], %62 {strides = array<i32>} : memref<1x8x8x8xf32, #tpu.memory_space<vmem>>, vector<1x1x8x8xf32>,
    %63 = vector.extract_strided_slice %7 {offsets = [0, 16], sizes = [8, 8], strides = [1, 1]} : vector<16x96xf32> to vector<8x8xf32>
    %64 = vector.extract_strided_slice %7 {offsets = [0, 48], sizes = [8, 8], strides = [1, 1]} : vector<16x96xf32> to vector<8x8xf32>
    %cst_29 = arith.constant dense<0.000000e+00> : vector<8x8xf32>
    %65 = tpu.matmul %63, %64, %cst_29 {dimension_numbers = #tpu.dot_dimension_numbers<[1], [1], [0], [0], [0, 0, 1, 0], [], []>} : vector<8x8xf32>, vector<8x8xf32>, vector<8x8xf32> -> vector<8x8xf32>
    %cst_30 = arith.constant 0.353553385 : f32
    %66 = vector.broadcast %cst_30 : f32 to vector<8x8xf32>
    %67 = arith.mulf %65, %66 : vector<8x8xf32>
    %cst_31 = arith.constant -1.000000e+09 : f32
    %68 = vector.broadcast %cst_31 : f32 to vector<8x8xf32>
    %69 = arith.select %22, %68, %67 : vector<8x8xi1>, vector<8x8xf32>
    %cst_32 = arith.constant dense<0xFF800000> : vector<8xf32>
    %70 = vector.multi_reduction <maximumf>, %69, %cst_32 [1] : vector<8x8xf32> to vector<8xf32>
    %71 = vector.shape_cast %70 : vector<8xf32> to vector<8x1xf32>
    %72 = vector.broadcast %71 : vector<8x1xf32> to vector<8x8xf32>
    %73 = arith.subf %69, %72 : vector<8x8xf32>
    %74 = math.exp %73 : vector<8x8xf32>
    %cst_33 = arith.constant dense<0.000000e+00> : vector<8xf32>
    %75 = vector.multi_reduction <add>, %74, %cst_33 [1] : vector<8x8xf32> to vector<8xf32>
    %76 = vector.shape_cast %75 : vector<8xf32> to vector<8x1xf32>
    %77 = tpu.reciprocal %76 {approx = true} : vector<8x1xf32> -> vector<8x1xf32>
    %78 = vector.broadcast %77 : vector<8x1xf32> to vector<8x8xf32>
    %79 = arith.mulf %74, %78 : vector<8x8xf32>
    %c0_34 = arith.constant 0 : index
    %c2 = arith.constant 2 : index
    %c0_35 = arith.constant 0 : index
    %c0_36 = arith.constant 0 : index
    %80 = vector.load %arg13[%c0_34, %c2, %c0_35, %c0_36] : memref<1x8x8x8xf32, #tpu.memory_space<vmem>>, vector<1x1x8x8xf32>
    %81 = vector.shape_cast %80 : vector<1x1x8x8xf32> to vector<8x8xf32>
    %82 = vector.shape_cast %79 : vector<8x8xf32> to vector<1x1x8x8xf32>
    tpu.vector_store %arg13[%c0_34, %c2, %c0_35, %c0_36], %82 {strides = array<i32>} : memref<1x8x8x8xf32, #tpu.memory_space<vmem>>, vector<1x1x8x8xf32>,
    %83 = vector.extract_strided_slice %7 {offsets = [0, 24], sizes = [8, 8], strides = [1, 1]} : vector<16x96xf32> to vector<8x8xf32>
    %84 = vector.extract_strided_slice %7 {offsets = [0, 56], sizes = [8, 8], strides = [1, 1]} : vector<16x96xf32> to vector<8x8xf32>
    %cst_37 = arith.constant dense<0.000000e+00> : vector<8x8xf32>
    %85 = tpu.matmul %83, %84, %cst_37 {dimension_numbers = #tpu.dot_dimension_numbers<[1], [1], [0], [0], [0, 0, 1, 0], [], []>} : vector<8x8xf32>, vector<8x8xf32>, vector<8x8xf32> -> vector<8x8xf32>
    %cst_38 = arith.constant 0.353553385 : f32
    %86 = vector.broadcast %cst_38 : f32 to vector<8x8xf32>
    %87 = arith.mulf %85, %86 : vector<8x8xf32>
    %cst_39 = arith.constant -1.000000e+09 : f32
    %88 = vector.broadcast %cst_39 : f32 to vector<8x8xf32>
    %89 = arith.select %22, %88, %87 : vector<8x8xi1>, vector<8x8xf32>
    %cst_40 = arith.constant dense<0xFF800000> : vector<8xf32>
    %90 = vector.multi_reduction <maximumf>, %89, %cst_40 [1] : vector<8x8xf32> to vector<8xf32>
    %91 = vector.shape_cast %90 : vector<8xf32> to vector<8x1xf32>
    %92 = vector.broadcast %91 : vector<8x1xf32> to vector<8x8xf32>
    %93 = arith.subf %89, %92 : vector<8x8xf32>
    %94 = math.exp %93 : vector<8x8xf32>
    %cst_41 = arith.constant dense<0.000000e+00> : vector<8xf32>
    %95 = vector.multi_reduction <add>, %94, %cst_41 [1] : vector<8x8xf32> to vector<8xf32>
    %96 = vector.shape_cast %95 : vector<8xf32> to vector<8x1xf32>
    %97 = tpu.reciprocal %96 {approx = true} : vector<8x1xf32> -> vector<8x1xf32>
    %98 = vector.broadcast %97 : vector<8x1xf32> to vector<8x8xf32>
    %99 = arith.mulf %94, %98 : vector<8x8xf32>
    %c0_42 = arith.constant 0 : index
    %c3 = arith.constant 3 : index
    %c0_43 = arith.constant 0 : index
    %c0_44 = arith.constant 0 : index
    %100 = vector.load %arg13[%c0_42, %c3, %c0_43, %c0_44] : memref<1x8x8x8xf32, #tpu.memory_space<vmem>>, vector<1x1x8x8xf32>
    %101 = vector.shape_cast %100 : vector<1x1x8x8xf32> to vector<8x8xf32>
    %102 = vector.shape_cast %99 : vector<8x8xf32> to vector<1x1x8x8xf32>
    tpu.vector_store %arg13[%c0_42, %c3, %c0_43, %c0_44], %102 {strides = array<i32>} : memref<1x8x8x8xf32, #tpu.memory_space<vmem>>, vector<1x1x8x8xf32>,
    %103 = vector.extract_strided_slice %7 {offsets = [8, 0], sizes = [8, 8], strides = [1, 1]} : vector<16x96xf32> to vector<8x8xf32>
    %104 = vector.extract_strided_slice %7 {offsets = [8, 32], sizes = [8, 8], strides = [1, 1]} : vector<16x96xf32> to vector<8x8xf32>
    %cst_45 = arith.constant dense<0.000000e+00> : vector<8x8xf32>
    %105 = tpu.matmul %103, %104, %cst_45 {dimension_numbers = #tpu.dot_dimension_numbers<[1], [1], [0], [0], [0, 0, 1, 0], [], []>} : vector<8x8xf32>, vector<8x8xf32>, vector<8x8xf32> -> vector<8x8xf32>
    %cst_46 = arith.constant 0.353553385 : f32
    %106 = vector.broadcast %cst_46 : f32 to vector<8x8xf32>
    %107 = arith.mulf %105, %106 : vector<8x8xf32>
    %cst_47 = arith.constant -1.000000e+09 : f32
    %108 = vector.broadcast %cst_47 : f32 to vector<8x8xf32>
    %109 = arith.select %22, %108, %107 : vector<8x8xi1>, vector<8x8xf32>
    %cst_48 = arith.constant dense<0xFF800000> : vector<8xf32>
    %110 = vector.multi_reduction <maximumf>, %109, %cst_48 [1] : vector<8x8xf32> to vector<8xf32>
    %111 = vector.shape_cast %110 : vector<8xf32> to vector<8x1xf32>
    %112 = vector.broadcast %111 : vector<8x1xf32> to vector<8x8xf32>
    %113 = arith.subf %109, %112 : vector<8x8xf32>
    %114 = math.exp %113 : vector<8x8xf32>
    %cst_49 = arith.constant dense<0.000000e+00> : vector<8xf32>
    %115 = vector.multi_reduction <add>, %114, %cst_49 [1] : vector<8x8xf32> to vector<8xf32>
    %116 = vector.shape_cast %115 : vector<8xf32> to vector<8x1xf32>
    %117 = tpu.reciprocal %116 {approx = true} : vector<8x1xf32> -> vector<8x1xf32>
    %118 = vector.broadcast %117 : vector<8x1xf32> to vector<8x8xf32>
    %119 = arith.mulf %114, %118 : vector<8x8xf32>
    %c0_50 = arith.constant 0 : index
    %c4 = arith.constant 4 : index
    %c0_51 = arith.constant 0 : index
    %c0_52 = arith.constant 0 : index
    %120 = vector.load %arg13[%c0_50, %c4, %c0_51, %c0_52] : memref<1x8x8x8xf32, #tpu.memory_space<vmem>>, vector<1x1x8x8xf32>
    %121 = vector.shape_cast %120 : vector<1x1x8x8xf32> to vector<8x8xf32>
    %122 = vector.shape_cast %119 : vector<8x8xf32> to vector<1x1x8x8xf32>
    tpu.vector_store %arg13[%c0_50, %c4, %c0_51, %c0_52], %122 {strides = array<i32>} : memref<1x8x8x8xf32, #tpu.memory_space<vmem>>, vector<1x1x8x8xf32>,
    %123 = vector.extract_strided_slice %7 {offsets = [8, 8], sizes = [8, 8], strides = [1, 1]} : vector<16x96xf32> to vector<8x8xf32>
    %124 = vector.extract_strided_slice %7 {offsets = [8, 40], sizes = [8, 8], strides = [1, 1]} : vector<16x96xf32> to vector<8x8xf32>
    %cst_53 = arith.constant dense<0.000000e+00> : vector<8x8xf32>
    %125 = tpu.matmul %123, %124, %cst_53 {dimension_numbers = #tpu.dot_dimension_numbers<[1], [1], [0], [0], [0, 0, 1, 0], [], []>} : vector<8x8xf32>, vector<8x8xf32>, vector<8x8xf32> -> vector<8x8xf32>
    %cst_54 = arith.constant 0.353553385 : f32
    %126 = vector.broadcast %cst_54 : f32 to vector<8x8xf32>
    %127 = arith.mulf %125, %126 : vector<8x8xf32>
    %cst_55 = arith.constant -1.000000e+09 : f32
    %128 = vector.broadcast %cst_55 : f32 to vector<8x8xf32>
    %129 = arith.select %22, %128, %127 : vector<8x8xi1>, vector<8x8xf32>
    %cst_56 = arith.constant dense<0xFF800000> : vector<8xf32>
    %130 = vector.multi_reduction <maximumf>, %129, %cst_56 [1] : vector<8x8xf32> to vector<8xf32>
    %131 = vector.shape_cast %130 : vector<8xf32> to vector<8x1xf32>
    %132 = vector.broadcast %131 : vector<8x1xf32> to vector<8x8xf32>
    %133 = arith.subf %129, %132 : vector<8x8xf32>
    %134 = math.exp %133 : vector<8x8xf32>
    %cst_57 = arith.constant dense<0.000000e+00> : vector<8xf32>
    %135 = vector.multi_reduction <add>, %134, %cst_57 [1] : vector<8x8xf32> to vector<8xf32>
    %136 = vector.shape_cast %135 : vector<8xf32> to vector<8x1xf32>
    %137 = tpu.reciprocal %136 {approx = true} : vector<8x1xf32> -> vector<8x1xf32>
    %138 = vector.broadcast %137 : vector<8x1xf32> to vector<8x8xf32>
    %139 = arith.mulf %134, %138 : vector<8x8xf32>
    %c0_58 = arith.constant 0 : index
    %c5 = arith.constant 5 : index
    %c0_59 = arith.constant 0 : index
    %c0_60 = arith.constant 0 : index
    %140 = vector.load %arg13[%c0_58, %c5, %c0_59, %c0_60] : memref<1x8x8x8xf32, #tpu.memory_space<vmem>>, vector<1x1x8x8xf32>
    %141 = vector.shape_cast %140 : vector<1x1x8x8xf32> to vector<8x8xf32>
    %142 = vector.shape_cast %139 : vector<8x8xf32> to vector<1x1x8x8xf32>
    tpu.vector_store %arg13[%c0_58, %c5, %c0_59, %c0_60], %142 {strides = array<i32>} : memref<1x8x8x8xf32, #tpu.memory_space<vmem>>, vector<1x1x8x8xf32>,
    %143 = vector.extract_strided_slice %7 {offsets = [8, 16], sizes = [8, 8], strides = [1, 1]} : vector<16x96xf32> to vector<8x8xf32>
    %144 = vector.extract_strided_slice %7 {offsets = [8, 48], sizes = [8, 8], strides = [1, 1]} : vector<16x96xf32> to vector<8x8xf32>
    %cst_61 = arith.constant dense<0.000000e+00> : vector<8x8xf32>
    %145 = tpu.matmul %143, %144, %cst_61 {dimension_numbers = #tpu.dot_dimension_numbers<[1], [1], [0], [0], [0, 0, 1, 0], [], []>} : vector<8x8xf32>, vector<8x8xf32>, vector<8x8xf32> -> vector<8x8xf32>
    %cst_62 = arith.constant 0.353553385 : f32
    %146 = vector.broadcast %cst_62 : f32 to vector<8x8xf32>
    %147 = arith.mulf %145, %146 : vector<8x8xf32>
    %cst_63 = arith.constant -1.000000e+09 : f32
    %148 = vector.broadcast %cst_63 : f32 to vector<8x8xf32>
    %149 = arith.select %22, %148, %147 : vector<8x8xi1>, vector<8x8xf32>
    %cst_64 = arith.constant dense<0xFF800000> : vector<8xf32>
    %150 = vector.multi_reduction <maximumf>, %149, %cst_64 [1] : vector<8x8xf32> to vector<8xf32>
    %151 = vector.shape_cast %150 : vector<8xf32> to vector<8x1xf32>
    %152 = vector.broadcast %151 : vector<8x1xf32> to vector<8x8xf32>
    %153 = arith.subf %149, %152 : vector<8x8xf32>
    %154 = math.exp %153 : vector<8x8xf32>
    %cst_65 = arith.constant dense<0.000000e+00> : vector<8xf32>
    %155 = vector.multi_reduction <add>, %154, %cst_65 [1] : vector<8x8xf32> to vector<8xf32>
    %156 = vector.shape_cast %155 : vector<8xf32> to vector<8x1xf32>
    %157 = tpu.reciprocal %156 {approx = true} : vector<8x1xf32> -> vector<8x1xf32>
    %158 = vector.broadcast %157 : vector<8x1xf32> to vector<8x8xf32>
    %159 = arith.mulf %154, %158 : vector<8x8xf32>
    %c0_66 = arith.constant 0 : index
    %c6 = arith.constant 6 : index
    %c0_67 = arith.constant 0 : index
    %c0_68 = arith.constant 0 : index
    %160 = vector.load %arg13[%c0_66, %c6, %c0_67, %c0_68] : memref<1x8x8x8xf32, #tpu.memory_space<vmem>>, vector<1x1x8x8xf32>
    %161 = vector.shape_cast %160 : vector<1x1x8x8xf32> to vector<8x8xf32>
    %162 = vector.shape_cast %159 : vector<8x8xf32> to vector<1x1x8x8xf32>
    tpu.vector_store %arg13[%c0_66, %c6, %c0_67, %c0_68], %162 {strides = array<i32>} : memref<1x8x8x8xf32, #tpu.memory_space<vmem>>, vector<1x1x8x8xf32>,
    %163 = vector.extract_strided_slice %7 {offsets = [8, 24], sizes = [8, 8], strides = [1, 1]} : vector<16x96xf32> to vector<8x8xf32>
    %164 = vector.extract_strided_slice %7 {offsets = [8, 56], sizes = [8, 8], strides = [1, 1]} : vector<16x96xf32> to vector<8x8xf32>
    %cst_69 = arith.constant dense<0.000000e+00> : vector<8x8xf32>
    %165 = tpu.matmul %163, %164, %cst_69 {dimension_numbers = #tpu.dot_dimension_numbers<[1], [1], [0], [0], [0, 0, 1, 0], [], []>} : vector<8x8xf32>, vector<8x8xf32>, vector<8x8xf32> -> vector<8x8xf32>
    %cst_70 = arith.constant 0.353553385 : f32
    %166 = vector.broadcast %cst_70 : f32 to vector<8x8xf32>
    %167 = arith.mulf %165, %166 : vector<8x8xf32>
    %cst_71 = arith.constant -1.000000e+09 : f32
    %168 = vector.broadcast %cst_71 : f32 to vector<8x8xf32>
    %169 = arith.select %22, %168, %167 : vector<8x8xi1>, vector<8x8xf32>
    %cst_72 = arith.constant dense<0xFF800000> : vector<8xf32>
    %170 = vector.multi_reduction <maximumf>, %169, %cst_72 [1] : vector<8x8xf32> to vector<8xf32>
    %171 = vector.shape_cast %170 : vector<8xf32> to vector<8x1xf32>
    %172 = vector.broadcast %171 : vector<8x1xf32> to vector<8x8xf32>
    %173 = arith.subf %169, %172 : vector<8x8xf32>
    %174 = math.exp %173 : vector<8x8xf32>
    %cst_73 = arith.constant dense<0.000000e+00> : vector<8xf32>
    %175 = vector.multi_reduction <add>, %174, %cst_73 [1] : vector<8x8xf32> to vector<8xf32>
    %176 = vector.shape_cast %175 : vector<8xf32> to vector<8x1xf32>
    %177 = tpu.reciprocal %176 {approx = true} : vector<8x1xf32> -> vector<8x1xf32>
    %178 = vector.broadcast %177 : vector<8x1xf32> to vector<8x8xf32>
    %179 = arith.mulf %174, %178 : vector<8x8xf32>
    %c0_74 = arith.constant 0 : index
    %c7 = arith.constant 7 : index
    %c0_75 = arith.constant 0 : index
    %c0_76 = arith.constant 0 : index
    %180 = vector.load %arg13[%c0_74, %c7, %c0_75, %c0_76] : memref<1x8x8x8xf32, #tpu.memory_space<vmem>>, vector<1x1x8x8xf32>
    %181 = vector.shape_cast %180 : vector<1x1x8x8xf32> to vector<8x8xf32>
    %182 = vector.shape_cast %179 : vector<8x8xf32> to vector<1x1x8x8xf32>
    tpu.vector_store %arg13[%c0_74, %c7, %c0_75, %c0_76], %182 {strides = array<i32>} : memref<1x8x8x8xf32, #tpu.memory_space<vmem>>, vector<1x1x8x8xf32>,
    %c0_77 = arith.constant 0 : index
    %c0_78 = arith.constant 0 : index
    %183 = vector.load %arg16[%c0_77, %c0_78] : memref<16x32xf32, #tpu.memory_space<vmem>>, vector<16x32xf32>
    %c0_79 = arith.constant 0 : index
    %c0_80 = arith.constant 0 : index
    %c0_81 = arith.constant 0 : index
    %184 = vector.load %arg4[%c0_79, %c0_80, %c0_81] : memref<1x32x32xf32, #tpu.memory_space<vmem>>, vector<1x32x32xf32>
    %185 = vector.shape_cast %184 : vector<1x32x32xf32> to vector<32x32xf32>
    %cst_82 = arith.constant dense<0.000000e+00> : vector<16x32xf32>
    %186 = tpu.matmul %183, %185, %cst_82 {dimension_numbers = #tpu.dot_dimension_numbers<[1], [0], [0], [1], [0, 0, 1, 1], [], []>} : vector<16x32xf32>, vector<32x32xf32>, vector<16x32xf32> -> vector<16x32xf32>
    %187 = arith.addf %3, %186 : vector<16x32xf32>
    %cst_83 = arith.constant dense<0.000000e+00> : vector<16xf32>
    %188 = vector.multi_reduction <add>, %187, %cst_83 [1] : vector<16x32xf32> to vector<16xf32>
    %189 = vector.shape_cast %188 : vector<16xf32> to vector<16x1xf32>
    %cst_84 = arith.constant 3.200000e+01 : f32
    %190 = vector.broadcast %cst_84 : f32 to vector<16x1xf32>
    %191 = arith.divf %189, %190 : vector<16x1xf32>
    %192 = vector.broadcast %191 : vector<16x1xf32> to vector<16x32xf32>
    %193 = arith.subf %187, %192 : vector<16x32xf32>
    %194 = arith.mulf %193, %193 : vector<16x32xf32>
    %cst_85 = arith.constant dense<0.000000e+00> : vector<16xf32>
    %195 = vector.multi_reduction <add>, %194, %cst_85 [1] : vector<16x32xf32> to vector<16xf32>
    %196 = vector.shape_cast %195 : vector<16xf32> to vector<16x1xf32>
    %cst_86 = arith.constant 3.200000e+01 : f32
    %197 = vector.broadcast %cst_86 : f32 to vector<16x1xf32>
    %198 = arith.divf %196, %197 : vector<16x1xf32>
    %199 = vector.broadcast %191 : vector<16x1xf32> to vector<16x32xf32>
    %200 = arith.subf %187, %199 : vector<16x32xf32>
    %cst_87 = arith.constant 9.99999974E-6 : f32
    %201 = vector.broadcast %cst_87 : f32 to vector<16x1xf32>
    %202 = arith.addf %198, %201 : vector<16x1xf32>
    %203 = math.rsqrt %202 : vector<16x1xf32>
    %204 = vector.broadcast %203 : vector<16x1xf32> to vector<16x32xf32>
    %205 = arith.mulf %200, %204 : vector<16x32xf32>
    %c0_88 = arith.constant 0 : index
    %c0_89 = arith.constant 0 : index
    %c0_90 = arith.constant 0 : index
    %206 = vector.load %arg5[%c0_88, %c0_89, %c0_90] : memref<1x32x32xf32, #tpu.memory_space<vmem>>, vector<1x32x32xf32>
    %207 = vector.shape_cast %206 : vector<1x32x32xf32> to vector<32x32xf32>
    %cst_91 = arith.constant dense<0.000000e+00> : vector<16x32xf32>
    %208 = tpu.matmul %205, %207, %cst_91 {dimension_numbers = #tpu.dot_dimension_numbers<[1], [0], [0], [1], [0, 0, 1, 1], [], []>} : vector<16x32xf32>, vector<32x32xf32>, vector<16x32xf32> -> vector<16x32xf32>
    %c0_92 = arith.constant 0 : index
    %c0_93 = arith.constant 0 : index
    %c0_94 = arith.constant 0 : index
    %209 = vector.load %arg6[%c0_92, %c0_93, %c0_94] : memref<1x32x64xf32, #tpu.memory_space<vmem>>, vector<1x32x64xf32>
    %210 = vector.shape_cast %209 : vector<1x32x64xf32> to vector<32x64xf32>
    %cst_95 = arith.constant dense<0.000000e+00> : vector<32x64xf32>
    %211 = tpu.matmul %4, %210, %cst_95 {dimension_numbers = #tpu.dot_dimension_numbers<[1], [0], [0], [1], [0, 0, 1, 1], [], []>} : vector<32x32xf32>, vector<32x64xf32>, vector<32x64xf32> -> vector<32x64xf32>
    %212 = vector.extract_strided_slice %211 {offsets = [0, 32], sizes = [16, 32], strides = [1, 1]} : vector<32x64xf32> to vector<16x32xf32>
    %cst_96 = arith.constant dense<0.000000e+00> : vector<32xf32>
    %213 = vector.multi_reduction <add>, %212, %cst_96 [0] : vector<16x32xf32> to vector<32xf32>
    %214 = vector.shape_cast %213 : vector<32xf32> to vector<1x32xf32>
    %215 = vector.shape_cast %214 : vector<1x32xf32> to vector<1x32xf32>
    %216 = vector.broadcast %215 : vector<1x32xf32> to vector<8x32xf32>
    %c0_97 = arith.constant 0 : index
    %c0_98 = arith.constant 0 : index
    %217 = vector.load %arg16[%c0_97, %c0_98] : memref<16x32xf32, #tpu.memory_space<vmem>>, vector<8x32xf32>
    tpu.vector_store %arg16[%c0_97, %c0_98], %216 {strides = array<i32>} : memref<16x32xf32, #tpu.memory_space<vmem>>, vector<8x32xf32>,
    %218 = vector.extract_strided_slice %211 {offsets = [16, 32], sizes = [16, 32], strides = [1, 1]} : vector<32x64xf32> to vector<16x32xf32>
    %cst_99 = arith.constant dense<0.000000e+00> : vector<32xf32>
    %219 = vector.multi_reduction <add>, %218, %cst_99 [0] : vector<16x32xf32> to vector<32xf32>
    %220 = vector.shape_cast %219 : vector<32xf32> to vector<1x32xf32>
    %221 = vector.shape_cast %220 : vector<1x32xf32> to vector<1x32xf32>
    %222 = vector.broadcast %221 : vector<1x32xf32> to vector<8x32xf32>
    %c8_100 = arith.constant 8 : index
    %c0_101 = arith.constant 0 : index
    %223 = vector.load %arg16[%c8_100, %c0_101] : memref<16x32xf32, #tpu.memory_space<vmem>>, vector<8x32xf32>
    tpu.vector_store %arg16[%c8_100, %c0_101], %222 {strides = array<i32>} : memref<16x32xf32, #tpu.memory_space<vmem>>, vector<8x32xf32>,
    %224 = vector.extract_strided_slice %208 {offsets = [0, 0], sizes = [8, 8], strides = [1, 1]} : vector<16x32xf32> to vector<8x8xf32>
    %225 = vector.extract_strided_slice %211 {offsets = [0, 0], sizes = [16, 8], strides = [1, 1]} : vector<32x64xf32> to vector<16x8xf32>
    %cst_102 = arith.constant dense<0.000000e+00> : vector<8x16xf32>
    %226 = tpu.matmul %224, %225, %cst_102 {dimension_numbers = #tpu.dot_dimension_numbers<[1], [1], [0], [0], [0, 0, 1, 0], [], []>} : vector<8x8xf32>, vector<16x8xf32>, vector<8x16xf32> -> vector<8x16xf32>
    %cst_103 = arith.constant 0.353553385 : f32
    %227 = vector.broadcast %cst_103 : f32 to vector<8x16xf32>
    %228 = arith.mulf %226, %227 : vector<8x16xf32>
    %cst_104 = arith.constant dense<0xFF800000> : vector<8xf32>
    %229 = vector.multi_reduction <maximumf>, %228, %cst_104 [1] : vector<8x16xf32> to vector<8xf32>
    %230 = vector.shape_cast %229 : vector<8xf32> to vector<8x1xf32>
    %231 = vector.broadcast %230 : vector<8x1xf32> to vector<8x16xf32>
    %232 = arith.subf %228, %231 : vector<8x16xf32>
    %233 = math.exp %232 : vector<8x16xf32>
    %cst_105 = arith.constant dense<0.000000e+00> : vector<8xf32>
    %234 = vector.multi_reduction <add>, %233, %cst_105 [1] : vector<8x16xf32> to vector<8xf32>
    %235 = vector.shape_cast %234 : vector<8xf32> to vector<8x1xf32>
    %236 = tpu.reciprocal %235 {approx = true} : vector<8x1xf32> -> vector<8x1xf32>
    %237 = vector.broadcast %236 : vector<8x1xf32> to vector<8x16xf32>
    %238 = arith.mulf %233, %237 : vector<8x16xf32>
    %c0_106 = arith.constant 0 : index
    %c0_107 = arith.constant 0 : index
    %c0_108 = arith.constant 0 : index
    %c0_109 = arith.constant 0 : index
    %239 = vector.load %arg14[%c0_106, %c0_107, %c0_108, %c0_109] : memref<1x8x8x16xf32, #tpu.memory_space<vmem>>, vector<1x1x8x16xf32>
    %240 = vector.shape_cast %239 : vector<1x1x8x16xf32> to vector<8x16xf32>
    %241 = vector.shape_cast %238 : vector<8x16xf32> to vector<1x1x8x16xf32>
    tpu.vector_store %arg14[%c0_106, %c0_107, %c0_108, %c0_109], %241 {strides = array<i32>} : memref<1x8x8x16xf32, #tpu.memory_space<vmem>>, vector<1x1x8x16xf32>,
    %242 = vector.extract_strided_slice %208 {offsets = [0, 8], sizes = [8, 8], strides = [1, 1]} : vector<16x32xf32> to vector<8x8xf32>
    %243 = vector.extract_strided_slice %211 {offsets = [0, 8], sizes = [16, 8], strides = [1, 1]} : vector<32x64xf32> to vector<16x8xf32>
    %cst_110 = arith.constant dense<0.000000e+00> : vector<8x16xf32>
    %244 = tpu.matmul %242, %243, %cst_110 {dimension_numbers = #tpu.dot_dimension_numbers<[1], [1], [0], [0], [0, 0, 1, 0], [], []>} : vector<8x8xf32>, vector<16x8xf32>, vector<8x16xf32> -> vector<8x16xf32>
    %cst_111 = arith.constant 0.353553385 : f32
    %245 = vector.broadcast %cst_111 : f32 to vector<8x16xf32>
    %246 = arith.mulf %244, %245 : vector<8x16xf32>
    %cst_112 = arith.constant dense<0xFF800000> : vector<8xf32>
    %247 = vector.multi_reduction <maximumf>, %246, %cst_112 [1] : vector<8x16xf32> to vector<8xf32>
    %248 = vector.shape_cast %247 : vector<8xf32> to vector<8x1xf32>
    %249 = vector.broadcast %248 : vector<8x1xf32> to vector<8x16xf32>
    %250 = arith.subf %246, %249 : vector<8x16xf32>
    %251 = math.exp %250 : vector<8x16xf32>
    %cst_113 = arith.constant dense<0.000000e+00> : vector<8xf32>
    %252 = vector.multi_reduction <add>, %251, %cst_113 [1] : vector<8x16xf32> to vector<8xf32>
    %253 = vector.shape_cast %252 : vector<8xf32> to vector<8x1xf32>
    %254 = tpu.reciprocal %253 {approx = true} : vector<8x1xf32> -> vector<8x1xf32>
    %255 = vector.broadcast %254 : vector<8x1xf32> to vector<8x16xf32>
    %256 = arith.mulf %251, %255 : vector<8x16xf32>
    %c0_114 = arith.constant 0 : index
    %c1_115 = arith.constant 1 : index
    %c0_116 = arith.constant 0 : index
    %c0_117 = arith.constant 0 : index
    %257 = vector.load %arg14[%c0_114, %c1_115, %c0_116, %c0_117] : memref<1x8x8x16xf32, #tpu.memory_space<vmem>>, vector<1x1x8x16xf32>
    %258 = vector.shape_cast %257 : vector<1x1x8x16xf32> to vector<8x16xf32>
    %259 = vector.shape_cast %256 : vector<8x16xf32> to vector<1x1x8x16xf32>
    tpu.vector_store %arg14[%c0_114, %c1_115, %c0_116, %c0_117], %259 {strides = array<i32>} : memref<1x8x8x16xf32, #tpu.memory_space<vmem>>, vector<1x1x8x16xf32>,
    %260 = vector.extract_strided_slice %208 {offsets = [0, 16], sizes = [8, 8], strides = [1, 1]} : vector<16x32xf32> to vector<8x8xf32>
    %261 = vector.extract_strided_slice %211 {offsets = [0, 16], sizes = [16, 8], strides = [1, 1]} : vector<32x64xf32> to vector<16x8xf32>
    %cst_118 = arith.constant dense<0.000000e+00> : vector<8x16xf32>
    %262 = tpu.matmul %260, %261, %cst_118 {dimension_numbers = #tpu.dot_dimension_numbers<[1], [1], [0], [0], [0, 0, 1, 0], [], []>} : vector<8x8xf32>, vector<16x8xf32>, vector<8x16xf32> -> vector<8x16xf32>
    %cst_119 = arith.constant 0.353553385 : f32
    %263 = vector.broadcast %cst_119 : f32 to vector<8x16xf32>
    %264 = arith.mulf %262, %263 : vector<8x16xf32>
    %cst_120 = arith.constant dense<0xFF800000> : vector<8xf32>
    %265 = vector.multi_reduction <maximumf>, %264, %cst_120 [1] : vector<8x16xf32> to vector<8xf32>
    %266 = vector.shape_cast %265 : vector<8xf32> to vector<8x1xf32>
    %267 = vector.broadcast %266 : vector<8x1xf32> to vector<8x16xf32>
    %268 = arith.subf %264, %267 : vector<8x16xf32>
    %269 = math.exp %268 : vector<8x16xf32>
    %cst_121 = arith.constant dense<0.000000e+00> : vector<8xf32>
    %270 = vector.multi_reduction <add>, %269, %cst_121 [1] : vector<8x16xf32> to vector<8xf32>
    %271 = vector.shape_cast %270 : vector<8xf32> to vector<8x1xf32>
    %272 = tpu.reciprocal %271 {approx = true} : vector<8x1xf32> -> vector<8x1xf32>
    %273 = vector.broadcast %272 : vector<8x1xf32> to vector<8x16xf32>
    %274 = arith.mulf %269, %273 : vector<8x16xf32>
    %c0_122 = arith.constant 0 : index
    %c2_123 = arith.constant 2 : index
    %c0_124 = arith.constant 0 : index
    %c0_125 = arith.constant 0 : index
    %275 = vector.load %arg14[%c0_122, %c2_123, %c0_124, %c0_125] : memref<1x8x8x16xf32, #tpu.memory_space<vmem>>, vector<1x1x8x16xf32>
    %276 = vector.shape_cast %275 : vector<1x1x8x16xf32> to vector<8x16xf32>
    %277 = vector.shape_cast %274 : vector<8x16xf32> to vector<1x1x8x16xf32>
    tpu.vector_store %arg14[%c0_122, %c2_123, %c0_124, %c0_125], %277 {strides = array<i32>} : memref<1x8x8x16xf32, #tpu.memory_space<vmem>>, vector<1x1x8x16xf32>,
    %278 = vector.extract_strided_slice %208 {offsets = [0, 24], sizes = [8, 8], strides = [1, 1]} : vector<16x32xf32> to vector<8x8xf32>
    %279 = vector.extract_strided_slice %211 {offsets = [0, 24], sizes = [16, 8], strides = [1, 1]} : vector<32x64xf32> to vector<16x8xf32>
    %cst_126 = arith.constant dense<0.000000e+00> : vector<8x16xf32>
    %280 = tpu.matmul %278, %279, %cst_126 {dimension_numbers = #tpu.dot_dimension_numbers<[1], [1], [0], [0], [0, 0, 1, 0], [], []>} : vector<8x8xf32>, vector<16x8xf32>, vector<8x16xf32> -> vector<8x16xf32>
    %cst_127 = arith.constant 0.353553385 : f32
    %281 = vector.broadcast %cst_127 : f32 to vector<8x16xf32>
    %282 = arith.mulf %280, %281 : vector<8x16xf32>
    %cst_128 = arith.constant dense<0xFF800000> : vector<8xf32>
    %283 = vector.multi_reduction <maximumf>, %282, %cst_128 [1] : vector<8x16xf32> to vector<8xf32>
    %284 = vector.shape_cast %283 : vector<8xf32> to vector<8x1xf32>
    %285 = vector.broadcast %284 : vector<8x1xf32> to vector<8x16xf32>
    %286 = arith.subf %282, %285 : vector<8x16xf32>
    %287 = math.exp %286 : vector<8x16xf32>
    %cst_129 = arith.constant dense<0.000000e+00> : vector<8xf32>
    %288 = vector.multi_reduction <add>, %287, %cst_129 [1] : vector<8x16xf32> to vector<8xf32>
    %289 = vector.shape_cast %288 : vector<8xf32> to vector<8x1xf32>
    %290 = tpu.reciprocal %289 {approx = true} : vector<8x1xf32> -> vector<8x1xf32>
    %291 = vector.broadcast %290 : vector<8x1xf32> to vector<8x16xf32>
    %292 = arith.mulf %287, %291 : vector<8x16xf32>
    %c0_130 = arith.constant 0 : index
    %c3_131 = arith.constant 3 : index
    %c0_132 = arith.constant 0 : index
    %c0_133 = arith.constant 0 : index
    %293 = vector.load %arg14[%c0_130, %c3_131, %c0_132, %c0_133] : memref<1x8x8x16xf32, #tpu.memory_space<vmem>>, vector<1x1x8x16xf32>
    %294 = vector.shape_cast %293 : vector<1x1x8x16xf32> to vector<8x16xf32>
    %295 = vector.shape_cast %292 : vector<8x16xf32> to vector<1x1x8x16xf32>
    tpu.vector_store %arg14[%c0_130, %c3_131, %c0_132, %c0_133], %295 {strides = array<i32>} : memref<1x8x8x16xf32, #tpu.memory_space<vmem>>, vector<1x1x8x16xf32>,
    %296 = vector.extract_strided_slice %208 {offsets = [8, 0], sizes = [8, 8], strides = [1, 1]} : vector<16x32xf32> to vector<8x8xf32>
    %297 = vector.extract_strided_slice %211 {offsets = [16, 0], sizes = [16, 8], strides = [1, 1]} : vector<32x64xf32> to vector<16x8xf32>
    %cst_134 = arith.constant dense<0.000000e+00> : vector<8x16xf32>
    %298 = tpu.matmul %296, %297, %cst_134 {dimension_numbers = #tpu.dot_dimension_numbers<[1], [1], [0], [0], [0, 0, 1, 0], [], []>} : vector<8x8xf32>, vector<16x8xf32>, vector<8x16xf32> -> vector<8x16xf32>
    %cst_135 = arith.constant 0.353553385 : f32
    %299 = vector.broadcast %cst_135 : f32 to vector<8x16xf32>
    %300 = arith.mulf %298, %299 : vector<8x16xf32>
    %cst_136 = arith.constant dense<0xFF800000> : vector<8xf32>
    %301 = vector.multi_reduction <maximumf>, %300, %cst_136 [1] : vector<8x16xf32> to vector<8xf32>
    %302 = vector.shape_cast %301 : vector<8xf32> to vector<8x1xf32>
    %303 = vector.broadcast %302 : vector<8x1xf32> to vector<8x16xf32>
    %304 = arith.subf %300, %303 : vector<8x16xf32>
    %305 = math.exp %304 : vector<8x16xf32>
    %cst_137 = arith.constant dense<0.000000e+00> : vector<8xf32>
    %306 = vector.multi_reduction <add>, %305, %cst_137 [1] : vector<8x16xf32> to vector<8xf32>
    %307 = vector.shape_cast %306 : vector<8xf32> to vector<8x1xf32>
    %308 = tpu.reciprocal %307 {approx = true} : vector<8x1xf32> -> vector<8x1xf32>
    %309 = vector.broadcast %308 : vector<8x1xf32> to vector<8x16xf32>
    %310 = arith.mulf %305, %309 : vector<8x16xf32>
    %c0_138 = arith.constant 0 : index
    %c4_139 = arith.constant 4 : index
    %c0_140 = arith.constant 0 : index
    %c0_141 = arith.constant 0 : index
    %311 = vector.load %arg14[%c0_138, %c4_139, %c0_140, %c0_141] : memref<1x8x8x16xf32, #tpu.memory_space<vmem>>, vector<1x1x8x16xf32>
    %312 = vector.shape_cast %311 : vector<1x1x8x16xf32> to vector<8x16xf32>
    %313 = vector.shape_cast %310 : vector<8x16xf32> to vector<1x1x8x16xf32>
    tpu.vector_store %arg14[%c0_138, %c4_139, %c0_140, %c0_141], %313 {strides = array<i32>} : memref<1x8x8x16xf32, #tpu.memory_space<vmem>>, vector<1x1x8x16xf32>,
    %314 = vector.extract_strided_slice %208 {offsets = [8, 8], sizes = [8, 8], strides = [1, 1]} : vector<16x32xf32> to vector<8x8xf32>
    %315 = vector.extract_strided_slice %211 {offsets = [16, 8], sizes = [16, 8], strides = [1, 1]} : vector<32x64xf32> to vector<16x8xf32>
    %cst_142 = arith.constant dense<0.000000e+00> : vector<8x16xf32>
    %316 = tpu.matmul %314, %315, %cst_142 {dimension_numbers = #tpu.dot_dimension_numbers<[1], [1], [0], [0], [0, 0, 1, 0], [], []>} : vector<8x8xf32>, vector<16x8xf32>, vector<8x16xf32> -> vector<8x16xf32>
    %cst_143 = arith.constant 0.353553385 : f32
    %317 = vector.broadcast %cst_143 : f32 to vector<8x16xf32>
    %318 = arith.mulf %316, %317 : vector<8x16xf32>
    %cst_144 = arith.constant dense<0xFF800000> : vector<8xf32>
    %319 = vector.multi_reduction <maximumf>, %318, %cst_144 [1] : vector<8x16xf32> to vector<8xf32>
    %320 = vector.shape_cast %319 : vector<8xf32> to vector<8x1xf32>
    %321 = vector.broadcast %320 : vector<8x1xf32> to vector<8x16xf32>
    %322 = arith.subf %318, %321 : vector<8x16xf32>
    %323 = math.exp %322 : vector<8x16xf32>
    %cst_145 = arith.constant dense<0.000000e+00> : vector<8xf32>
    %324 = vector.multi_reduction <add>, %323, %cst_145 [1] : vector<8x16xf32> to vector<8xf32>
    %325 = vector.shape_cast %324 : vector<8xf32> to vector<8x1xf32>
    %326 = tpu.reciprocal %325 {approx = true} : vector<8x1xf32> -> vector<8x1xf32>
    %327 = vector.broadcast %326 : vector<8x1xf32> to vector<8x16xf32>
    %328 = arith.mulf %323, %327 : vector<8x16xf32>
    %c0_146 = arith.constant 0 : index
    %c5_147 = arith.constant 5 : index
    %c0_148 = arith.constant 0 : index
    %c0_149 = arith.constant 0 : index
    %329 = vector.load %arg14[%c0_146, %c5_147, %c0_148, %c0_149] : memref<1x8x8x16xf32, #tpu.memory_space<vmem>>, vector<1x1x8x16xf32>
    %330 = vector.shape_cast %329 : vector<1x1x8x16xf32> to vector<8x16xf32>
    %331 = vector.shape_cast %328 : vector<8x16xf32> to vector<1x1x8x16xf32>
    tpu.vector_store %arg14[%c0_146, %c5_147, %c0_148, %c0_149], %331 {strides = array<i32>} : memref<1x8x8x16xf32, #tpu.memory_space<vmem>>, vector<1x1x8x16xf32>,
    %332 = vector.extract_strided_slice %208 {offsets = [8, 16], sizes = [8, 8], strides = [1, 1]} : vector<16x32xf32> to vector<8x8xf32>
    %333 = vector.extract_strided_slice %211 {offsets = [16, 16], sizes = [16, 8], strides = [1, 1]} : vector<32x64xf32> to vector<16x8xf32>
    %cst_150 = arith.constant dense<0.000000e+00> : vector<8x16xf32>
    %334 = tpu.matmul %332, %333, %cst_150 {dimension_numbers = #tpu.dot_dimension_numbers<[1], [1], [0], [0], [0, 0, 1, 0], [], []>} : vector<8x8xf32>, vector<16x8xf32>, vector<8x16xf32> -> vector<8x16xf32>
    %cst_151 = arith.constant 0.353553385 : f32
    %335 = vector.broadcast %cst_151 : f32 to vector<8x16xf32>
    %336 = arith.mulf %334, %335 : vector<8x16xf32>
    %cst_152 = arith.constant dense<0xFF800000> : vector<8xf32>
    %337 = vector.multi_reduction <maximumf>, %336, %cst_152 [1] : vector<8x16xf32> to vector<8xf32>
    %338 = vector.shape_cast %337 : vector<8xf32> to vector<8x1xf32>
    %339 = vector.broadcast %338 : vector<8x1xf32> to vector<8x16xf32>
    %340 = arith.subf %336, %339 : vector<8x16xf32>
    %341 = math.exp %340 : vector<8x16xf32>
    %cst_153 = arith.constant dense<0.000000e+00> : vector<8xf32>
    %342 = vector.multi_reduction <add>, %341, %cst_153 [1] : vector<8x16xf32> to vector<8xf32>
    %343 = vector.shape_cast %342 : vector<8xf32> to vector<8x1xf32>
    %344 = tpu.reciprocal %343 {approx = true} : vector<8x1xf32> -> vector<8x1xf32>
    %345 = vector.broadcast %344 : vector<8x1xf32> to vector<8x16xf32>
    %346 = arith.mulf %341, %345 : vector<8x16xf32>
    %c0_154 = arith.constant 0 : index
    %c6_155 = arith.constant 6 : index
    %c0_156 = arith.constant 0 : index
    %c0_157 = arith.constant 0 : index
    %347 = vector.load %arg14[%c0_154, %c6_155, %c0_156, %c0_157] : memref<1x8x8x16xf32, #tpu.memory_space<vmem>>, vector<1x1x8x16xf32>
    %348 = vector.shape_cast %347 : vector<1x1x8x16xf32> to vector<8x16xf32>
    %349 = vector.shape_cast %346 : vector<8x16xf32> to vector<1x1x8x16xf32>
    tpu.vector_store %arg14[%c0_154, %c6_155, %c0_156, %c0_157], %349 {strides = array<i32>} : memref<1x8x8x16xf32, #tpu.memory_space<vmem>>, vector<1x1x8x16xf32>,
    %350 = vector.extract_strided_slice %208 {offsets = [8, 24], sizes = [8, 8], strides = [1, 1]} : vector<16x32xf32> to vector<8x8xf32>
    %351 = vector.extract_strided_slice %211 {offsets = [16, 24], sizes = [16, 8], strides = [1, 1]} : vector<32x64xf32> to vector<16x8xf32>
    %cst_158 = arith.constant dense<0.000000e+00> : vector<8x16xf32>
    %352 = tpu.matmul %350, %351, %cst_158 {dimension_numbers = #tpu.dot_dimension_numbers<[1], [1], [0], [0], [0, 0, 1, 0], [], []>} : vector<8x8xf32>, vector<16x8xf32>, vector<8x16xf32> -> vector<8x16xf32>
    %cst_159 = arith.constant 0.353553385 : f32
    %353 = vector.broadcast %cst_159 : f32 to vector<8x16xf32>
    %354 = arith.mulf %352, %353 : vector<8x16xf32>
    %cst_160 = arith.constant dense<0xFF800000> : vector<8xf32>
    %355 = vector.multi_reduction <maximumf>, %354, %cst_160 [1] : vector<8x16xf32> to vector<8xf32>
    %356 = vector.shape_cast %355 : vector<8xf32> to vector<8x1xf32>
    %357 = vector.broadcast %356 : vector<8x1xf32> to vector<8x16xf32>
    %358 = arith.subf %354, %357 : vector<8x16xf32>
    %359 = math.exp %358 : vector<8x16xf32>
    %cst_161 = arith.constant dense<0.000000e+00> : vector<8xf32>
    %360 = vector.multi_reduction <add>, %359, %cst_161 [1] : vector<8x16xf32> to vector<8xf32>
    %361 = vector.shape_cast %360 : vector<8xf32> to vector<8x1xf32>
    %362 = tpu.reciprocal %361 {approx = true} : vector<8x1xf32> -> vector<8x1xf32>
    %363 = vector.broadcast %362 : vector<8x1xf32> to vector<8x16xf32>
    %364 = arith.mulf %359, %363 : vector<8x16xf32>
    %c0_162 = arith.constant 0 : index
    %c7_163 = arith.constant 7 : index
    %c0_164 = arith.constant 0 : index
    %c0_165 = arith.constant 0 : index
    %365 = vector.load %arg14[%c0_162, %c7_163, %c0_164, %c0_165] : memref<1x8x8x16xf32, #tpu.memory_space<vmem>>, vector<1x1x8x16xf32>
    %366 = vector.shape_cast %365 : vector<1x1x8x16xf32> to vector<8x16xf32>
    %367 = vector.shape_cast %364 : vector<8x16xf32> to vector<1x1x8x16xf32>
    tpu.vector_store %arg14[%c0_162, %c7_163, %c0_164, %c0_165], %367 {strides = array<i32>} : memref<1x8x8x16xf32, #tpu.memory_space<vmem>>, vector<1x1x8x16xf32>,
    %c0_166 = arith.constant 0 : index
    %c0_167 = arith.constant 0 : index
    %368 = vector.load %arg16[%c0_166, %c0_167] : memref<16x32xf32, #tpu.memory_space<vmem>>, vector<16x32xf32>
    %c0_168 = arith.constant 0 : index
    %c0_169 = arith.constant 0 : index
    %c0_170 = arith.constant 0 : index
    %369 = vector.load %arg7[%c0_168, %c0_169, %c0_170] : memref<1x32x32xf32, #tpu.memory_space<vmem>>, vector<1x32x32xf32>
    %370 = vector.shape_cast %369 : vector<1x32x32xf32> to vector<32x32xf32>
    %cst_171 = arith.constant dense<0.000000e+00> : vector<16x32xf32>
    %371 = tpu.matmul %368, %370, %cst_171 {dimension_numbers = #tpu.dot_dimension_numbers<[1], [0], [0], [1], [0, 0, 1, 1], [], []>} : vector<16x32xf32>, vector<32x32xf32>, vector<16x32xf32> -> vector<16x32xf32>
    %372 = arith.addf %205, %371 : vector<16x32xf32>
    %cst_172 = arith.constant dense<0.000000e+00> : vector<16xf32>
    %373 = vector.multi_reduction <add>, %372, %cst_172 [1] : vector<16x32xf32> to vector<16xf32>
    %374 = vector.shape_cast %373 : vector<16xf32> to vector<16x1xf32>
    %cst_173 = arith.constant 3.200000e+01 : f32
    %375 = vector.broadcast %cst_173 : f32 to vector<16x1xf32>
    %376 = arith.divf %374, %375 : vector<16x1xf32>
    %377 = vector.broadcast %376 : vector<16x1xf32> to vector<16x32xf32>
    %378 = arith.subf %372, %377 : vector<16x32xf32>
    %379 = arith.mulf %378, %378 : vector<16x32xf32>
    %cst_174 = arith.constant dense<0.000000e+00> : vector<16xf32>
    %380 = vector.multi_reduction <add>, %379, %cst_174 [1] : vector<16x32xf32> to vector<16xf32>
    %381 = vector.shape_cast %380 : vector<16xf32> to vector<16x1xf32>
    %cst_175 = arith.constant 3.200000e+01 : f32
    %382 = vector.broadcast %cst_175 : f32 to vector<16x1xf32>
    %383 = arith.divf %381, %382 : vector<16x1xf32>
    %384 = vector.broadcast %376 : vector<16x1xf32> to vector<16x32xf32>
    %385 = arith.subf %372, %384 : vector<16x32xf32>
    %cst_176 = arith.constant 9.99999974E-6 : f32
    %386 = vector.broadcast %cst_176 : f32 to vector<16x1xf32>
    %387 = arith.addf %383, %386 : vector<16x1xf32>
    %388 = math.rsqrt %387 : vector<16x1xf32>
    %389 = vector.broadcast %388 : vector<16x1xf32> to vector<16x32xf32>
    %390 = arith.mulf %385, %389 : vector<16x32xf32>
    %c0_177 = arith.constant 0 : index
    %c0_178 = arith.constant 0 : index
    %c0_179 = arith.constant 0 : index
    %391 = vector.load %arg8[%c0_177, %c0_178, %c0_179] : memref<1x32x64xf32, #tpu.memory_space<vmem>>, vector<1x32x64xf32>
    %392 = vector.shape_cast %391 : vector<1x32x64xf32> to vector<32x64xf32>
    %cst_180 = arith.constant dense<0.000000e+00> : vector<16x64xf32>
    %393 = tpu.matmul %390, %392, %cst_180 {dimension_numbers = #tpu.dot_dimension_numbers<[1], [0], [0], [1], [0, 0, 1, 1], [], []>} : vector<16x32xf32>, vector<32x64xf32>, vector<16x64xf32> -> vector<16x64xf32>
    %c0_181 = arith.constant 0 : index
    %c0_182 = arith.constant 0 : index
    %c0_183 = arith.constant 0 : index
    %394 = vector.load %arg9[%c0_181, %c0_182, %c0_183] : memref<1x1x64xf32, #tpu.memory_space<vmem>>, vector<1x1x64xf32>
    %395 = vector.shape_cast %394 : vector<1x1x64xf32> to vector<1x64xf32>
    %396 = vector.broadcast %395 : vector<1x64xf32> to vector<16x64xf32>
    %397 = arith.addf %393, %396 : vector<16x64xf32>
    %cst_184 = arith.constant 0.000000e+00 : f32
    %398 = vector.broadcast %cst_184 : f32 to vector<16x64xf32>
    %399 = arith.maximumf %397, %398 : vector<16x64xf32>
    %c0_185 = arith.constant 0 : index
    %c0_186 = arith.constant 0 : index
    %c0_187 = arith.constant 0 : index
    %400 = vector.load %arg10[%c0_185, %c0_186, %c0_187] : memref<1x64x32xf32, #tpu.memory_space<vmem>>, vector<1x64x32xf32>
    %401 = vector.shape_cast %400 : vector<1x64x32xf32> to vector<64x32xf32>
    %cst_188 = arith.constant dense<0.000000e+00> : vector<16x32xf32>
    %402 = tpu.matmul %399, %401, %cst_188 {dimension_numbers = #tpu.dot_dimension_numbers<[1], [0], [0], [1], [0, 0, 1, 1], [], []>} : vector<16x64xf32>, vector<64x32xf32>, vector<16x32xf32> -> vector<16x32xf32>
    %c0_189 = arith.constant 0 : index
    %c0_190 = arith.constant 0 : index
    %c0_191 = arith.constant 0 : index
    %403 = vector.load %arg11[%c0_189, %c0_190, %c0_191] : memref<1x1x32xf32, #tpu.memory_space<vmem>>, vector<1x1x32xf32>
    %404 = vector.shape_cast %403 : vector<1x1x32xf32> to vector<1x32xf32>
    %405 = vector.broadcast %404 : vector<1x32xf32> to vector<16x32xf32>
    %406 = arith.addf %402, %405 : vector<16x32xf32>
    %407 = arith.addf %390, %406 : vector<16x32xf32>
    %cst_192 = arith.constant dense<0.000000e+00> : vector<16xf32>
    %408 = vector.multi_reduction <add>, %407, %cst_192 [1] : vector<16x32xf32> to vector<16xf32>
    %409 = vector.shape_cast %408 : vector<16xf32> to vector<16x1xf32>
    %cst_193 = arith.constant 3.200000e+01 : f32
    %410 = vector.broadcast %cst_193 : f32 to vector<16x1xf32>
    %411 = arith.divf %409, %410 : vector<16x1xf32>
    %412 = vector.broadcast %411 : vector<16x1xf32> to vector<16x32xf32>
    %413 = arith.subf %407, %412 : vector<16x32xf32>
    %414 = arith.mulf %413, %413 : vector<16x32xf32>
    %cst_194 = arith.constant dense<0.000000e+00> : vector<16xf32>
    %415 = vector.multi_reduction <add>, %414, %cst_194 [1] : vector<16x32xf32> to vector<16xf32>
    %416 = vector.shape_cast %415 : vector<16xf32> to vector<16x1xf32>
    %cst_195 = arith.constant 3.200000e+01 : f32
    %417 = vector.broadcast %cst_195 : f32 to vector<16x1xf32>
    %418 = arith.divf %416, %417 : vector<16x1xf32>
    %419 = vector.broadcast %411 : vector<16x1xf32> to vector<16x32xf32>
    %420 = arith.subf %407, %419 : vector<16x32xf32>
    %cst_196 = arith.constant 9.99999974E-6 : f32
    %421 = vector.broadcast %cst_196 : f32 to vector<16x1xf32>
    %422 = arith.addf %418, %421 : vector<16x1xf32>
    %423 = math.rsqrt %422 : vector<16x1xf32>
    %424 = vector.broadcast %423 : vector<16x1xf32> to vector<16x32xf32>
    %425 = arith.mulf %420, %424 : vector<16x32xf32>
    %c0_197 = arith.constant 0 : index
    %c0_198 = arith.constant 0 : index
    %426 = vector.load %arg15[%c0_197, %c0_198] : memref<16x32xf32, #tpu.memory_space<vmem>>, vector<16x32xf32>
    tpu.vector_store %arg15[%c0_197, %c0_198], %425 {strides = array<i32>} : memref<16x32xf32, #tpu.memory_space<vmem>>, vector<16x32xf32>,
    %c0_199 = arith.constant 0 : index
    %c0_200 = arith.constant 0 : index
    %427 = vector.load %arg12[%c0_199, %c0_200] : memref<16x32xf32, #tpu.memory_space<vmem>>, vector<16x32xf32>
    tpu.vector_store %arg12[%c0_199, %c0_200], %425 {strides = array<i32>} : memref<16x32xf32, #tpu.memory_space<vmem>>, vector<16x32xf32>,
    return
  }
  func.func @transform_0(%arg0: i32) -> (i32, i32) {
    %c0_i32 = arith.constant 0 : i32
    %c0_i32_0 = arith.constant 0 : i32
    %c0_i32_1 = arith.constant 0 : i32
    return %c0_i32, %c0_i32_0 : i32, i32
  }
  func.func @transform_1(%arg0: i32) -> (i32, i32) {
    %c0_i32 = arith.constant 0 : i32
    %c0_i32_0 = arith.constant 0 : i32
    %c0_i32_1 = arith.constant 0 : i32
    return %c0_i32, %c0_i32_0 : i32, i32
  }
  func.func @transform_2(%arg0: i32) -> (i32, i32, i32) {
    %c0_i32 = arith.constant 0 : i32
    %c0_i32_0 = arith.constant 0 : i32
    %c0_i32_1 = arith.constant 0 : i32
    return %arg0, %c0_i32, %c0_i32_0 : i32, i32, i32
  }
  func.func @transform_3(%arg0: i32) -> (i32, i32, i32) {
    %c0_i32 = arith.constant 0 : i32
    %c0_i32_0 = arith.constant 0 : i32
    %c0_i32_1 = arith.constant 0 : i32
    return %arg0, %c0_i32, %c0_i32_0 : i32, i32, i32
  }
  func.func @transform_4(%arg0: i32) -> (i32, i32, i32) {
    %c0_i32 = arith.constant 0 : i32
    %c0_i32_0 = arith.constant 0 : i32
    %c0_i32_1 = arith.constant 0 : i32
    return %arg0, %c0_i32, %c0_i32_0 : i32, i32, i32
  }
  func.func @transform_5(%arg0: i32) -> (i32, i32, i32) {
    %c0_i32 = arith.constant 0 : i32
    %c0_i32_0 = arith.constant 0 : i32
    %c0_i32_1 = arith.constant 0 : i32
    return %arg0, %c0_i32, %c0_i32_0 : i32, i32, i32
  }
  func.func @transform_6(%arg0: i32) -> (i32, i32, i32) {
    %c0_i32 = arith.constant 0 : i32
    %c0_i32_0 = arith.constant 0 : i32
    %c0_i32_1 = arith.constant 0 : i32
    return %arg0, %c0_i32, %c0_i32_0 : i32, i32, i32
  }
  func.func @transform_7(%arg0: i32) -> (i32, i32, i32) {
    %c0_i32 = arith.constant 0 : i32
    %c0_i32_0 = arith.constant 0 : i32
    %c0_i32_1 = arith.constant 0 : i32
    return %arg0, %c0_i32, %c0_i32_0 : i32, i32, i32
  }
  func.func @transform_8(%arg0: i32) -> (i32, i32, i32) {
    %c0_i32 = arith.constant 0 : i32
    %c0_i32_0 = arith.constant 0 : i32
    %c0_i32_1 = arith.constant 0 : i32
    return %arg0, %c0_i32, %c0_i32_0 : i32, i32, i32
  }
  func.func @transform_9(%arg0: i32) -> (i32, i32, i32) {
    %c0_i32 = arith.constant 0 : i32
    %c0_i32_0 = arith.constant 0 : i32
    %c0_i32_1 = arith.constant 0 : i32
    return %arg0, %c0_i32, %c0_i32_0 : i32, i32, i32
  }
  func.func @transform_10(%arg0: i32) -> (i32, i32, i32) {
    %c0_i32 = arith.constant 0 : i32
    %c0_i32_0 = arith.constant 0 : i32
    %c0_i32_1 = arith.constant 0 : i32
    return %arg0, %c0_i32, %c0_i32_0 : i32, i32, i32
  }
  func.func @transform_11(%arg0: i32) -> (i32, i32) {
    %c0_i32 = arith.constant 0 : i32
    %c0_i32_0 = arith.constant 0 : i32
    %c0_i32_1 = arith.constant 0 : i32
    return %c0_i32, %c0_i32_0 : i32, i32
  }
  func.func @transform_12(%arg0: i32) -> (i32, i32, i32, i32) {
    %c0_i32 = arith.constant 0 : i32
    %c0_i32_0 = arith.constant 0 : i32
    %c0_i32_1 = arith.constant 0 : i32
    %c0_i32_2 = arith.constant 0 : i32
    return %arg0, %c0_i32, %c0_i32_0, %c0_i32_1 : i32, i32, i32, i32
  }
  func.func @transform_13(%arg0: i32) -> (i32, i32, i32, i32) {
    %c0_i32 = arith.constant 0 : i32
    %c0_i32_0 = arith.constant 0 : i32
    %c0_i32_1 = arith.constant 0 : i32
    %c0_i32_2 = arith.constant 0 : i32
    return %arg0, %c0_i32, %c0_i32_0, %c0_i32_1 : i32, i32, i32, i32
  }
}

</mosaic_0001>

<llo_original>
// kernel: tpu_custom_call.1
$region0: #{tpu_custom_call.1}
  #allocation0 [shape = 'u32[]', space=smem, size = 0x4, offset = 0x4, fixed_abs, tag = 'smem constant byte address 0x4 - core index']
  #allocation1 [shape = 'u32[144,128]{1,0:T(1,128)}', space=vmem, size = 0x12000, scoped, tag = 'internal scratch']
  #allocation2 [shape = 'f32[16,32]{1,0:T(8,128)}', space=vmem, size = 0x2000, scoped, tag = 'scratch operand']
  #allocation3 [shape = 'f32[16,32]{1,0:T(8,128)}', space=vmem, size = 0x2000, scoped, tag = 'scratch operand']
  %s0 = inlined_call_operand.hbm [shape: f32[16,32], index: 0, kind: input, shape index: {}]
  %s1 = inlined_call_operand.hbm [shape: f32[32,32], index: 1, kind: input, shape index: {}]
  %s2 = inlined_call_operand.vmem [shape: f32[2,32,96], index: 2, kind: input, shape index: {}]
  %s3 = inlined_call_operand.vmem [shape: f32[2,32,32], index: 3, kind: input, shape index: {}]
  %s4 = inlined_call_operand.vmem [shape: f32[2,32,32], index: 4, kind: input, shape index: {}]
  %s5 = inlined_call_operand.hbm [shape: f32[2,32,64], index: 5, kind: input, shape index: {}]
  %s6 = inlined_call_operand.hbm [shape: f32[2,32,32], index: 6, kind: input, shape index: {}]
  %s7 = inlined_call_operand.hbm [shape: f32[2,32,64], index: 7, kind: input, shape index: {}]
  %s8 = inlined_call_operand.vmem [shape: f32[2,1,64], index: 8, kind: input, shape index: {}]
  %s9 = inlined_call_operand.vmem [shape: f32[2,64,32], index: 9, kind: input, shape index: {}]
  %s10 = inlined_call_operand.vmem [shape: f32[2,1,32], index: 10, kind: input, shape index: {}]
  %s11 = inlined_call_operand.hbm [shape: f32[16,32], index: 11, kind: output, shape index: {0}]
  %s12 = inlined_call_operand.hbm [shape: f32[2,8,8,8], index: 12, kind: output, shape index: {1}]
  %s13 = inlined_call_operand.hbm [shape: f32[2,8,8,16], index: 13, kind: output, shape index: {2}]
  %14 = xla_tuple %s11, %s12, %s13
  %s15 = sld [smem:[#allocation0]]
  $region117: #{tpu_custom_call.1} parent=0
    _
  %s17 = ssub.s32 1, %s15
  %s18 = scalar_select 0, %s17, %s15
  $region1: #{tpu_custom_call.1} parent=0
    #allocation4 [shape = 'u8[8192]{0}', space=vmem, size = 0x2000, scoped, tag = 'input window, operand 0, single buffered']
    #allocation5 [shape = 's32[2]{0}', space=sflag, size = 0x8, scoped, tag = 'scoped memory for tpu_custom_call.1']
    #allocation6 [shape = 's32[2]{0}', space=sflag, size = 0x8, scoped, tag = 'scoped memory for tpu_custom_call.1']
    #allocation7 [shape = 'u8[16384]{0}', space=vmem, size = 0x4000, scoped, tag = 'input window, operand 1, single buffered']
    #allocation8 [shape = 's32[1]{0}', space=sflag, size = 0x4, scoped, tag = 'scoped memory for tpu_custom_call.1']
    #allocation9 [shape = 'u8[32768]{0}', space=vmem, size = 0x8000, scoped, tag = 'input window, operand 5']
    #allocation10 [shape = 'u8[32768]{0}', space=vmem, size = 0x8000, scoped, tag = 'input window, operand 6']
    #allocation11 [shape = 'u8[32768]{0}', space=vmem, size = 0x8000, scoped, tag = 'input window, operand 7']
    #allocation12 [shape = 'u8[8192]{0}', space=vmem, size = 0x2000, scoped, tag = 'output window, operand 0, single buffered']
    #allocation13 [shape = 'u8[65536]{0}', space=vmem, size = 0x10000, scoped, tag = 'output window, operand 1']
    #allocation14 [shape = 's32[2]{0}', space=sflag, size = 0x8, scoped, tag = 'scoped memory for tpu_custom_call.1']
    #allocation15 [shape = 'u8[65536]{0}', space=vmem, size = 0x10000, scoped, tag = 'output window, operand 2']
    %19 = vsyncpa [#allocation5], 0
    %20 = vsyncpa [#allocation8], 0
    %21 = vsyncpa [#allocation6], 0
    %22 = vsyncpa [#allocation14], 0
    %s23 = scalar_lea.sflag [#allocation14], 1
    %24 = vsyncpa %s23, 0
    loop: start=0, step=1, limit=4
    $region2: #{tpu_custom_call.1} parent=1 // loop_pre_header
      _
    $region3: #{tpu_custom_call.1} parent=1 // loop_header
      %s26 = sphi 0, %s30
      %p27 = scmp.ge.s32.totalorder %s26, 4
      %s34 = sphi 0, %s34
      %s36 = sphi 0, %s34
      %s37 = sphi 0, %s36
      %s51 = sphi 0, %s37
      %s55 = sphi 0, %s55
      %s57 = sphi 0, %s55
      %s58 = sphi 0, %s57
      %s72 = sphi 0, %s58
      %s78 = sphi 0, %s80
      %s81 = sphi 0, %s78
      %s82 = sphi 0, %s81
      %s98 = sphi 0, %s82
      %s104 = sphi 0, %s106
      %s107 = sphi 0, %s104
      %s108 = sphi 0, %s107
      %s124 = sphi 0, %s108
      %s130 = sphi 0, %s132
      %s133 = sphi 0, %s130
      %s134 = sphi 0, %s133
      %s150 = sphi 0, %s134
      %s156 = sphi 0, %s158
      %s159 = sphi 0, %s156
      %s160 = sphi 0, %s159
      %s176 = sphi 0, %s160
      %s182 = sphi 0, %s184
      %s185 = sphi 0, %s182
      %s186 = sphi 0, %s185
      %s202 = sphi 0, %s186
      %s208 = sphi 0, %s210
      %s211 = sphi 0, %s208
      %s212 = sphi 0, %s211
      %s228 = sphi 0, %s212
      %s234 = sphi 0, %s236
      %s237 = sphi 0, %s234
      %s238 = sphi 0, %s237
      %s254 = sphi 0, %s238
      %s260 = sphi 0, %s262
      %s263 = sphi 0, %s260
      %s264 = sphi 0, %s263
      %s280 = sphi 0, %s264
      %s286 = sphi 0, %s288
      %s289 = sphi 0, %s286
      %s290 = sphi 0, %s289
      %s306 = sphi 0, %s290
      %s310 = sphi 0, %s310
      %s312 = sphi 0, %s310
      %s313 = sphi 0, %s312
      %s327 = sphi 0, %s313
      %s333 = sphi 0, %s335
      %s336 = sphi 0, %s333
      %s337 = sphi 0, %s336
      %s353 = sphi 0, %s337
      %s359 = sphi 0, %s361
      %s362 = sphi 0, %s359
      %s363 = sphi 0, %s362
      %s379 = sphi 0, %s363
    $region4: #{tpu_custom_call.1} parent=1 // loop_header_branch
      %29 = sbr.rel (%p27) target = $region8
    $region5: #{tpu_custom_call.1} parent=1 // loop_body
      %s31 = ssub.s32 %s26, 1
      %s32 = ssub.s32 %s26, 2
      %s33 = sadd.s32 %s26, 1
      %s35 = sadd.s32 %s34, 1
      %p38 = scmp.eq.s32.totalorder %s26, 1
      %p39 = scmp.ne.s32.totalorder %s34, %s36
      %p40 = scmp.eq.s32.totalorder %s26, 0
      %p41 = por %p39, %p40
      %p42 = scmp.ne.s32.totalorder %s34, %s36
      %p43 = scmp.eq.s32.totalorder %s31, 1
      %p44 = por %p42, %p43
      %p45 = scmp.ne.s32.totalorder %s36, %s37
      %p46 = scmp.eq.s32.totalorder %s31, 0
      %p47 = por %p45, %p46
      %p48 = scmp.ne.s32.totalorder %s36, %s37
      %p49 = scmp.eq.s32.totalorder %s32, 1
      %p50 = por %p48, %p49
      %p52 = scmp.ne.s32.totalorder %s37, %s51
      %p53 = scmp.eq.s32.totalorder %s32, 0
      %p54 = por %p52, %p53
      %s56 = sadd.s32 %s55, 1
      %p59 = scmp.eq.s32.totalorder %s26, 1
      %p60 = scmp.ne.s32.totalorder %s55, %s57
      %p61 = scmp.eq.s32.totalorder %s26, 0
      %p62 = por %p60, %p61
      %p63 = scmp.ne.s32.totalorder %s55, %s57
      %p64 = scmp.eq.s32.totalorder %s31, 1
      %p65 = por %p63, %p64
      %p66 = scmp.ne.s32.totalorder %s57, %s58
      %p67 = scmp.eq.s32.totalorder %s31, 0
      %p68 = por %p66, %p67
      %p69 = scmp.ne.s32.totalorder %s57, %s58
      %p70 = scmp.eq.s32.totalorder %s32, 1
      %p71 = por %p69, %p70
      %p73 = scmp.ne.s32.totalorder %s58, %s72
      %p74 = scmp.eq.s32.totalorder %s32, 0
      %p75 = por %p73, %p74
      %s76 = ssub.s32 %s26, %s33
      %p77 = scmp.eq.s32.totalorder %s76, 0
      %s79 = sadd.s32 %s78, 1
      %s80 = scalar_select %p77, %s78, %s79
      %p83 = pneg %p77
      %p84 = scmp.eq.s32.totalorder %s26, 1
      %p85 = por %p83, %p84
      %p86 = scmp.ne.s32.totalorder %s78, %s81
      %p87 = scmp.eq.s32.totalorder %s26, 0
      %p88 = por %p86, %p87
      %p89 = scmp.ne.s32.totalorder %s78, %s81
      %p90 = scmp.eq.s32.totalorder %s31, 1
      %p91 = por %p89, %p90
      %p92 = scmp.ne.s32.totalorder %s81, %s82
      %p93 = scmp.eq.s32.totalorder %s31, 0
      %p94 = por %p92, %p93
      %p95 = scmp.ne.s32.totalorder %s81, %s82
      %p96 = scmp.eq.s32.totalorder %s32, 1
      %p97 = por %p95, %p96
      %p99 = scmp.ne.s32.totalorder %s82, %s98
      %p100 = scmp.eq.s32.totalorder %s32, 0
      %p101 = por %p99, %p100
      %s102 = ssub.s32 %s26, %s33
      %p103 = scmp.eq.s32.totalorder %s102, 0
      %s105 = sadd.s32 %s104, 1
      %s106 = scalar_select %p103, %s104, %s105
      %p109 = pneg %p103
      %p110 = scmp.eq.s32.totalorder %s26, 1
      %p111 = por %p109, %p110
      %p112 = scmp.ne.s32.totalorder %s104, %s107
      %p113 = scmp.eq.s32.totalorder %s26, 0
      %p114 = por %p112, %p113
      %p115 = scmp.ne.s32.totalorder %s104, %s107
      %p116 = scmp.eq.s32.totalorder %s31, 1
      %p117 = por %p115, %p116
      %p118 = scmp.ne.s32.totalorder %s107, %s108
      %p119 = scmp.eq.s32.totalorder %s31, 0
      %p120 = por %p118, %p119
      %p121 = scmp.ne.s32.totalorder %s107, %s108
      %p122 = scmp.eq.s32.totalorder %s32, 1
      %p123 = por %p121, %p122
      %p125 = scmp.ne.s32.totalorder %s108, %s124
      %p126 = scmp.eq.s32.totalorder %s32, 0
      %p127 = por %p125, %p126
      %s128 = ssub.s32 %s26, %s33
      %p129 = scmp.eq.s32.totalorder %s128, 0
      %s131 = sadd.s32 %s130, 1
      %s132 = scalar_select %p129, %s130, %s131
      %p135 = pneg %p129
      %p136 = scmp.eq.s32.totalorder %s26, 1
      %p137 = por %p135, %p136
      %p138 = scmp.ne.s32.totalorder %s130, %s133
      %p139 = scmp.eq.s32.totalorder %s26, 0
      %p140 = por %p138, %p139
      %p141 = scmp.ne.s32.totalorder %s130, %s133
      %p142 = scmp.eq.s32.totalorder %s31, 1
      %p143 = por %p141, %p142
      %p144 = scmp.ne.s32.totalorder %s133, %s134
      %p145 = scmp.eq.s32.totalorder %s31, 0
      %p146 = por %p144, %p145
      %p147 = scmp.ne.s32.totalorder %s133, %s134
      %p148 = scmp.eq.s32.totalorder %s32, 1
      %p149 = por %p147, %p148
      %p151 = scmp.ne.s32.totalorder %s134, %s150
      %p152 = scmp.eq.s32.totalorder %s32, 0
      %p153 = por %p151, %p152
      %s154 = ssub.s32 %s26, %s33
      %p155 = scmp.eq.s32.totalorder %s154, 0
      %s157 = sadd.s32 %s156, 1
      %s158 = scalar_select %p155, %s156, %s157
      %p161 = pneg %p155
      %p162 = scmp.eq.s32.totalorder %s26, 1
      %p163 = por %p161, %p162
      %p164 = scmp.ne.s32.totalorder %s156, %s159
      %p165 = scmp.eq.s32.totalorder %s26, 0
      %p166 = por %p164, %p165
      %p167 = scmp.ne.s32.totalorder %s156, %s159
      %p168 = scmp.eq.s32.totalorder %s31, 1
      %p169 = por %p167, %p168
      %p170 = scmp.ne.s32.totalorder %s159, %s160
      %p171 = scmp.eq.s32.totalorder %s31, 0
      %p172 = por %p170, %p171
      %p173 = scmp.ne.s32.totalorder %s159, %s160
      %p174 = scmp.eq.s32.totalorder %s32, 1
      %p175 = por %p173, %p174
      %p177 = scmp.ne.s32.totalorder %s160, %s176
      %p178 = scmp.eq.s32.totalorder %s32, 0
      %p179 = por %p177, %p178
      %s180 = ssub.s32 %s26, %s33
      %p181 = scmp.eq.s32.totalorder %s180, 0
      %s183 = sadd.s32 %s182, 1
      %s184 = scalar_select %p181, %s182, %s183
      %p187 = pneg %p181
      %p188 = scmp.eq.s32.totalorder %s26, 1
      %p189 = por %p187, %p188
      %p190 = scmp.ne.s32.totalorder %s182, %s185
      %p191 = scmp.eq.s32.totalorder %s26, 0
      %p192 = por %p190, %p191
      %p193 = scmp.ne.s32.totalorder %s182, %s185
      %p194 = scmp.eq.s32.totalorder %s31, 1
      %p195 = por %p193, %p194
      %p196 = scmp.ne.s32.totalorder %s185, %s186
      %p197 = scmp.eq.s32.totalorder %s31, 0
      %p198 = por %p196, %p197
      %p199 = scmp.ne.s32.totalorder %s185, %s186
      %p200 = scmp.eq.s32.totalorder %s32, 1
      %p201 = por %p199, %p200
      %p203 = scmp.ne.s32.totalorder %s186, %s202
      %p204 = scmp.eq.s32.totalorder %s32, 0
      %p205 = por %p203, %p204
      %s206 = ssub.s32 %s26, %s33
      %p207 = scmp.eq.s32.totalorder %s206, 0
      %s209 = sadd.s32 %s208, 1
      %s210 = scalar_select %p207, %s208, %s209
      %p213 = pneg %p207
      %p214 = scmp.eq.s32.totalorder %s26, 1
      %p215 = por %p213, %p214
      %p216 = scmp.ne.s32.totalorder %s208, %s211
      %p217 = scmp.eq.s32.totalorder %s26, 0
      %p218 = por %p216, %p217
      %p219 = scmp.ne.s32.totalorder %s208, %s211
      %p220 = scmp.eq.s32.totalorder %s31, 1
      %p221 = por %p219, %p220
      %p222 = scmp.ne.s32.totalorder %s211, %s212
      %p223 = scmp.eq.s32.totalorder %s31, 0
      %p224 = por %p222, %p223
      %p225 = scmp.ne.s32.totalorder %s211, %s212
      %p226 = scmp.eq.s32.totalorder %s32, 1
      %p227 = por %p225, %p226
      %p229 = scmp.ne.s32.totalorder %s212, %s228
      %p230 = scmp.eq.s32.totalorder %s32, 0
      %p231 = por %p229, %p230
      %s232 = ssub.s32 %s26, %s33
      %p233 = scmp.eq.s32.totalorder %s232, 0
      %s235 = sadd.s32 %s234, 1
      %s236 = scalar_select %p233, %s234, %s235
      %p239 = pneg %p233
      %p240 = scmp.eq.s32.totalorder %s26, 1
      %p241 = por %p239, %p240
      %p242 = scmp.ne.s32.totalorder %s234, %s237
      %p243 = scmp.eq.s32.totalorder %s26, 0
      %p244 = por %p242, %p243
      %p245 = scmp.ne.s32.totalorder %s234, %s237
      %p246 = scmp.eq.s32.totalorder %s31, 1
      %p247 = por %p245, %p246
      %p248 = scmp.ne.s32.totalorder %s237, %s238
      %p249 = scmp.eq.s32.totalorder %s31, 0
      %p250 = por %p248, %p249
      %p251 = scmp.ne.s32.totalorder %s237, %s238
      %p252 = scmp.eq.s32.totalorder %s32, 1
      %p253 = por %p251, %p252
      %p255 = scmp.ne.s32.totalorder %s238, %s254
      %p256 = scmp.eq.s32.totalorder %s32, 0
      %p257 = por %p255, %p256
      %s258 = ssub.s32 %s26, %s33
      %p259 = scmp.eq.s32.totalorder %s258, 0
      %s261 = sadd.s32 %s260, 1
      %s262 = scalar_select %p259, %s260, %s261
      %p265 = pneg %p259
      %p266 = scmp.eq.s32.totalorder %s26, 1
      %p267 = por %p265, %p266
      %p268 = scmp.ne.s32.totalorder %s260, %s263
      %p269 = scmp.eq.s32.totalorder %s26, 0
      %p270 = por %p268, %p269
      %p271 = scmp.ne.s32.totalorder %s260, %s263
      %p272 = scmp.eq.s32.totalorder %s31, 1
      %p273 = por %p271, %p272
      %p274 = scmp.ne.s32.totalorder %s263, %s264
      %p275 = scmp.eq.s32.totalorder %s31, 0
      %p276 = por %p274, %p275
      %p277 = scmp.ne.s32.totalorder %s263, %s264
      %p278 = scmp.eq.s32.totalorder %s32, 1
      %p279 = por %p277, %p278
      %p281 = scmp.ne.s32.totalorder %s264, %s280
      %p282 = scmp.eq.s32.totalorder %s32, 0
      %p283 = por %p281, %p282
      %s284 = ssub.s32 %s26, %s33
      %p285 = scmp.eq.s32.totalorder %s284, 0
      %s287 = sadd.s32 %s286, 1
      %s288 = scalar_select %p285, %s286, %s287
      %p291 = pneg %p285
      %p292 = scmp.eq.s32.totalorder %s26, 1
      %p293 = por %p291, %p292
      %p294 = scmp.ne.s32.totalorder %s286, %s289
      %p295 = scmp.eq.s32.totalorder %s26, 0
      %p296 = por %p294, %p295
      %p297 = scmp.ne.s32.totalorder %s286, %s289
      %p298 = scmp.eq.s32.totalorder %s31, 1
      %p299 = por %p297, %p298
      %p300 = scmp.ne.s32.totalorder %s289, %s290
      %p301 = scmp.eq.s32.totalorder %s31, 0
      %p302 = por %p300, %p301
      %p303 = scmp.ne.s32.totalorder %s289, %s290
      %p304 = scmp.eq.s32.totalorder %s32, 1
      %p305 = por %p303, %p304
      %p307 = scmp.ne.s32.totalorder %s290, %s306
      %p308 = scmp.eq.s32.totalorder %s32, 0
      %p309 = por %p307, %p308
      %s311 = sadd.s32 %s310, 1
      %p314 = scmp.eq.s32.totalorder %s26, 1
      %p315 = scmp.ne.s32.totalorder %s310, %s312
      %p316 = scmp.eq.s32.totalorder %s26, 0
      %p317 = por %p315, %p316
      %p318 = scmp.ne.s32.totalorder %s310, %s312
      %p319 = scmp.eq.s32.totalorder %s31, 1
      %p320 = por %p318, %p319
      %p321 = scmp.ne.s32.totalorder %s312, %s313
      %p322 = scmp.eq.s32.totalorder %s31, 0
      %p323 = por %p321, %p322
      %p324 = scmp.ne.s32.totalorder %s312, %s313
      %p325 = scmp.eq.s32.totalorder %s32, 1
      %p326 = por %p324, %p325
      %p328 = scmp.ne.s32.totalorder %s313, %s327
      %p329 = scmp.eq.s32.totalorder %s32, 0
      %p330 = por %p328, %p329
      %s331 = ssub.s32 %s26, %s33
      %p332 = scmp.eq.s32.totalorder %s331, 0
      %s334 = sadd.s32 %s333, 1
      %s335 = scalar_select %p332, %s333, %s334
      %p338 = pneg %p332
      %p339 = scmp.eq.s32.totalorder %s26, 1
      %p340 = por %p338, %p339
      %p341 = scmp.ne.s32.totalorder %s333, %s336
      %p342 = scmp.eq.s32.totalorder %s26, 0
      %p343 = por %p341, %p342
      %p344 = scmp.ne.s32.totalorder %s333, %s336
      %p345 = scmp.eq.s32.totalorder %s31, 1
      %p346 = por %p344, %p345
      %p347 = scmp.ne.s32.totalorder %s336, %s337
      %p348 = scmp.eq.s32.totalorder %s31, 0
      %p349 = por %p347, %p348
      %p350 = scmp.ne.s32.totalorder %s336, %s337
      %p351 = scmp.eq.s32.totalorder %s32, 1
      %p352 = por %p350, %p351
      %p354 = scmp.ne.s32.totalorder %s337, %s353
      %p355 = scmp.eq.s32.totalorder %s32, 0
      %p356 = por %p354, %p355
      %s357 = ssub.s32 %s26, %s33
      %p358 = scmp.eq.s32.totalorder %s357, 0
      %s360 = sadd.s32 %s359, 1
      %s361 = scalar_select %p358, %s359, %s360
      %p364 = pneg %p358
      %p365 = scmp.eq.s32.totalorder %s26, 1
      %p366 = por %p364, %p365
      %p367 = scmp.ne.s32.totalorder %s359, %s362
      %p368 = scmp.eq.s32.totalorder %s26, 0
      %p369 = por %p367, %p368
      %p370 = scmp.ne.s32.totalorder %s359, %s362
      %p371 = scmp.eq.s32.totalorder %s31, 1
      %p372 = por %p370, %p371
      %p373 = scmp.ne.s32.totalorder %s362, %s363
      %p374 = scmp.eq.s32.totalorder %s31, 0
      %p375 = por %p373, %p374
      %p376 = scmp.ne.s32.totalorder %s362, %s363
      %p377 = scmp.eq.s32.totalorder %s32, 1
      %p378 = por %p376, %p377
      %p380 = scmp.ne.s32.totalorder %s363, %s379
      %p381 = scmp.eq.s32.totalorder %s32, 0
      %p382 = por %p380, %p381
      %p383 = scmp.le.s32.totalorder 1, %s26
      %p384 = scmp.lt.s32.totalorder %s26, 3
      %p385 = pnand %p383, %p384
      %p386 = pneg %p385
      // Predicated region
      $region9: #{tpu_custom_call.1} parent=5 // pred_check
        _
      $region10: #{tpu_custom_call.1} parent=5 // pred_check_branch
        %388 = sbr.rel (%p385) target = $region12
      $region11: #{tpu_custom_call.1} parent=5 // pred_region
        %s389 = ssub.s32 %s26, 1
        // Predicated region
        $region13: #{tpu_custom_call.1} parent=11 // pred_check
          %p390 = pneg %p47
        $region14: #{tpu_custom_call.1} parent=11 // pred_check_branch
          %392 = sbr.rel (%p390) target = $region16
        $region15: #{tpu_custom_call.1} parent=11 // pred_region
          %s394 = ssub.s32 256, 256
          %395 = vsyncadd [#allocation5], %s394
          %s396 = sshll.u32 [#allocation4], 4
          %s397 = int_to_ptr.vmem [resolvable:$true] %s396
          %402 = dma.hbm_to_vmem [thread:$0]  %s0, 256, %s397, [#allocation5], 128, 128, 8
        $region16: #{tpu_custom_call.1} parent=11 // pred_fallthru
          _
        // Predicated region
        $region17: #{tpu_custom_call.1} parent=11 // pred_check
          %p403 = pneg %p68
        $region18: #{tpu_custom_call.1} parent=11 // pred_check_branch
          %405 = sbr.rel (%p403) target = $region20
        $region19: #{tpu_custom_call.1} parent=11 // pred_region
          %s407 = ssub.s32 512, 512
          %408 = vsyncadd [#allocation8], %s407
          %s409 = sshll.u32 [#allocation7], 4
          %s410 = int_to_ptr.vmem [resolvable:$true] %s409
          %415 = dma.hbm_to_vmem [thread:$0]  %s1, 512, %s410, [#allocation8], 128, 128, 8
        $region20: #{tpu_custom_call.1} parent=11 // pred_fallthru
          _
      $region12: #{tpu_custom_call.1} parent=5 // pred_fallthru
        _
      %p416 = scmp.lt.s32.totalorder %s26, 2
      // Predicated region
      $region21: #{tpu_custom_call.1} parent=5 // pred_check
        %p417 = pneg %p416
      $region22: #{tpu_custom_call.1} parent=5 // pred_check_branch
        %419 = sbr.rel (%p417) target = $region24
      $region23: #{tpu_custom_call.1} parent=5 // pred_region
        // Predicated region
        $region25: #{tpu_custom_call.1} parent=23 // pred_check
          %p420 = pneg %p88
        $region26: #{tpu_custom_call.1} parent=23 // pred_check_branch
          %422 = sbr.rel (%p420) target = $region28
        $region27: #{tpu_custom_call.1} parent=23 // pred_region
          %p423 = scmp.lt.s32.totalorder %s26, 1
          %s424 = scalar_select %p423, %s26, 1
          %s425 = smul.addr %s424, 4
          %s426 = smul.addr %s425, 8
          %s427 = scalar_lea.vmem %s2, %s426
        $region28: #{tpu_custom_call.1} parent=23 // pred_fallthru
          _
        // Predicated region
        $region29: #{tpu_custom_call.1} parent=23 // pred_check
          %p428 = pneg %p114
        $region30: #{tpu_custom_call.1} parent=23 // pred_check_branch
          %430 = sbr.rel (%p428) target = $region32
        $region31: #{tpu_custom_call.1} parent=23 // pred_region
          %p431 = scmp.lt.s32.totalorder %s26, 1
          %s432 = scalar_select %p431, %s26, 1
          %s433 = smul.addr %s432, 4
          %s434 = smul.addr %s433, 8
          %s435 = scalar_lea.vmem %s3, %s434
        $region32: #{tpu_custom_call.1} parent=23 // pred_fallthru
          _
        // Predicated region
        $region33: #{tpu_custom_call.1} parent=23 // pred_check
          %p436 = pneg %p140
        $region34: #{tpu_custom_call.1} parent=23 // pred_check_branch
          %438 = sbr.rel (%p436) target = $region36
        $region35: #{tpu_custom_call.1} parent=23 // pred_region
          %p439 = scmp.lt.s32.totalorder %s26, 1
          %s440 = scalar_select %p439, %s26, 1
          %s441 = smul.addr %s440, 4
          %s442 = smul.addr %s441, 8
          %s443 = scalar_lea.vmem %s4, %s442
        $region36: #{tpu_custom_call.1} parent=23 // pred_fallthru
          _
        // Predicated region
        $region37: #{tpu_custom_call.1} parent=23 // pred_check
          %p444 = pneg %p166
        $region38: #{tpu_custom_call.1} parent=23 // pred_check_branch
          %446 = sbr.rel (%p444) target = $region40
        $region39: #{tpu_custom_call.1} parent=23 // pred_region
          %s447 = sand.u32 %s26, 1
          %s448 = scalar_lea.sflag [#allocation5], %s447
          %s449 = sand.u32 %s156, 1
          %s450 = smul.addr %s449, 32
          %s451 = scalar_lea.vmem [#allocation9], %s450
          %s453 = ssub.s32 512, 512
          %454 = vsyncadd %s448, %s453
          %s455 = smul.addr %s26, 4
          %s456 = smul.addr %s455, 128
          %s457 = scalar_lea.hbm %s5, %s456
          %s458 = sshll.u32 %s451, 4
          %s459 = int_to_ptr.vmem [resolvable:$true] %s458
          %464 = dma.hbm_to_vmem [thread:$0]  %s457, 512, %s459, %s448, 128, 128, 8
        $region40: #{tpu_custom_call.1} parent=23 // pred_fallthru
          _
        // Predicated region
        $region41: #{tpu_custom_call.1} parent=23 // pred_check
          %p465 = pneg %p192
        $region42: #{tpu_custom_call.1} parent=23 // pred_check_branch
          %467 = sbr.rel (%p465) target = $region44
        $region43: #{tpu_custom_call.1} parent=23 // pred_region
          %s468 = sand.u32 %s26, 1
          %s469 = scalar_lea.sflag [#allocation5], %s468
          %s470 = sand.u32 %s182, 1
          %s471 = smul.addr %s470, 32
          %s472 = scalar_lea.vmem [#allocation10], %s471
          %s474 = ssub.s32 512, 512
          %475 = vsyncadd %s469, %s474
          %s476 = smul.addr %s26, 4
          %s477 = smul.addr %s476, 128
          %s478 = scalar_lea.hbm %s6, %s477
          %s479 = sshll.u32 %s472, 4
          %s480 = int_to_ptr.vmem [resolvable:$true] %s479
          %485 = dma.hbm_to_vmem [thread:$0]  %s478, 512, %s480, %s469, 128, 128, 8
        $region44: #{tpu_custom_call.1} parent=23 // pred_fallthru
          _
        // Predicated region
        $region45: #{tpu_custom_call.1} parent=23 // pred_check
          %p486 = pneg %p218
        $region46: #{tpu_custom_call.1} parent=23 // pred_check_branch
          %488 = sbr.rel (%p486) target = $region48
        $region47: #{tpu_custom_call.1} parent=23 // pred_region
          %s489 = sand.u32 %s26, 1
          %s490 = scalar_lea.sflag [#allocation5], %s489
          %s491 = sand.u32 %s208, 1
          %s492 = smul.addr %s491, 32
          %s493 = scalar_lea.vmem [#allocation11], %s492
          %s495 = ssub.s32 512, 512
          %496 = vsyncadd %s490, %s495
          %s497 = smul.addr %s26, 4
          %s498 = smul.addr %s497, 128
          %s499 = scalar_lea.hbm %s7, %s498
          %s500 = sshll.u32 %s493, 4
          %s501 = int_to_ptr.vmem [resolvable:$true] %s500
          %506 = dma.hbm_to_vmem [thread:$0]  %s499, 512, %s501, %s490, 128, 128, 8
        $region48: #{tpu_custom_call.1} parent=23 // pred_fallthru
          _
        // Predicated region
        $region49: #{tpu_custom_call.1} parent=23 // pred_check
          %p507 = pneg %p244
        $region50: #{tpu_custom_call.1} parent=23 // pred_check_branch
          %509 = sbr.rel (%p507) target = $region52
        $region51: #{tpu_custom_call.1} parent=23 // pred_region
          %p510 = scmp.lt.s32.totalorder %s26, 1
          %s511 = scalar_select %p510, %s26, 1
          %s512 = scalar_lea.vmem %s8, %s511
        $region52: #{tpu_custom_call.1} parent=23 // pred_fallthru
          _
        // Predicated region
        $region53: #{tpu_custom_call.1} parent=23 // pred_check
          %p513 = pneg %p270
        $region54: #{tpu_custom_call.1} parent=23 // pred_check_branch
          %515 = sbr.rel (%p513) target = $region56
        $region55: #{tpu_custom_call.1} parent=23 // pred_region
          %p516 = scmp.lt.s32.totalorder %s26, 1
          %s517 = scalar_select %p516, %s26, 1
          %s518 = smul.addr %s517, 8
          %s519 = smul.addr %s518, 8
          %s520 = scalar_lea.vmem %s9, %s519
        $region56: #{tpu_custom_call.1} parent=23 // pred_fallthru
          _
        // Predicated region
        $region57: #{tpu_custom_call.1} parent=23 // pred_check
          %p521 = pneg %p296
        $region58: #{tpu_custom_call.1} parent=23 // pred_check_branch
          %523 = sbr.rel (%p521) target = $region60
        $region59: #{tpu_custom_call.1} parent=23 // pred_region
          %p524 = scmp.lt.s32.totalorder %s26, 1
          %s525 = scalar_select %p524, %s26, 1
          %s526 = scalar_lea.vmem %s10, %s525
        $region60: #{tpu_custom_call.1} parent=23 // pred_fallthru
          _
      $region24: #{tpu_custom_call.1} parent=5 // pred_fallthru
        _
      %p527 = scmp.le.s32.totalorder 1, %s26
      %p528 = scmp.lt.s32.totalorder %s26, 3
      %p529 = pnand %p527, %p528
      %p530 = pneg %p529
      // Predicated region
      $region61: #{tpu_custom_call.1} parent=5 // pred_check
        _
      $region62: #{tpu_custom_call.1} parent=5 // pred_check_branch
        %532 = sbr.rel (%p529) target = $region64
      $region63: #{tpu_custom_call.1} parent=5 // pred_region
        %s533 = ssub.s32 %s26, 1
        // Predicated region
        $region65: #{tpu_custom_call.1} parent=63 // pred_check
          %p534 = pneg %p47
        $region66: #{tpu_custom_call.1} parent=63 // pred_check_branch
          %536 = sbr.rel (%p534) target = $region68
        $region67: #{tpu_custom_call.1} parent=63 // pred_region
          %537 = dma.done [#allocation5], 256
        $region68: #{tpu_custom_call.1} parent=63 // pred_fallthru
          _
        // Predicated region
        $region69: #{tpu_custom_call.1} parent=63 // pred_check
          %p538 = pneg %p68
        $region70: #{tpu_custom_call.1} parent=63 // pred_check_branch
          %540 = sbr.rel (%p538) target = $region72
        $region71: #{tpu_custom_call.1} parent=63 // pred_region
          %541 = dma.done [#allocation8], 512
        $region72: #{tpu_custom_call.1} parent=63 // pred_fallthru
          _
        %s542 = sand.u32 %s31, 1
        %s543 = scalar_lea.sflag [#allocation5], %s542
        %s544 = sand.u32 %s159, 1
        %s545 = smul.addr %s544, 32
        %s546 = scalar_lea.vmem [#allocation9], %s545
        // Predicated region
        $region73: #{tpu_custom_call.1} parent=63 // pred_check
          %p547 = pneg %p172
        $region74: #{tpu_custom_call.1} parent=63 // pred_check_branch
          %549 = sbr.rel (%p547) target = $region76
        $region75: #{tpu_custom_call.1} parent=63 // pred_region
          %550 = dma.done %s543, 512
        $region76: #{tpu_custom_call.1} parent=63 // pred_fallthru
          _
        %s551 = sand.u32 %s31, 1
        %s552 = scalar_lea.sflag [#allocation5], %s551
        %s553 = sand.u32 %s185, 1
        %s554 = smul.addr %s553, 32
        %s555 = scalar_lea.vmem [#allocation10], %s554
        // Predicated region
        $region77: #{tpu_custom_call.1} parent=63 // pred_check
          %p556 = pneg %p198
        $region78: #{tpu_custom_call.1} parent=63 // pred_check_branch
          %558 = sbr.rel (%p556) target = $region80
        $region79: #{tpu_custom_call.1} parent=63 // pred_region
          %559 = dma.done %s552, 512
        $region80: #{tpu_custom_call.1} parent=63 // pred_fallthru
          _
        %s560 = sand.u32 %s31, 1
        %s561 = scalar_lea.sflag [#allocation5], %s560
        %s562 = sand.u32 %s211, 1
        %s563 = smul.addr %s562, 32
        %s564 = scalar_lea.vmem [#allocation11], %s563
        // Predicated region
        $region81: #{tpu_custom_call.1} parent=63 // pred_check
          %p565 = pneg %p224
        $region82: #{tpu_custom_call.1} parent=63 // pred_check_branch
          %567 = sbr.rel (%p565) target = $region84
        $region83: #{tpu_custom_call.1} parent=63 // pred_region
          %568 = dma.done %s561, 512
        $region84: #{tpu_custom_call.1} parent=63 // pred_fallthru
          _
        %p569 = pneg %p47
        %p570 = pneg %p44
        %p571 = pneg %p68
        %p572 = pneg %p65
        %p573 = scmp.lt.s32.totalorder %s31, 1
        %s574 = scalar_select %p573, %s31, 1
        %s575 = smul.addr %s574, 4
        %s576 = smul.addr %s575, 8
        %s577 = scalar_lea.vmem %s2, %s576
        %p578 = pneg %p94
        %p579 = pneg %p91
        %p580 = scmp.lt.s32.totalorder %s31, 1
        %s581 = scalar_select %p580, %s31, 1
        %s582 = smul.addr %s581, 4
        %s583 = smul.addr %s582, 8
        %s584 = scalar_lea.vmem %s3, %s583
        %p585 = pneg %p120
        %p586 = pneg %p117
        %p587 = scmp.lt.s32.totalorder %s31, 1
        %s588 = scalar_select %p587, %s31, 1
        %s589 = smul.addr %s588, 4
        %s590 = smul.addr %s589, 8
        %s591 = scalar_lea.vmem %s4, %s590
        %p592 = pneg %p146
        %p593 = pneg %p143
        %s594 = sand.u32 %s31, 1
        %s595 = scalar_lea.sflag [#allocation5], %s594
        %s596 = sand.u32 %s159, 1
        %s597 = smul.addr %s596, 32
        %s598 = scalar_lea.vmem [#allocation9], %s597
        %p599 = pneg %p172
        %p600 = pneg %p169
        %s601 = sand.u32 %s31, 1
        %s602 = scalar_lea.sflag [#allocation5], %s601
        %s603 = sand.u32 %s185, 1
        %s604 = smul.addr %s603, 32
        %s605 = scalar_lea.vmem [#allocation10], %s604
        %p606 = pneg %p198
        %p607 = pneg %p195
        %s608 = sand.u32 %s31, 1
        %s609 = scalar_lea.sflag [#allocation5], %s608
        %s610 = sand.u32 %s211, 1
        %s611 = smul.addr %s610, 32
        %s612 = scalar_lea.vmem [#allocation11], %s611
        %p613 = pneg %p224
        %p614 = pneg %p221
        %p615 = scmp.lt.s32.totalorder %s31, 1
        %s616 = scalar_select %p615, %s31, 1
        %s617 = scalar_lea.vmem %s8, %s616
        %p618 = pneg %p250
        %p619 = pneg %p247
        %p620 = scmp.lt.s32.totalorder %s31, 1
        %s621 = scalar_select %p620, %s31, 1
        %s622 = smul.addr %s621, 8
        %s623 = smul.addr %s622, 8
        %s624 = scalar_lea.vmem %s9, %s623
        %p625 = pneg %p276
        %p626 = pneg %p273
        %p627 = scmp.lt.s32.totalorder %s31, 1
        %s628 = scalar_select %p627, %s31, 1
        %s629 = scalar_lea.vmem %s10, %s628
        %p630 = pneg %p302
        %p631 = pneg %p299
        %p632 = pneg %p323
        %p633 = pneg %p320
        %p634 = pneg %p349
        %p635 = pneg %p346
        %s636 = sand.u32 %s31, 1
        %s637 = scalar_lea.sflag [#allocation14], %s636
        %s638 = sand.u32 %s336, 1
        %s639 = smul.addr %s638, 64
        %s640 = scalar_lea.vmem [#allocation13], %s639
        %p641 = pneg %p375
        %p642 = pneg %p372
        %s643 = sand.u32 %s31, 1
        %s644 = scalar_lea.sflag [#allocation14], %s643
        %s645 = sand.u32 %s362, 1
        %s646 = smul.addr %s645, 64
        %s647 = scalar_lea.vmem [#allocation15], %s646
        %p648 = scmp.lt.s32.totalorder %s31, 1
        %s649 = scalar_select %p648, %s31, 1
        %s650 = smul.addr %s649, 4
        %s651 = smul.addr %s650, 8
        %s652 = scalar_lea.vmem %s2, %s651
        %p653 = scmp.lt.s32.totalorder %s31, 1
        %s654 = scalar_select %p653, %s31, 1
        %s655 = smul.addr %s654, 4
        %s656 = smul.addr %s655, 8
        %s657 = scalar_lea.vmem %s3, %s656
        %p658 = scmp.lt.s32.totalorder %s31, 1
        %s659 = scalar_select %p658, %s31, 1
        %s660 = smul.addr %s659, 4
        %s661 = smul.addr %s660, 8
        %s662 = scalar_lea.vmem %s4, %s661
        %p663 = scmp.lt.s32.totalorder %s31, 1
        %s664 = scalar_select %p663, %s31, 1
        %s665 = scalar_lea.vmem %s8, %s664
        %p666 = scmp.lt.s32.totalorder %s31, 1
        %s667 = scalar_select %p666, %s31, 1
        %s668 = smul.addr %s667, 8
        %s669 = smul.addr %s668, 8
        %s670 = scalar_lea.vmem %s9, %s669
        %p671 = scmp.lt.s32.totalorder %s31, 1
        %s672 = scalar_select %p671, %s31, 1
        %s673 = scalar_lea.vmem %s10, %s672
        %p674 = scmp.eq.s32.totalorder %s31, 0
        // Predicated region
        $region85: #{tpu_custom_call.1} parent=63 // pred_check
          %p675 = pneg %p674
        $region86: #{tpu_custom_call.1} parent=63 // pred_check_branch
          %677 = sbr.rel (%p675) target = $region88
        $region87: #{tpu_custom_call.1} parent=63 // pred_region
          %v678 = vld [vmem:[#allocation4] sm:$0xff]
          %v679 = vld [vmem:[#allocation4 + $0x8] sm:$0xff]
          %vm680 = vcmask 261120
          %681 = vst.msk [vmem:[#allocation2] sm:$0xff] %vm680, %v678
          %682 = vst.msk [vmem:[#allocation2 + $0x8] sm:$0xff] %vm680, %v679
        $region88: #{tpu_custom_call.1} parent=63 // pred_fallthru
          _
        %v683 = vld [vmem:[#allocation2] sm:$0xff]
        %v684 = vld [vmem:[#allocation2 + $0x8] sm:$0xff]
        %v685 = vld [vmem:[#allocation7] sm:$0xff]
        %v686 = vld [vmem:[#allocation7 + $0x8] sm:$0xff]
        %v687 = vld [vmem:[#allocation7 + $0x10] sm:$0xff]
        %v688 = vld [vmem:[#allocation7 + $0x18] sm:$0xff]
        %v689 = vld [vmem:[%s652] sm:$0xff]
        %v690 = vld [vmem:[%s652 + $0x8] sm:$0xff]
        %v691 = vld [vmem:[%s652 + $0x10] sm:$0xff]
        %v692 = vld [vmem:[%s652 + $0x18] sm:$0xff]
        %vm693 = vcmask 261120
        %v695 = vsel %vm693, %v683, 0
        %v698 = vsel %vm693, %v684, 0
        %700 = vmatprep.subr.mxu0 0.0
        %701 = vmatpush1.msra.mxu0 0.0
        %702 = vmatprep.subr.mxu0 0.0
        %703 = vmatpush1.msra.mxu0 0.0
        %704 = vmatprep.subr.mxu0 0.0
        %705 = vmatpush1.msra.mxu0 0.0
        %706 = vmatprep.subr.mxu0 0.0
        %707 = vmatpush1.msra.mxu0 0.0
        %708 = vmatprep.subr.mxu0 0.0
        %709 = vmatpush1.msra.mxu0 0.0
        %710 = vmatprep.subr.mxu0 0.0
        %711 = vmatpush1.msra.mxu0 0.0
        %712 = vmatprep.subr.mxu0 0.0
        %713 = vmatpush1.msra.mxu0 0.0
        %714 = vmatprep.subr.mxu0 0.0
        %715 = vmatpush1.msra.mxu0 0.0
        %716 = vmatprep.subr.mxu0 0.0
        %717 = vmatpush1.msra.mxu0 0.0
        %718 = vmatprep.subr.mxu0 0.0
        %719 = vmatpush1.msra.mxu0 0.0
        %720 = vmatprep.subr.mxu0 0.0
        %721 = vmatpush1.msra.mxu0 0.0
        %722 = vmatprep.subr.mxu0 0.0
        %723 = vmatpush1.msra.mxu0 0.0
        %724 = vmatprep.subr.mxu0 0.0
        %725 = vmatpush1.msra.mxu0 %v692
        %726 = vmatprep.subr.mxu0 0.0
        %727 = vmatpush1.msra.mxu0 %v691
        %728 = vmatprep.subr.mxu0 0.0
        %729 = vmatpush1.msra.mxu0 %v690
        %730 = vmatprep.subr.mxu0 0.0
        %731 = vmatpush1.msra.mxu0 %v689
        %732 = vmatprep.subr.mxu0 0.0
        %733 = vmatpush2.msra.mxu0 0.0
        %734 = vmatprep.subr.mxu0 0.0
        %735 = vmatpush2.msra.mxu0 0.0
        %736 = vmatprep.subr.mxu0 0.0
        %737 = vmatpush2.msra.mxu0 0.0
        %738 = vmatprep.subr.mxu0 0.0
        %739 = vmatpush2.msra.mxu0 0.0
        %740 = vmatprep.subr.mxu0 0.0
        %741 = vmatpush2.msra.mxu0 0.0
        %742 = vmatprep.subr.mxu0 0.0
        %743 = vmatpush2.msra.mxu0 0.0
        %744 = vmatprep.subr.mxu0 0.0
        %745 = vmatpush2.msra.mxu0 0.0
        %746 = vmatprep.subr.mxu0 0.0
        %747 = vmatpush2.msra.mxu0 0.0
        %748 = vmatprep.subr.mxu0 0.0
        %749 = vmatpush2.msra.mxu0 0.0
        %750 = vmatprep.subr.mxu0 0.0
        %751 = vmatpush2.msra.mxu0 0.0
        %752 = vmatprep.subr.mxu0 0.0
        %753 = vmatpush2.msra.mxu0 0.0
        %754 = vmatprep.subr.mxu0 0.0
        %755 = vmatpush2.msra.mxu0 0.0
        %756 = vmatprep.subr.mxu0 0.0
        %757 = vmatpush2.msra.mxu0 0.0
        %758 = vmatprep.subr.mxu0 0.0
        %759 = vmatpush2.msra.mxu0 0.0
        %760 = vmatprep.subr.mxu0 0.0
        %761 = vmatpush2.msra.mxu0 0.0
        %762 = vmatprep.subr.mxu0 0.0
        %763 = vmatpush2.msra.mxu0 0.0
        %764 = vmatprep.mubr.f32.mxu0 0.0
        %765 = vmatmul.mubr.f32.gmra.mxu0 %v695
        %v766 = vpop.f32.mrf.mxu0
        %v767 = vadd.f32 0.0, %v766
        %v768 = vpop.f32.mrf.mxu0
        %769 = vmatprep.mubr.f32.mxu0 0.0
        %770 = vmatmul.mubr.f32.gmra.mxu0 %v698
        %v771 = vpop.f32.mrf.mxu0
        %v772 = vadd.f32 0.0, %v771
        %v773 = vpop.f32.mrf.mxu0
        %774 = vdwg.mxu0
        %vm775 = vcmask 785920
        %v776 = vsel %vm775, %v767, 0.0
        %v777 = vrot.slane %v776, 4
        %v778 = vadd.f32 %v776, %v777
        %v779 = vrot.slane %v778, 2
        %v780 = vadd.f32 %v778, %v779
        %v781 = vrot.slane %v780, 1
        %v782 = vadd.f32 %v780, %v781
        %784 = vrot.lane.b32.xlu0 %v782, 64
        %v785 = vpop.permute.xlu0 %784
        %787 = vst.msk [vmem:[#allocation3] sm:$0xff] %vm693, %v785
        %v788 = vsel %vm775, %v772, 0.0
        %v789 = vrot.slane %v788, 4
        %v790 = vadd.f32 %v788, %v789
        %v791 = vrot.slane %v790, 2
        %v792 = vadd.f32 %v790, %v791
        %v793 = vrot.slane %v792, 1
        %v794 = vadd.f32 %v792, %v793
        %796 = vrot.lane.b32.xlu0 %v794, 64
        %v797 = vpop.permute.xlu0 %796
        %799 = vst.msk [vmem:[#allocation3 + $0x8] sm:$0xff] %vm693, %v797
        %v800 = vlaneseq
        %v801 = vshrl.u32 %v800, 7
        %v802 = vlaneseq
        %v803 = vand.u32 %v802, 127
        %vm804 = vcmp.gt.s32.totalorder %v803, %v801
        %806 = vrot.lane.b32.xlu0 %v767, 96
        %v807 = vpop.permute.xlu0 %806
        %vm808 = vcmask 64512
        %v809 = vsel %vm808, %v767, 0
        %v811 = vsel %vm808, %v807, 0
        %813 = vmatprep.subr.mxu0 0.0
        %814 = vmatpush1.xpose.msra.mxu0 0.0
        %815 = vmatprep.subr.mxu0 0.0
        %816 = vmatpush1.xpose.msra.mxu0 0.0
        %817 = vmatprep.subr.mxu0 0.0
        %818 = vmatpush1.xpose.msra.mxu0 0.0
        %819 = vmatprep.subr.mxu0 0.0
        %820 = vmatpush1.xpose.msra.mxu0 0.0
        %821 = vmatprep.subr.mxu0 0.0
        %822 = vmatpush1.xpose.msra.mxu0 0.0
        %823 = vmatprep.subr.mxu0 0.0
        %824 = vmatpush1.xpose.msra.mxu0 0.0
        %825 = vmatprep.subr.mxu0 0.0
        %826 = vmatpush1.xpose.msra.mxu0 0.0
        %827 = vmatprep.subr.mxu0 0.0
        %828 = vmatpush1.xpose.msra.mxu0 0.0
        %829 = vmatprep.subr.mxu0 0.0
        %830 = vmatpush1.xpose.msra.mxu0 0.0
        %831 = vmatprep.subr.mxu0 0.0
        %832 = vmatpush1.xpose.msra.mxu0 0.0
        %833 = vmatprep.subr.mxu0 0.0
        %834 = vmatpush1.xpose.msra.mxu0 0.0
        %835 = vmatprep.subr.mxu0 0.0
        %836 = vmatpush1.xpose.msra.mxu0 0.0
        %837 = vmatprep.subr.mxu0 0.0
        %838 = vmatpush1.xpose.msra.mxu0 0.0
        %839 = vmatprep.subr.mxu0 0.0
        %840 = vmatpush1.xpose.msra.mxu0 0.0
        %841 = vmatprep.subr.mxu0 0.0
        %842 = vmatpush1.xpose.msra.mxu0 0.0
        %843 = vmatprep.subr.mxu0 0.0
        %844 = vmatpush1.xpose.msra.mxu0 %v811
        %845 = vmatprep.subr.mxu0 0.0
        %846 = vmatpush2.xpose.msra.mxu0 0.0
        %847 = vmatprep.subr.mxu0 0.0
        %848 = vmatpush2.xpose.msra.mxu0 0.0
        %849 = vmatprep.subr.mxu0 0.0
        %850 = vmatpush2.xpose.msra.mxu0 0.0
        %851 = vmatprep.subr.mxu0 0.0
        %852 = vmatpush2.xpose.msra.mxu0 0.0
        %853 = vmatprep.subr.mxu0 0.0
        %854 = vmatpush2.xpose.msra.mxu0 0.0
        %855 = vmatprep.subr.mxu0 0.0
        %856 = vmatpush2.xpose.msra.mxu0 0.0
        %857 = vmatprep.subr.mxu0 0.0
        %858 = vmatpush2.xpose.msra.mxu0 0.0
        %859 = vmatprep.subr.mxu0 0.0
        %860 = vmatpush2.xpose.msra.mxu0 0.0
        %861 = vmatprep.subr.mxu0 0.0
        %862 = vmatpush2.xpose.msra.mxu0 0.0
        %863 = vmatprep.subr.mxu0 0.0
        %864 = vmatpush2.xpose.msra.mxu0 0.0
        %865 = vmatprep.subr.mxu0 0.0
        %866 = vmatpush2.xpose.msra.mxu0 0.0
        %867 = vmatprep.subr.mxu0 0.0
        %868 = vmatpush2.xpose.msra.mxu0 0.0
        %869 = vmatprep.subr.mxu0 0.0
        %870 = vmatpush2.xpose.msra.mxu0 0.0
        %871 = vmatprep.subr.mxu0 0.0
        %872 = vmatpush2.xpose.msra.mxu0 0.0
        %873 = vmatprep.subr.mxu0 0.0
        %874 = vmatpush2.xpose.msra.mxu0 0.0
        %875 = vmatprep.subr.mxu0 0.0
        %876 = vmatpush2.xpose.msra.mxu0 0.0
        %877 = vmatprep.mubr.f32.mxu0 0.0
        %878 = vmatmul.mubr.f32.gmra.mxu0 %v809
        %v879 = vpop.f32.mrf.mxu0
        %v880 = vadd.f32 0.0, %v879
        %v881 = vpop.f32.mrf.mxu0
        %882 = vdwg.mxu0
        %v883 = vmul.f32 %v880, 0.35355338
        %v884 = vsel %vm804, -1e+09, %v883
        %v885 = vsel %vm808, %v884, -inf
        %886 = vmax.xlane.f32.xlu0 %v885
        %v887 = vpop.xlane.xlu0 %886
        %v888 = vsub.f32 %v884, %v887
        %v889 = vmul.f32 %v888, 1.442695
        %v890 = vpow.pop %v889
        %v891 = vsel %vm808, %v890, 0.0
        %892 = vadd.xlane.f32.xlu0 %v891
        %v893 = vpop.xlane.xlu0 %892
        %v894 = vrcp.pop %v893
        %v895 = vmul.f32 %v890, %v894
        %896 = vst.msk [vmem:[%s640] sm:$0xff] %vm808, %v895
        %897 = vrot.lane.b32.xlu0 %v767, 120
        %v898 = vpop.permute.xlu0 %897
        %899 = vrot.lane.b32.xlu0 %v767, 88
        %v900 = vpop.permute.xlu0 %899
        %v901 = vsel %vm808, %v898, 0
        %v903 = vsel %vm808, %v900, 0
        %905 = vmatprep.subr.mxu0 0.0
        %906 = vmatpush1.xpose.msra.mxu0 0.0
        %907 = vmatprep.subr.mxu0 0.0
        %908 = vmatpush1.xpose.msra.mxu0 0.0
        %909 = vmatprep.subr.mxu0 0.0
        %910 = vmatpush1.xpose.msra.mxu0 0.0
        %911 = vmatprep.subr.mxu0 0.0
        %912 = vmatpush1.xpose.msra.mxu0 0.0
        %913 = vmatprep.subr.mxu0 0.0
        %914 = vmatpush1.xpose.msra.mxu0 0.0
        %915 = vmatprep.subr.mxu0 0.0
        %916 = vmatpush1.xpose.msra.mxu0 0.0
        %917 = vmatprep.subr.mxu0 0.0
        %918 = vmatpush1.xpose.msra.mxu0 0.0
        %919 = vmatprep.subr.mxu0 0.0
        %920 = vmatpush1.xpose.msra.mxu0 0.0
        %921 = vmatprep.subr.mxu0 0.0
        %922 = vmatpush1.xpose.msra.mxu0 0.0
        %923 = vmatprep.subr.mxu0 0.0
        %924 = vmatpush1.xpose.msra.mxu0 0.0
        %925 = vmatprep.subr.mxu0 0.0
        %926 = vmatpush1.xpose.msra.mxu0 0.0
        %927 = vmatprep.subr.mxu0 0.0
        %928 = vmatpush1.xpose.msra.mxu0 0.0
        %929 = vmatprep.subr.mxu0 0.0
        %930 = vmatpush1.xpose.msra.mxu0 0.0
        %931 = vmatprep.subr.mxu0 0.0
        %932 = vmatpush1.xpose.msra.mxu0 0.0
        %933 = vmatprep.subr.mxu0 0.0
        %934 = vmatpush1.xpose.msra.mxu0 0.0
        %935 = vmatprep.subr.mxu0 0.0
        %936 = vmatpush1.xpose.msra.mxu0 %v903
        %937 = vmatprep.subr.mxu0 0.0
        %938 = vmatpush2.xpose.msra.mxu0 0.0
        %939 = vmatprep.subr.mxu0 0.0
        %940 = vmatpush2.xpose.msra.mxu0 0.0
        %941 = vmatprep.subr.mxu0 0.0
        %942 = vmatpush2.xpose.msra.mxu0 0.0
        %943 = vmatprep.subr.mxu0 0.0
        %944 = vmatpush2.xpose.msra.mxu0 0.0
        %945 = vmatprep.subr.mxu0 0.0
        %946 = vmatpush2.xpose.msra.mxu0 0.0
        %947 = vmatprep.subr.mxu0 0.0
        %948 = vmatpush2.xpose.msra.mxu0 0.0
        %949 = vmatprep.subr.mxu0 0.0
        %950 = vmatpush2.xpose.msra.mxu0 0.0
        %951 = vmatprep.subr.mxu0 0.0
        %952 = vmatpush2.xpose.msra.mxu0 0.0
        %953 = vmatprep.subr.mxu0 0.0
        %954 = vmatpush2.xpose.msra.mxu0 0.0
        %955 = vmatprep.subr.mxu0 0.0
        %956 = vmatpush2.xpose.msra.mxu0 0.0
        %957 = vmatprep.subr.mxu0 0.0
        %958 = vmatpush2.xpose.msra.mxu0 0.0
        %959 = vmatprep.subr.mxu0 0.0
        %960 = vmatpush2.xpose.msra.mxu0 0.0
        %961 = vmatprep.subr.mxu0 0.0
        %962 = vmatpush2.xpose.msra.mxu0 0.0
        %963 = vmatprep.subr.mxu0 0.0
        %964 = vmatpush2.xpose.msra.mxu0 0.0
        %965 = vmatprep.subr.mxu0 0.0
        %966 = vmatpush2.xpose.msra.mxu0 0.0
        %967 = vmatprep.subr.mxu0 0.0
        %968 = vmatpush2.xpose.msra.mxu0 0.0
        %969 = vmatprep.mubr.f32.mxu0 0.0
        %970 = vmatmul.mubr.f32.gmra.mxu0 %v901
        %v971 = vpop.f32.mrf.mxu0
        %v972 = vadd.f32 0.0, %v971
        %v973 = vpop.f32.mrf.mxu0
        %974 = vdwg.mxu0
        %v975 = vmul.f32 %v972, 0.35355338
        %v976 = vsel %vm804, -1e+09, %v975
        %v977 = vsel %vm808, %v976, -inf
        %978 = vmax.xlane.f32.xlu0 %v977
        %v979 = vpop.xlane.xlu0 %978
        %v980 = vsub.f32 %v976, %v979
        %v981 = vmul.f32 %v980, 1.442695
        %v982 = vpow.pop %v981
        %v983 = vsel %vm808, %v982, 0.0
        %984 = vadd.xlane.f32.xlu0 %v983
        %v985 = vpop.xlane.xlu0 %984
        %v986 = vrcp.pop %v985
        %v987 = vmul.f32 %v982, %v986
        %s988 = scalar_lea.vmem %s640, 8 [#allocation13]
        %989 = vst.msk [vmem:[%s988] sm:$0xff] %vm808, %v987
        %990 = vrot.lane.b32.xlu0 %v767, 112
        %v991 = vpop.permute.xlu0 %990
        %992 = vrot.lane.b32.xlu0 %v767, 80
        %v993 = vpop.permute.xlu0 %992
        %v994 = vsel %vm808, %v991, 0
        %v996 = vsel %vm808, %v993, 0
        %998 = vmatprep.subr.mxu0 0.0
        %999 = vmatpush1.xpose.msra.mxu0 0.0
        %1000 = vmatprep.subr.mxu0 0.0
        %1001 = vmatpush1.xpose.msra.mxu0 0.0
        %1002 = vmatprep.subr.mxu0 0.0
        %1003 = vmatpush1.xpose.msra.mxu0 0.0
        %1004 = vmatprep.subr.mxu0 0.0
        %1005 = vmatpush1.xpose.msra.mxu0 0.0
        %1006 = vmatprep.subr.mxu0 0.0
        %1007 = vmatpush1.xpose.msra.mxu0 0.0
        %1008 = vmatprep.subr.mxu0 0.0
        %1009 = vmatpush1.xpose.msra.mxu0 0.0
        %1010 = vmatprep.subr.mxu0 0.0
        %1011 = vmatpush1.xpose.msra.mxu0 0.0
        %1012 = vmatprep.subr.mxu0 0.0
        %1013 = vmatpush1.xpose.msra.mxu0 0.0
        %1014 = vmatprep.subr.mxu0 0.0
        %1015 = vmatpush1.xpose.msra.mxu0 0.0
        %1016 = vmatprep.subr.mxu0 0.0
        %1017 = vmatpush1.xpose.msra.mxu0 0.0
        %1018 = vmatprep.subr.mxu0 0.0
        %1019 = vmatpush1.xpose.msra.mxu0 0.0
        %1020 = vmatprep.subr.mxu0 0.0
        %1021 = vmatpush1.xpose.msra.mxu0 0.0
        %1022 = vmatprep.subr.mxu0 0.0
        %1023 = vmatpush1.xpose.msra.mxu0 0.0
        %1024 = vmatprep.subr.mxu0 0.0
        %1025 = vmatpush1.xpose.msra.mxu0 0.0
        %1026 = vmatprep.subr.mxu0 0.0
        %1027 = vmatpush1.xpose.msra.mxu0 0.0
        %1028 = vmatprep.subr.mxu0 0.0
        %1029 = vmatpush1.xpose.msra.mxu0 %v996
        %1030 = vmatprep.subr.mxu0 0.0
        %1031 = vmatpush2.xpose.msra.mxu0 0.0
        %1032 = vmatprep.subr.mxu0 0.0
        %1033 = vmatpush2.xpose.msra.mxu0 0.0
        %1034 = vmatprep.subr.mxu0 0.0
        %1035 = vmatpush2.xpose.msra.mxu0 0.0
        %1036 = vmatprep.subr.mxu0 0.0
        %1037 = vmatpush2.xpose.msra.mxu0 0.0
        %1038 = vmatprep.subr.mxu0 0.0
        %1039 = vmatpush2.xpose.msra.mxu0 0.0
        %1040 = vmatprep.subr.mxu0 0.0
        %1041 = vmatpush2.xpose.msra.mxu0 0.0
        %1042 = vmatprep.subr.mxu0 0.0
        %1043 = vmatpush2.xpose.msra.mxu0 0.0
        %1044 = vmatprep.subr.mxu0 0.0
        %1045 = vmatpush2.xpose.msra.mxu0 0.0
        %1046 = vmatprep.subr.mxu0 0.0
        %1047 = vmatpush2.xpose.msra.mxu0 0.0
        %1048 = vmatprep.subr.mxu0 0.0
        %1049 = vmatpush2.xpose.msra.mxu0 0.0
        %1050 = vmatprep.subr.mxu0 0.0
        %1051 = vmatpush2.xpose.msra.mxu0 0.0
        %1052 = vmatprep.subr.mxu0 0.0
        %1053 = vmatpush2.xpose.msra.mxu0 0.0
        %1054 = vmatprep.subr.mxu0 0.0
        %1055 = vmatpush2.xpose.msra.mxu0 0.0
        %1056 = vmatprep.subr.mxu0 0.0
        %1057 = vmatpush2.xpose.msra.mxu0 0.0
        %1058 = vmatprep.subr.mxu0 0.0
        %1059 = vmatpush2.xpose.msra.mxu0 0.0
        %1060 = vmatprep.subr.mxu0 0.0
        %1061 = vmatpush2.xpose.msra.mxu0 0.0
        %1062 = vmatprep.mubr.f32.mxu0 0.0
        %1063 = vmatmul.mubr.f32.gmra.mxu0 %v994
        %v1064 = vpop.f32.mrf.mxu0
        %v1065 = vadd.f32 0.0, %v1064
        %v1066 = vpop.f32.mrf.mxu0
        %1067 = vdwg.mxu0
        %v1068 = vmul.f32 %v1065, 0.35355338
        %v1069 = vsel %vm804, -1e+09, %v1068
        %v1070 = vsel %vm808, %v1069, -inf
        %1071 = vmax.xlane.f32.xlu0 %v1070
        %v1072 = vpop.xlane.xlu0 %1071
        %v1073 = vsub.f32 %v1069, %v1072
        %v1074 = vmul.f32 %v1073, 1.442695
        %v1075 = vpow.pop %v1074
        %v1076 = vsel %vm808, %v1075, 0.0
        %1077 = vadd.xlane.f32.xlu0 %v1076
        %v1078 = vpop.xlane.xlu0 %1077
        %v1079 = vrcp.pop %v1078
        %v1080 = vmul.f32 %v1075, %v1079
        %s1081 = scalar_lea.vmem %s640, 16 [#allocation13]
        %1082 = vst.msk [vmem:[%s1081] sm:$0xff] %vm808, %v1080
        %1083 = vrot.lane.b32.xlu0 %v767, 104
        %v1084 = vpop.permute.xlu0 %1083
        %1085 = vrot.lane.b32.xlu0 %v767, 72
        %v1086 = vpop.permute.xlu0 %1085
        %v1087 = vsel %vm808, %v1084, 0
        %v1089 = vsel %vm808, %v1086, 0
        %1091 = vmatprep.subr.mxu0 0.0
        %1092 = vmatpush1.xpose.msra.mxu0 0.0
        %1093 = vmatprep.subr.mxu0 0.0
        %1094 = vmatpush1.xpose.msra.mxu0 0.0
        %1095 = vmatprep.subr.mxu0 0.0
        %1096 = vmatpush1.xpose.msra.mxu0 0.0
        %1097 = vmatprep.subr.mxu0 0.0
        %1098 = vmatpush1.xpose.msra.mxu0 0.0
        %1099 = vmatprep.subr.mxu0 0.0
        %1100 = vmatpush1.xpose.msra.mxu0 0.0
        %1101 = vmatprep.subr.mxu0 0.0
        %1102 = vmatpush1.xpose.msra.mxu0 0.0
        %1103 = vmatprep.subr.mxu0 0.0
        %1104 = vmatpush1.xpose.msra.mxu0 0.0
        %1105 = vmatprep.subr.mxu0 0.0
        %1106 = vmatpush1.xpose.msra.mxu0 0.0
        %1107 = vmatprep.subr.mxu0 0.0
        %1108 = vmatpush1.xpose.msra.mxu0 0.0
        %1109 = vmatprep.subr.mxu0 0.0
        %1110 = vmatpush1.xpose.msra.mxu0 0.0
        %1111 = vmatprep.subr.mxu0 0.0
        %1112 = vmatpush1.xpose.msra.mxu0 0.0
        %1113 = vmatprep.subr.mxu0 0.0
        %1114 = vmatpush1.xpose.msra.mxu0 0.0
        %1115 = vmatprep.subr.mxu0 0.0
        %1116 = vmatpush1.xpose.msra.mxu0 0.0
        %1117 = vmatprep.subr.mxu0 0.0
        %1118 = vmatpush1.xpose.msra.mxu0 0.0
        %1119 = vmatprep.subr.mxu0 0.0
        %1120 = vmatpush1.xpose.msra.mxu0 0.0
        %1121 = vmatprep.subr.mxu0 0.0
        %1122 = vmatpush1.xpose.msra.mxu0 %v1089
        %1123 = vmatprep.subr.mxu0 0.0
        %1124 = vmatpush2.xpose.msra.mxu0 0.0
        %1125 = vmatprep.subr.mxu0 0.0
        %1126 = vmatpush2.xpose.msra.mxu0 0.0
        %1127 = vmatprep.subr.mxu0 0.0
        %1128 = vmatpush2.xpose.msra.mxu0 0.0
        %1129 = vmatprep.subr.mxu0 0.0
        %1130 = vmatpush2.xpose.msra.mxu0 0.0
        %1131 = vmatprep.subr.mxu0 0.0
        %1132 = vmatpush2.xpose.msra.mxu0 0.0
        %1133 = vmatprep.subr.mxu0 0.0
        %1134 = vmatpush2.xpose.msra.mxu0 0.0
        %1135 = vmatprep.subr.mxu0 0.0
        %1136 = vmatpush2.xpose.msra.mxu0 0.0
        %1137 = vmatprep.subr.mxu0 0.0
        %1138 = vmatpush2.xpose.msra.mxu0 0.0
        %1139 = vmatprep.subr.mxu0 0.0
        %1140 = vmatpush2.xpose.msra.mxu0 0.0
        %1141 = vmatprep.subr.mxu0 0.0
        %1142 = vmatpush2.xpose.msra.mxu0 0.0
        %1143 = vmatprep.subr.mxu0 0.0
        %1144 = vmatpush2.xpose.msra.mxu0 0.0
        %1145 = vmatprep.subr.mxu0 0.0
        %1146 = vmatpush2.xpose.msra.mxu0 0.0
        %1147 = vmatprep.subr.mxu0 0.0
        %1148 = vmatpush2.xpose.msra.mxu0 0.0
        %1149 = vmatprep.subr.mxu0 0.0
        %1150 = vmatpush2.xpose.msra.mxu0 0.0
        %1151 = vmatprep.subr.mxu0 0.0
        %1152 = vmatpush2.xpose.msra.mxu0 0.0
        %1153 = vmatprep.subr.mxu0 0.0
        %1154 = vmatpush2.xpose.msra.mxu0 0.0
        %1155 = vmatprep.mubr.f32.mxu0 0.0
        %1156 = vmatmul.mubr.f32.gmra.mxu0 %v1087
        %v1157 = vpop.f32.mrf.mxu0
        %v1158 = vadd.f32 0.0, %v1157
        %v1159 = vpop.f32.mrf.mxu0
        %1160 = vdwg.mxu0
        %v1161 = vmul.f32 %v1158, 0.35355338
        %v1162 = vsel %vm804, -1e+09, %v1161
        %v1163 = vsel %vm808, %v1162, -inf
        %1164 = vmax.xlane.f32.xlu0 %v1163
        %v1165 = vpop.xlane.xlu0 %1164
        %v1166 = vsub.f32 %v1162, %v1165
        %v1167 = vmul.f32 %v1166, 1.442695
        %v1168 = vpow.pop %v1167
        %v1169 = vsel %vm808, %v1168, 0.0
        %1170 = vadd.xlane.f32.xlu0 %v1169
        %v1171 = vpop.xlane.xlu0 %1170
        %v1172 = vrcp.pop %v1171
        %v1173 = vmul.f32 %v1168, %v1172
        %s1174 = scalar_lea.vmem %s640, 24 [#allocation13]
        %1175 = vst.msk [vmem:[%s1174] sm:$0xff] %vm808, %v1173
        %1177 = vrot.lane.b32.xlu0 %v772, 96
        %v1178 = vpop.permute.xlu0 %1177
        %v1179 = vsel %vm808, %v772, 0
        %v1181 = vsel %vm808, %v1178, 0
        %1183 = vmatprep.subr.mxu0 0.0
        %1184 = vmatpush1.xpose.msra.mxu0 0.0
        %1185 = vmatprep.subr.mxu0 0.0
        %1186 = vmatpush1.xpose.msra.mxu0 0.0
        %1187 = vmatprep.subr.mxu0 0.0
        %1188 = vmatpush1.xpose.msra.mxu0 0.0
        %1189 = vmatprep.subr.mxu0 0.0
        %1190 = vmatpush1.xpose.msra.mxu0 0.0
        %1191 = vmatprep.subr.mxu0 0.0
        %1192 = vmatpush1.xpose.msra.mxu0 0.0
        %1193 = vmatprep.subr.mxu0 0.0
        %1194 = vmatpush1.xpose.msra.mxu0 0.0
        %1195 = vmatprep.subr.mxu0 0.0
        %1196 = vmatpush1.xpose.msra.mxu0 0.0
        %1197 = vmatprep.subr.mxu0 0.0
        %1198 = vmatpush1.xpose.msra.mxu0 0.0
        %1199 = vmatprep.subr.mxu0 0.0
        %1200 = vmatpush1.xpose.msra.mxu0 0.0
        %1201 = vmatprep.subr.mxu0 0.0
        %1202 = vmatpush1.xpose.msra.mxu0 0.0
        %1203 = vmatprep.subr.mxu0 0.0
        %1204 = vmatpush1.xpose.msra.mxu0 0.0
        %1205 = vmatprep.subr.mxu0 0.0
        %1206 = vmatpush1.xpose.msra.mxu0 0.0
        %1207 = vmatprep.subr.mxu0 0.0
        %1208 = vmatpush1.xpose.msra.mxu0 0.0
        %1209 = vmatprep.subr.mxu0 0.0
        %1210 = vmatpush1.xpose.msra.mxu0 0.0
        %1211 = vmatprep.subr.mxu0 0.0
        %1212 = vmatpush1.xpose.msra.mxu0 0.0
        %1213 = vmatprep.subr.mxu0 0.0
        %1214 = vmatpush1.xpose.msra.mxu0 %v1181
        %1215 = vmatprep.subr.mxu0 0.0
        %1216 = vmatpush2.xpose.msra.mxu0 0.0
        %1217 = vmatprep.subr.mxu0 0.0
        %1218 = vmatpush2.xpose.msra.mxu0 0.0
        %1219 = vmatprep.subr.mxu0 0.0
        %1220 = vmatpush2.xpose.msra.mxu0 0.0
        %1221 = vmatprep.subr.mxu0 0.0
        %1222 = vmatpush2.xpose.msra.mxu0 0.0
        %1223 = vmatprep.subr.mxu0 0.0
        %1224 = vmatpush2.xpose.msra.mxu0 0.0
        %1225 = vmatprep.subr.mxu0 0.0
        %1226 = vmatpush2.xpose.msra.mxu0 0.0
        %1227 = vmatprep.subr.mxu0 0.0
        %1228 = vmatpush2.xpose.msra.mxu0 0.0
        %1229 = vmatprep.subr.mxu0 0.0
        %1230 = vmatpush2.xpose.msra.mxu0 0.0
        %1231 = vmatprep.subr.mxu0 0.0
        %1232 = vmatpush2.xpose.msra.mxu0 0.0
        %1233 = vmatprep.subr.mxu0 0.0
        %1234 = vmatpush2.xpose.msra.mxu0 0.0
        %1235 = vmatprep.subr.mxu0 0.0
        %1236 = vmatpush2.xpose.msra.mxu0 0.0
        %1237 = vmatprep.subr.mxu0 0.0
        %1238 = vmatpush2.xpose.msra.mxu0 0.0
        %1239 = vmatprep.subr.mxu0 0.0
        %1240 = vmatpush2.xpose.msra.mxu0 0.0
        %1241 = vmatprep.subr.mxu0 0.0
        %1242 = vmatpush2.xpose.msra.mxu0 0.0
        %1243 = vmatprep.subr.mxu0 0.0
        %1244 = vmatpush2.xpose.msra.mxu0 0.0
        %1245 = vmatprep.subr.mxu0 0.0
        %1246 = vmatpush2.xpose.msra.mxu0 0.0
        %1247 = vmatprep.mubr.f32.mxu0 0.0
        %1248 = vmatmul.mubr.f32.gmra.mxu0 %v1179
        %v1249 = vpop.f32.mrf.mxu0
        %v1250 = vadd.f32 0.0, %v1249
        %v1251 = vpop.f32.mrf.mxu0
        %1252 = vdwg.mxu0
        %v1253 = vmul.f32 %v1250, 0.35355338
        %v1254 = vsel %vm804, -1e+09, %v1253
        %v1255 = vsel %vm808, %v1254, -inf
        %1256 = vmax.xlane.f32.xlu0 %v1255
        %v1257 = vpop.xlane.xlu0 %1256
        %v1258 = vsub.f32 %v1254, %v1257
        %v1259 = vmul.f32 %v1258, 1.442695
        %v1260 = vpow.pop %v1259
        %v1261 = vsel %vm808, %v1260, 0.0
        %1262 = vadd.xlane.f32.xlu0 %v1261
        %v1263 = vpop.xlane.xlu0 %1262
        %v1264 = vrcp.pop %v1263
        %v1265 = vmul.f32 %v1260, %v1264
        %s1266 = scalar_lea.vmem %s640, 32 [#allocation13]
        %1267 = vst.msk [vmem:[%s1266] sm:$0xff] %vm808, %v1265
        %1268 = vrot.lane.b32.xlu0 %v772, 120
        %v1269 = vpop.permute.xlu0 %1268
        %1270 = vrot.lane.b32.xlu0 %v772, 88
        %v1271 = vpop.permute.xlu0 %1270
        %v1272 = vsel %vm808, %v1269, 0
        %v1274 = vsel %vm808, %v1271, 0
        %1276 = vmatprep.subr.mxu0 0.0
        %1277 = vmatpush1.xpose.msra.mxu0 0.0
        %1278 = vmatprep.subr.mxu0 0.0
        %1279 = vmatpush1.xpose.msra.mxu0 0.0
        %1280 = vmatprep.subr.mxu0 0.0
        %1281 = vmatpush1.xpose.msra.mxu0 0.0
        %1282 = vmatprep.subr.mxu0 0.0
        %1283 = vmatpush1.xpose.msra.mxu0 0.0
        %1284 = vmatprep.subr.mxu0 0.0
        %1285 = vmatpush1.xpose.msra.mxu0 0.0
        %1286 = vmatprep.subr.mxu0 0.0
        %1287 = vmatpush1.xpose.msra.mxu0 0.0
        %1288 = vmatprep.subr.mxu0 0.0
        %1289 = vmatpush1.xpose.msra.mxu0 0.0
        %1290 = vmatprep.subr.mxu0 0.0
        %1291 = vmatpush1.xpose.msra.mxu0 0.0
        %1292 = vmatprep.subr.mxu0 0.0
        %1293 = vmatpush1.xpose.msra.mxu0 0.0
        %1294 = vmatprep.subr.mxu0 0.0
        %1295 = vmatpush1.xpose.msra.mxu0 0.0
        %1296 = vmatprep.subr.mxu0 0.0
        %1297 = vmatpush1.xpose.msra.mxu0 0.0
        %1298 = vmatprep.subr.mxu0 0.0
        %1299 = vmatpush1.xpose.msra.mxu0 0.0
        %1300 = vmatprep.subr.mxu0 0.0
        %1301 = vmatpush1.xpose.msra.mxu0 0.0
        %1302 = vmatprep.subr.mxu0 0.0
        %1303 = vmatpush1.xpose.msra.mxu0 0.0
        %1304 = vmatprep.subr.mxu0 0.0
        %1305 = vmatpush1.xpose.msra.mxu0 0.0
        %1306 = vmatprep.subr.mxu0 0.0
        %1307 = vmatpush1.xpose.msra.mxu0 %v1274
        %1308 = vmatprep.subr.mxu0 0.0
        %1309 = vmatpush2.xpose.msra.mxu0 0.0
        %1310 = vmatprep.subr.mxu0 0.0
        %1311 = vmatpush2.xpose.msra.mxu0 0.0
        %1312 = vmatprep.subr.mxu0 0.0
        %1313 = vmatpush2.xpose.msra.mxu0 0.0
        %1314 = vmatprep.subr.mxu0 0.0
        %1315 = vmatpush2.xpose.msra.mxu0 0.0
        %1316 = vmatprep.subr.mxu0 0.0
        %1317 = vmatpush2.xpose.msra.mxu0 0.0
        %1318 = vmatprep.subr.mxu0 0.0
        %1319 = vmatpush2.xpose.msra.mxu0 0.0
        %1320 = vmatprep.subr.mxu0 0.0
        %1321 = vmatpush2.xpose.msra.mxu0 0.0
        %1322 = vmatprep.subr.mxu0 0.0
        %1323 = vmatpush2.xpose.msra.mxu0 0.0
        %1324 = vmatprep.subr.mxu0 0.0
        %1325 = vmatpush2.xpose.msra.mxu0 0.0
        %1326 = vmatprep.subr.mxu0 0.0
        %1327 = vmatpush2.xpose.msra.mxu0 0.0
        %1328 = vmatprep.subr.mxu0 0.0
        %1329 = vmatpush2.xpose.msra.mxu0 0.0
        %1330 = vmatprep.subr.mxu0 0.0
        %1331 = vmatpush2.xpose.msra.mxu0 0.0
        %1332 = vmatprep.subr.mxu0 0.0
        %1333 = vmatpush2.xpose.msra.mxu0 0.0
        %1334 = vmatprep.subr.mxu0 0.0
        %1335 = vmatpush2.xpose.msra.mxu0 0.0
        %1336 = vmatprep.subr.mxu0 0.0
        %1337 = vmatpush2.xpose.msra.mxu0 0.0
        %1338 = vmatprep.subr.mxu0 0.0
        %1339 = vmatpush2.xpose.msra.mxu0 0.0
        %1340 = vmatprep.mubr.f32.mxu0 0.0
        %1341 = vmatmul.mubr.f32.gmra.mxu0 %v1272
        %v1342 = vpop.f32.mrf.mxu0
        %v1343 = vadd.f32 0.0, %v1342
        %v1344 = vpop.f32.mrf.mxu0
        %1345 = vdwg.mxu0
        %v1346 = vmul.f32 %v1343, 0.35355338
        %v1347 = vsel %vm804, -1e+09, %v1346
        %v1348 = vsel %vm808, %v1347, -inf
        %1349 = vmax.xlane.f32.xlu0 %v1348
        %v1350 = vpop.xlane.xlu0 %1349
        %v1351 = vsub.f32 %v1347, %v1350
        %v1352 = vmul.f32 %v1351, 1.442695
        %v1353 = vpow.pop %v1352
        %v1354 = vsel %vm808, %v1353, 0.0
        %1355 = vadd.xlane.f32.xlu0 %v1354
        %v1356 = vpop.xlane.xlu0 %1355
        %v1357 = vrcp.pop %v1356
        %v1358 = vmul.f32 %v1353, %v1357
        %s1359 = scalar_lea.vmem %s640, 40 [#allocation13]
        %1360 = vst.msk [vmem:[%s1359] sm:$0xff] %vm808, %v1358
        %1361 = vrot.lane.b32.xlu0 %v772, 112
        %v1362 = vpop.permute.xlu0 %1361
        %1363 = vrot.lane.b32.xlu0 %v772, 80
        %v1364 = vpop.permute.xlu0 %1363
        %v1365 = vsel %vm808, %v1362, 0
        %v1367 = vsel %vm808, %v1364, 0
        %1369 = vmatprep.subr.mxu0 0.0
        %1370 = vmatpush1.xpose.msra.mxu0 0.0
        %1371 = vmatprep.subr.mxu0 0.0
        %1372 = vmatpush1.xpose.msra.mxu0 0.0
        %1373 = vmatprep.subr.mxu0 0.0
        %1374 = vmatpush1.xpose.msra.mxu0 0.0
        %1375 = vmatprep.subr.mxu0 0.0
        %1376 = vmatpush1.xpose.msra.mxu0 0.0
        %1377 = vmatprep.subr.mxu0 0.0
        %1378 = vmatpush1.xpose.msra.mxu0 0.0
        %1379 = vmatprep.subr.mxu0 0.0
        %1380 = vmatpush1.xpose.msra.mxu0 0.0
        %1381 = vmatprep.subr.mxu0 0.0
        %1382 = vmatpush1.xpose.msra.mxu0 0.0
        %1383 = vmatprep.subr.mxu0 0.0
        %1384 = vmatpush1.xpose.msra.mxu0 0.0
        %1385 = vmatprep.subr.mxu0 0.0
        %1386 = vmatpush1.xpose.msra.mxu0 0.0
        %1387 = vmatprep.subr.mxu0 0.0
        %1388 = vmatpush1.xpose.msra.mxu0 0.0
        %1389 = vmatprep.subr.mxu0 0.0
        %1390 = vmatpush1.xpose.msra.mxu0 0.0
        %1391 = vmatprep.subr.mxu0 0.0
        %1392 = vmatpush1.xpose.msra.mxu0 0.0
        %1393 = vmatprep.subr.mxu0 0.0
        %1394 = vmatpush1.xpose.msra.mxu0 0.0
        %1395 = vmatprep.subr.mxu0 0.0
        %1396 = vmatpush1.xpose.msra.mxu0 0.0
        %1397 = vmatprep.subr.mxu0 0.0
        %1398 = vmatpush1.xpose.msra.mxu0 0.0
        %1399 = vmatprep.subr.mxu0 0.0
        %1400 = vmatpush1.xpose.msra.mxu0 %v1367
        %1401 = vmatprep.subr.mxu0 0.0
        %1402 = vmatpush2.xpose.msra.mxu0 0.0
        %1403 = vmatprep.subr.mxu0 0.0
        %1404 = vmatpush2.xpose.msra.mxu0 0.0
        %1405 = vmatprep.subr.mxu0 0.0
        %1406 = vmatpush2.xpose.msra.mxu0 0.0
        %1407 = vmatprep.subr.mxu0 0.0
        %1408 = vmatpush2.xpose.msra.mxu0 0.0
        %1409 = vmatprep.subr.mxu0 0.0
        %1410 = vmatpush2.xpose.msra.mxu0 0.0
        %1411 = vmatprep.subr.mxu0 0.0
        %1412 = vmatpush2.xpose.msra.mxu0 0.0
        %1413 = vmatprep.subr.mxu0 0.0
        %1414 = vmatpush2.xpose.msra.mxu0 0.0
        %1415 = vmatprep.subr.mxu0 0.0
        %1416 = vmatpush2.xpose.msra.mxu0 0.0
        %1417 = vmatprep.subr.mxu0 0.0
        %1418 = vmatpush2.xpose.msra.mxu0 0.0
        %1419 = vmatprep.subr.mxu0 0.0
        %1420 = vmatpush2.xpose.msra.mxu0 0.0
        %1421 = vmatprep.subr.mxu0 0.0
        %1422 = vmatpush2.xpose.msra.mxu0 0.0
        %1423 = vmatprep.subr.mxu0 0.0
        %1424 = vmatpush2.xpose.msra.mxu0 0.0
        %1425 = vmatprep.subr.mxu0 0.0
        %1426 = vmatpush2.xpose.msra.mxu0 0.0
        %1427 = vmatprep.subr.mxu0 0.0
        %1428 = vmatpush2.xpose.msra.mxu0 0.0
        %1429 = vmatprep.subr.mxu0 0.0
        %1430 = vmatpush2.xpose.msra.mxu0 0.0
        %1431 = vmatprep.subr.mxu0 0.0
        %1432 = vmatpush2.xpose.msra.mxu0 0.0
        %1433 = vmatprep.mubr.f32.mxu0 0.0
        %1434 = vmatmul.mubr.f32.gmra.mxu0 %v1365
        %v1435 = vpop.f32.mrf.mxu0
        %v1436 = vadd.f32 0.0, %v1435
        %v1437 = vpop.f32.mrf.mxu0
        %1438 = vdwg.mxu0
        %v1439 = vmul.f32 %v1436, 0.35355338
        %v1440 = vsel %vm804, -1e+09, %v1439
        %v1441 = vsel %vm808, %v1440, -inf
        %1442 = vmax.xlane.f32.xlu0 %v1441
        %v1443 = vpop.xlane.xlu0 %1442
        %v1444 = vsub.f32 %v1440, %v1443
        %v1445 = vmul.f32 %v1444, 1.442695
        %v1446 = vpow.pop %v1445
        %v1447 = vsel %vm808, %v1446, 0.0
        %1448 = vadd.xlane.f32.xlu0 %v1447
        %v1449 = vpop.xlane.xlu0 %1448
        %v1450 = vrcp.pop %v1449
        %v1451 = vmul.f32 %v1446, %v1450
        %s1452 = scalar_lea.vmem %s640, 48 [#allocation13]
        %1453 = vst.msk [vmem:[%s1452] sm:$0xff] %vm808, %v1451
        %1454 = vrot.lane.b32.xlu0 %v772, 104
        %v1455 = vpop.permute.xlu0 %1454
        %1456 = vrot.lane.b32.xlu0 %v772, 72
        %v1457 = vpop.permute.xlu0 %1456
        %v1458 = vsel %vm808, %v1455, 0
        %v1460 = vsel %vm808, %v1457, 0
        %1462 = vmatprep.subr.mxu0 0.0
        %1463 = vmatpush1.xpose.msra.mxu0 0.0
        %1464 = vmatprep.subr.mxu0 0.0
        %1465 = vmatpush1.xpose.msra.mxu0 0.0
        %1466 = vmatprep.subr.mxu0 0.0
        %1467 = vmatpush1.xpose.msra.mxu0 0.0
        %1468 = vmatprep.subr.mxu0 0.0
        %1469 = vmatpush1.xpose.msra.mxu0 0.0
        %1470 = vmatprep.subr.mxu0 0.0
        %1471 = vmatpush1.xpose.msra.mxu0 0.0
        %1472 = vmatprep.subr.mxu0 0.0
        %1473 = vmatpush1.xpose.msra.mxu0 0.0
        %1474 = vmatprep.subr.mxu0 0.0
        %1475 = vmatpush1.xpose.msra.mxu0 0.0
        %1476 = vmatprep.subr.mxu0 0.0
        %1477 = vmatpush1.xpose.msra.mxu0 0.0
        %1478 = vmatprep.subr.mxu0 0.0
        %1479 = vmatpush1.xpose.msra.mxu0 0.0
        %1480 = vmatprep.subr.mxu0 0.0
        %1481 = vmatpush1.xpose.msra.mxu0 0.0
        %1482 = vmatprep.subr.mxu0 0.0
        %1483 = vmatpush1.xpose.msra.mxu0 0.0
        %1484 = vmatprep.subr.mxu0 0.0
        %1485 = vmatpush1.xpose.msra.mxu0 0.0
        %1486 = vmatprep.subr.mxu0 0.0
        %1487 = vmatpush1.xpose.msra.mxu0 0.0
        %1488 = vmatprep.subr.mxu0 0.0
        %1489 = vmatpush1.xpose.msra.mxu0 0.0
        %1490 = vmatprep.subr.mxu0 0.0
        %1491 = vmatpush1.xpose.msra.mxu0 0.0
        %1492 = vmatprep.subr.mxu0 0.0
        %1493 = vmatpush1.xpose.msra.mxu0 %v1460
        %1494 = vmatprep.subr.mxu0 0.0
        %1495 = vmatpush2.xpose.msra.mxu0 0.0
        %1496 = vmatprep.subr.mxu0 0.0
        %1497 = vmatpush2.xpose.msra.mxu0 0.0
        %1498 = vmatprep.subr.mxu0 0.0
        %1499 = vmatpush2.xpose.msra.mxu0 0.0
        %1500 = vmatprep.subr.mxu0 0.0
        %1501 = vmatpush2.xpose.msra.mxu0 0.0
        %1502 = vmatprep.subr.mxu0 0.0
        %1503 = vmatpush2.xpose.msra.mxu0 0.0
        %1504 = vmatprep.subr.mxu0 0.0
        %1505 = vmatpush2.xpose.msra.mxu0 0.0
        %1506 = vmatprep.subr.mxu0 0.0
        %1507 = vmatpush2.xpose.msra.mxu0 0.0
        %1508 = vmatprep.subr.mxu0 0.0
        %1509 = vmatpush2.xpose.msra.mxu0 0.0
        %1510 = vmatprep.subr.mxu0 0.0
        %1511 = vmatpush2.xpose.msra.mxu0 0.0
        %1512 = vmatprep.subr.mxu0 0.0
        %1513 = vmatpush2.xpose.msra.mxu0 0.0
        %1514 = vmatprep.subr.mxu0 0.0
        %1515 = vmatpush2.xpose.msra.mxu0 0.0
        %1516 = vmatprep.subr.mxu0 0.0
        %1517 = vmatpush2.xpose.msra.mxu0 0.0
        %1518 = vmatprep.subr.mxu0 0.0
        %1519 = vmatpush2.xpose.msra.mxu0 0.0
        %1520 = vmatprep.subr.mxu0 0.0
        %1521 = vmatpush2.xpose.msra.mxu0 0.0
        %1522 = vmatprep.subr.mxu0 0.0
        %1523 = vmatpush2.xpose.msra.mxu0 0.0
        %1524 = vmatprep.subr.mxu0 0.0
        %1525 = vmatpush2.xpose.msra.mxu0 0.0
        %1526 = vmatprep.mubr.f32.mxu0 0.0
        %1527 = vmatmul.mubr.f32.gmra.mxu0 %v1458
        %v1528 = vpop.f32.mrf.mxu0
        %v1529 = vadd.f32 0.0, %v1528
        %v1530 = vpop.f32.mrf.mxu0
        %1531 = vdwg.mxu0
        %v1532 = vmul.f32 %v1529, 0.35355338
        %v1533 = vsel %vm804, -1e+09, %v1532
        %v1534 = vsel %vm808, %v1533, -inf
        %1535 = vmax.xlane.f32.xlu0 %v1534
        %v1536 = vpop.xlane.xlu0 %1535
        %v1537 = vsub.f32 %v1533, %v1536
        %v1538 = vmul.f32 %v1537, 1.442695
        %v1539 = vpow.pop %v1538
        %v1540 = vsel %vm808, %v1539, 0.0
        %1541 = vadd.xlane.f32.xlu0 %v1540
        %v1542 = vpop.xlane.xlu0 %1541
        %v1543 = vrcp.pop %v1542
        %v1544 = vmul.f32 %v1539, %v1543
        %s1545 = scalar_lea.vmem %s640, 56 [#allocation13]
        %1546 = vst.msk [vmem:[%s1545] sm:$0xff] %vm808, %v1544
        %v1547 = vld [vmem:[#allocation3] sm:$0xff]
        %v1548 = vld [vmem:[#allocation3 + $0x8] sm:$0xff]
        %v1549 = vld [vmem:[%s657] sm:$0xff]
        %v1550 = vld [vmem:[%s657 + $0x8] sm:$0xff]
        %v1551 = vld [vmem:[%s657 + $0x10] sm:$0xff]
        %v1552 = vld [vmem:[%s657 + $0x18] sm:$0xff]
        %v1554 = vsel %vm693, %v1547, 0
        %v1557 = vsel %vm693, %v1548, 0
        %1559 = vmatprep.subr.mxu0 0.0
        %1560 = vmatpush1.msra.mxu0 0.0
        %1561 = vmatprep.subr.mxu0 0.0
        %1562 = vmatpush1.msra.mxu0 0.0
        %1563 = vmatprep.subr.mxu0 0.0
        %1564 = vmatpush1.msra.mxu0 0.0
        %1565 = vmatprep.subr.mxu0 0.0
        %1566 = vmatpush1.msra.mxu0 0.0
        %1567 = vmatprep.subr.mxu0 0.0
        %1568 = vmatpush1.msra.mxu0 0.0
        %1569 = vmatprep.subr.mxu0 0.0
        %1570 = vmatpush1.msra.mxu0 0.0
        %1571 = vmatprep.subr.mxu0 0.0
        %1572 = vmatpush1.msra.mxu0 0.0
        %1573 = vmatprep.subr.mxu0 0.0
        %1574 = vmatpush1.msra.mxu0 0.0
        %1575 = vmatprep.subr.mxu0 0.0
        %1576 = vmatpush1.msra.mxu0 0.0
        %1577 = vmatprep.subr.mxu0 0.0
        %1578 = vmatpush1.msra.mxu0 0.0
        %1579 = vmatprep.subr.mxu0 0.0
        %1580 = vmatpush1.msra.mxu0 0.0
        %1581 = vmatprep.subr.mxu0 0.0
        %1582 = vmatpush1.msra.mxu0 0.0
        %1583 = vmatprep.subr.mxu0 0.0
        %1584 = vmatpush1.msra.mxu0 %v1552
        %1585 = vmatprep.subr.mxu0 0.0
        %1586 = vmatpush1.msra.mxu0 %v1551
        %1587 = vmatprep.subr.mxu0 0.0
        %1588 = vmatpush1.msra.mxu0 %v1550
        %1589 = vmatprep.subr.mxu0 0.0
        %1590 = vmatpush1.msra.mxu0 %v1549
        %1591 = vmatprep.subr.mxu0 0.0
        %1592 = vmatpush2.msra.mxu0 0.0
        %1593 = vmatprep.subr.mxu0 0.0
        %1594 = vmatpush2.msra.mxu0 0.0
        %1595 = vmatprep.subr.mxu0 0.0
        %1596 = vmatpush2.msra.mxu0 0.0
        %1597 = vmatprep.subr.mxu0 0.0
        %1598 = vmatpush2.msra.mxu0 0.0
        %1599 = vmatprep.subr.mxu0 0.0
        %1600 = vmatpush2.msra.mxu0 0.0
        %1601 = vmatprep.subr.mxu0 0.0
        %1602 = vmatpush2.msra.mxu0 0.0
        %1603 = vmatprep.subr.mxu0 0.0
        %1604 = vmatpush2.msra.mxu0 0.0
        %1605 = vmatprep.subr.mxu0 0.0
        %1606 = vmatpush2.msra.mxu0 0.0
        %1607 = vmatprep.subr.mxu0 0.0
        %1608 = vmatpush2.msra.mxu0 0.0
        %1609 = vmatprep.subr.mxu0 0.0
        %1610 = vmatpush2.msra.mxu0 0.0
        %1611 = vmatprep.subr.mxu0 0.0
        %1612 = vmatpush2.msra.mxu0 0.0
        %1613 = vmatprep.subr.mxu0 0.0
        %1614 = vmatpush2.msra.mxu0 0.0
        %1615 = vmatprep.subr.mxu0 0.0
        %1616 = vmatpush2.msra.mxu0 0.0
        %1617 = vmatprep.subr.mxu0 0.0
        %1618 = vmatpush2.msra.mxu0 0.0
        %1619 = vmatprep.subr.mxu0 0.0
        %1620 = vmatpush2.msra.mxu0 0.0
        %1621 = vmatprep.subr.mxu0 0.0
        %1622 = vmatpush2.msra.mxu0 0.0
        %1623 = vmatprep.mubr.f32.mxu0 0.0
        %1624 = vmatmul.mubr.f32.gmra.mxu0 %v1554
        %v1625 = vpop.f32.mrf.mxu0
        %v1626 = vadd.f32 0.0, %v1625
        %v1627 = vpop.f32.mrf.mxu0
        %1628 = vmatprep.mubr.f32.mxu0 0.0
        %1629 = vmatmul.mubr.f32.gmra.mxu0 %v1557
        %v1630 = vpop.f32.mrf.mxu0
        %v1631 = vadd.f32 0.0, %v1630
        %v1632 = vpop.f32.mrf.mxu0
        %1633 = vdwg.mxu0
        %v1634 = vadd.f32 %v683, %v1626
        %v1635 = vadd.f32 %v684, %v1631
        %v1636 = vsel %vm693, %v1634, 0.0
        %1637 = vadd.xlane.f32.xlu0 %v1636
        %v1638 = vpop.xlane.xlu0 %1637
        %v1639 = vsel %vm693, %v1635, 0.0
        %1640 = vadd.xlane.f32.xlu0 %v1639
        %v1641 = vpop.xlane.xlu0 %1640
        %v1642 = vrcp.pop 32.0
        %v1643 = vmul.f32 %v1638, %v1642
        %v1644 = vmul.f32 %v1641, %v1642
        %v1645 = vsub.f32 %v1634, %v1643
        %v1646 = vsub.f32 %v1635, %v1644
        %v1647 = vmul.f32 %v1645, %v1645
        %v1648 = vmul.f32 %v1646, %v1646
        %v1649 = vsel %vm693, %v1647, 0.0
        %1650 = vadd.xlane.f32.xlu0 %v1649
        %v1651 = vpop.xlane.xlu0 %1650
        %v1652 = vsel %vm693, %v1648, 0.0
        %1653 = vadd.xlane.f32.xlu0 %v1652
        %v1654 = vpop.xlane.xlu0 %1653
        %v1655 = vmul.f32 %v1651, %v1642
        %v1656 = vmul.f32 %v1654, %v1642
        %v1657 = vadd.f32 %v1655, 1e-05
        %v1658 = vadd.f32 %v1656, 1e-05
        %v1659 = vrsqrt.pop %v1657
        %v1660 = vrsqrt.pop %v1658
        %v1661 = vmul.f32 %v1645, %v1659
        %v1662 = vmul.f32 %v1646, %v1660
        %v1663 = vld [vmem:[%s662] sm:$0xff]
        %v1664 = vld [vmem:[%s662 + $0x8] sm:$0xff]
        %v1665 = vld [vmem:[%s662 + $0x10] sm:$0xff]
        %v1666 = vld [vmem:[%s662 + $0x18] sm:$0xff]
        %v1668 = vsel %vm693, %v1661, 0
        %v1671 = vsel %vm693, %v1662, 0
        %1673 = vmatprep.subr.mxu0 0.0
        %1674 = vmatpush1.msra.mxu0 0.0
        %1675 = vmatprep.subr.mxu0 0.0
        %1676 = vmatpush1.msra.mxu0 0.0
        %1677 = vmatprep.subr.mxu0 0.0
        %1678 = vmatpush1.msra.mxu0 0.0
        %1679 = vmatprep.subr.mxu0 0.0
        %1680 = vmatpush1.msra.mxu0 0.0
        %1681 = vmatprep.subr.mxu0 0.0
        %1682 = vmatpush1.msra.mxu0 0.0
        %1683 = vmatprep.subr.mxu0 0.0
        %1684 = vmatpush1.msra.mxu0 0.0
        %1685 = vmatprep.subr.mxu0 0.0
        %1686 = vmatpush1.msra.mxu0 0.0
        %1687 = vmatprep.subr.mxu0 0.0
        %1688 = vmatpush1.msra.mxu0 0.0
        %1689 = vmatprep.subr.mxu0 0.0
        %1690 = vmatpush1.msra.mxu0 0.0
        %1691 = vmatprep.subr.mxu0 0.0
        %1692 = vmatpush1.msra.mxu0 0.0
        %1693 = vmatprep.subr.mxu0 0.0
        %1694 = vmatpush1.msra.mxu0 0.0
        %1695 = vmatprep.subr.mxu0 0.0
        %1696 = vmatpush1.msra.mxu0 0.0
        %1697 = vmatprep.subr.mxu0 0.0
        %1698 = vmatpush1.msra.mxu0 %v1666
        %1699 = vmatprep.subr.mxu0 0.0
        %1700 = vmatpush1.msra.mxu0 %v1665
        %1701 = vmatprep.subr.mxu0 0.0
        %1702 = vmatpush1.msra.mxu0 %v1664
        %1703 = vmatprep.subr.mxu0 0.0
        %1704 = vmatpush1.msra.mxu0 %v1663
        %1705 = vmatprep.subr.mxu0 0.0
        %1706 = vmatpush2.msra.mxu0 0.0
        %1707 = vmatprep.subr.mxu0 0.0
        %1708 = vmatpush2.msra.mxu0 0.0
        %1709 = vmatprep.subr.mxu0 0.0
        %1710 = vmatpush2.msra.mxu0 0.0
        %1711 = vmatprep.subr.mxu0 0.0
        %1712 = vmatpush2.msra.mxu0 0.0
        %1713 = vmatprep.subr.mxu0 0.0
        %1714 = vmatpush2.msra.mxu0 0.0
        %1715 = vmatprep.subr.mxu0 0.0
        %1716 = vmatpush2.msra.mxu0 0.0
        %1717 = vmatprep.subr.mxu0 0.0
        %1718 = vmatpush2.msra.mxu0 0.0
        %1719 = vmatprep.subr.mxu0 0.0
        %1720 = vmatpush2.msra.mxu0 0.0
        %1721 = vmatprep.subr.mxu0 0.0
        %1722 = vmatpush2.msra.mxu0 0.0
        %1723 = vmatprep.subr.mxu0 0.0
        %1724 = vmatpush2.msra.mxu0 0.0
        %1725 = vmatprep.subr.mxu0 0.0
        %1726 = vmatpush2.msra.mxu0 0.0
        %1727 = vmatprep.subr.mxu0 0.0
        %1728 = vmatpush2.msra.mxu0 0.0
        %1729 = vmatprep.subr.mxu0 0.0
        %1730 = vmatpush2.msra.mxu0 0.0
        %1731 = vmatprep.subr.mxu0 0.0
        %1732 = vmatpush2.msra.mxu0 0.0
        %1733 = vmatprep.subr.mxu0 0.0
        %1734 = vmatpush2.msra.mxu0 0.0
        %1735 = vmatprep.subr.mxu0 0.0
        %1736 = vmatpush2.msra.mxu0 0.0
        %1737 = vmatprep.mubr.f32.mxu0 0.0
        %1738 = vmatmul.mubr.f32.gmra.mxu0 %v1668
        %v1739 = vpop.f32.mrf.mxu0
        %v1740 = vadd.f32 0.0, %v1739
        %v1741 = vpop.f32.mrf.mxu0
        %1742 = vmatprep.mubr.f32.mxu0 0.0
        %1743 = vmatmul.mubr.f32.gmra.mxu0 %v1671
        %v1744 = vpop.f32.mrf.mxu0
        %v1745 = vadd.f32 0.0, %v1744
        %v1746 = vpop.f32.mrf.mxu0
        %1747 = vdwg.mxu0
        %v1748 = vld [vmem:[%s546] sm:$0xff]
        %v1749 = vld [vmem:[%s546 + $0x8] sm:$0xff]
        %v1750 = vld [vmem:[%s546 + $0x10] sm:$0xff]
        %v1751 = vld [vmem:[%s546 + $0x18] sm:$0xff]
        %v1753 = vsel %vm693, %v685, 0
        %v1756 = vsel %vm693, %v686, 0
        %v1759 = vsel %vm693, %v687, 0
        %v1762 = vsel %vm693, %v688, 0
        %1764 = vmatprep.subr.mxu0 0.0
        %1765 = vmatpush1.msra.mxu0 0.0
        %1766 = vmatprep.subr.mxu0 0.0
        %1767 = vmatpush1.msra.mxu0 0.0
        %1768 = vmatprep.subr.mxu0 0.0
        %1769 = vmatpush1.msra.mxu0 0.0
        %1770 = vmatprep.subr.mxu0 0.0
        %1771 = vmatpush1.msra.mxu0 0.0
        %1772 = vmatprep.subr.mxu0 0.0
        %1773 = vmatpush1.msra.mxu0 0.0
        %1774 = vmatprep.subr.mxu0 0.0
        %1775 = vmatpush1.msra.mxu0 0.0
        %1776 = vmatprep.subr.mxu0 0.0
        %1777 = vmatpush1.msra.mxu0 0.0
        %1778 = vmatprep.subr.mxu0 0.0
        %1779 = vmatpush1.msra.mxu0 0.0
        %1780 = vmatprep.subr.mxu0 0.0
        %1781 = vmatpush1.msra.mxu0 0.0
        %1782 = vmatprep.subr.mxu0 0.0
        %1783 = vmatpush1.msra.mxu0 0.0
        %1784 = vmatprep.subr.mxu0 0.0
        %1785 = vmatpush1.msra.mxu0 0.0
        %1786 = vmatprep.subr.mxu0 0.0
        %1787 = vmatpush1.msra.mxu0 0.0
        %1788 = vmatprep.subr.mxu0 0.0
        %1789 = vmatpush1.msra.mxu0 %v1751
        %1790 = vmatprep.subr.mxu0 0.0
        %1791 = vmatpush1.msra.mxu0 %v1750
        %1792 = vmatprep.subr.mxu0 0.0
        %1793 = vmatpush1.msra.mxu0 %v1749
        %1794 = vmatprep.subr.mxu0 0.0
        %1795 = vmatpush1.msra.mxu0 %v1748
        %1796 = vmatprep.subr.mxu0 0.0
        %1797 = vmatpush2.msra.mxu0 0.0
        %1798 = vmatprep.subr.mxu0 0.0
        %1799 = vmatpush2.msra.mxu0 0.0
        %1800 = vmatprep.subr.mxu0 0.0
        %1801 = vmatpush2.msra.mxu0 0.0
        %1802 = vmatprep.subr.mxu0 0.0
        %1803 = vmatpush2.msra.mxu0 0.0
        %1804 = vmatprep.subr.mxu0 0.0
        %1805 = vmatpush2.msra.mxu0 0.0
        %1806 = vmatprep.subr.mxu0 0.0
        %1807 = vmatpush2.msra.mxu0 0.0
        %1808 = vmatprep.subr.mxu0 0.0
        %1809 = vmatpush2.msra.mxu0 0.0
        %1810 = vmatprep.subr.mxu0 0.0
        %1811 = vmatpush2.msra.mxu0 0.0
        %1812 = vmatprep.subr.mxu0 0.0
        %1813 = vmatpush2.msra.mxu0 0.0
        %1814 = vmatprep.subr.mxu0 0.0
        %1815 = vmatpush2.msra.mxu0 0.0
        %1816 = vmatprep.subr.mxu0 0.0
        %1817 = vmatpush2.msra.mxu0 0.0
        %1818 = vmatprep.subr.mxu0 0.0
        %1819 = vmatpush2.msra.mxu0 0.0
        %1820 = vmatprep.subr.mxu0 0.0
        %1821 = vmatpush2.msra.mxu0 0.0
        %1822 = vmatprep.subr.mxu0 0.0
        %1823 = vmatpush2.msra.mxu0 0.0
        %1824 = vmatprep.subr.mxu0 0.0
        %1825 = vmatpush2.msra.mxu0 0.0
        %1826 = vmatprep.subr.mxu0 0.0
        %1827 = vmatpush2.msra.mxu0 0.0
        %1828 = vmatprep.mubr.f32.mxu0 0.0
        %1829 = vmatmul.mubr.f32.gmra.mxu0 %v1753
        %v1830 = vpop.f32.mrf.mxu0
        %v1831 = vadd.f32 0.0, %v1830
        %v1832 = vpop.f32.mrf.mxu0
        %1833 = vmatprep.mubr.f32.mxu0 0.0
        %1834 = vmatmul.mubr.f32.gmra.mxu0 %v1756
        %v1835 = vpop.f32.mrf.mxu0
        %v1836 = vadd.f32 0.0, %v1835
        %v1837 = vpop.f32.mrf.mxu0
        %1838 = vmatprep.mubr.f32.mxu0 0.0
        %1839 = vmatmul.mubr.f32.gmra.mxu0 %v1759
        %v1840 = vpop.f32.mrf.mxu0
        %v1841 = vadd.f32 0.0, %v1840
        %v1842 = vpop.f32.mrf.mxu0
        %1843 = vmatprep.mubr.f32.mxu0 0.0
        %1844 = vmatmul.mubr.f32.gmra.mxu0 %v1762
        %v1845 = vpop.f32.mrf.mxu0
        %v1846 = vadd.f32 0.0, %v1845
        %v1847 = vpop.f32.mrf.mxu0
        %1848 = vdwg.mxu0
        %vm1849 = vcmask 523520
        %v1850 = vsel %vm1849, %v1831, 0.0
        %v1851 = vsel %vm1849, %v1836, 0.0
        %v1852 = vadd.f32 %v1850, %v1851
        %v1853 = vrot.slane %v1852, 4
        %v1854 = vadd.f32 %v1852, %v1853
        %v1855 = vrot.slane %v1854, 2
        %v1856 = vadd.f32 %v1854, %v1855
        %v1857 = vrot.slane %v1856, 1
        %v1858 = vadd.f32 %v1856, %v1857
        %1860 = vrot.lane.b32.xlu0 %v1858, 96
        %v1861 = vpop.permute.xlu0 %1860
        %1863 = vst.msk [vmem:[#allocation3] sm:$0xff] %vm693, %v1861
        %v1864 = vsel %vm1849, %v1841, 0.0
        %v1865 = vsel %vm1849, %v1846, 0.0
        %v1866 = vadd.f32 %v1864, %v1865
        %v1867 = vrot.slane %v1866, 4
        %v1868 = vadd.f32 %v1866, %v1867
        %v1869 = vrot.slane %v1868, 2
        %v1870 = vadd.f32 %v1868, %v1869
        %v1871 = vrot.slane %v1870, 1
        %v1872 = vadd.f32 %v1870, %v1871
        %1874 = vrot.lane.b32.xlu0 %v1872, 96
        %v1875 = vpop.permute.xlu0 %1874
        %1877 = vst.msk [vmem:[#allocation3 + $0x8] sm:$0xff] %vm693, %v1875
        %v1879 = vsel %vm808, %v1740, 0
        %v1882 = vsel %vm808, %v1831, 0
        %v1885 = vsel %vm808, %v1836, 0
        %1887 = vmatprep.subr.mxu0 0.0
        %1888 = vmatpush1.xpose.msra.mxu0 0.0
        %1889 = vmatprep.subr.mxu0 0.0
        %1890 = vmatpush1.xpose.msra.mxu0 0.0
        %1891 = vmatprep.subr.mxu0 0.0
        %1892 = vmatpush1.xpose.msra.mxu0 0.0
        %1893 = vmatprep.subr.mxu0 0.0
        %1894 = vmatpush1.xpose.msra.mxu0 0.0
        %1895 = vmatprep.subr.mxu0 0.0
        %1896 = vmatpush1.xpose.msra.mxu0 0.0
        %1897 = vmatprep.subr.mxu0 0.0
        %1898 = vmatpush1.xpose.msra.mxu0 0.0
        %1899 = vmatprep.subr.mxu0 0.0
        %1900 = vmatpush1.xpose.msra.mxu0 0.0
        %1901 = vmatprep.subr.mxu0 0.0
        %1902 = vmatpush1.xpose.msra.mxu0 0.0
        %1903 = vmatprep.subr.mxu0 0.0
        %1904 = vmatpush1.xpose.msra.mxu0 0.0
        %1905 = vmatprep.subr.mxu0 0.0
        %1906 = vmatpush1.xpose.msra.mxu0 0.0
        %1907 = vmatprep.subr.mxu0 0.0
        %1908 = vmatpush1.xpose.msra.mxu0 0.0
        %1909 = vmatprep.subr.mxu0 0.0
        %1910 = vmatpush1.xpose.msra.mxu0 0.0
        %1911 = vmatprep.subr.mxu0 0.0
        %1912 = vmatpush1.xpose.msra.mxu0 0.0
        %1913 = vmatprep.subr.mxu0 0.0
        %1914 = vmatpush1.xpose.msra.mxu0 0.0
        %1915 = vmatprep.subr.mxu0 0.0
        %1916 = vmatpush1.xpose.msra.mxu0 %v1885
        %1917 = vmatprep.subr.mxu0 0.0
        %1918 = vmatpush1.xpose.msra.mxu0 %v1882
        %1919 = vmatprep.subr.mxu0 0.0
        %1920 = vmatpush2.xpose.msra.mxu0 0.0
        %1921 = vmatprep.subr.mxu0 0.0
        %1922 = vmatpush2.xpose.msra.mxu0 0.0
        %1923 = vmatprep.subr.mxu0 0.0
        %1924 = vmatpush2.xpose.msra.mxu0 0.0
        %1925 = vmatprep.subr.mxu0 0.0
        %1926 = vmatpush2.xpose.msra.mxu0 0.0
        %1927 = vmatprep.subr.mxu0 0.0
        %1928 = vmatpush2.xpose.msra.mxu0 0.0
        %1929 = vmatprep.subr.mxu0 0.0
        %1930 = vmatpush2.xpose.msra.mxu0 0.0
        %1931 = vmatprep.subr.mxu0 0.0
        %1932 = vmatpush2.xpose.msra.mxu0 0.0
        %1933 = vmatprep.subr.mxu0 0.0
        %1934 = vmatpush2.xpose.msra.mxu0 0.0
        %1935 = vmatprep.subr.mxu0 0.0
        %1936 = vmatpush2.xpose.msra.mxu0 0.0
        %1937 = vmatprep.subr.mxu0 0.0
        %1938 = vmatpush2.xpose.msra.mxu0 0.0
        %1939 = vmatprep.subr.mxu0 0.0
        %1940 = vmatpush2.xpose.msra.mxu0 0.0
        %1941 = vmatprep.subr.mxu0 0.0
        %1942 = vmatpush2.xpose.msra.mxu0 0.0
        %1943 = vmatprep.subr.mxu0 0.0
        %1944 = vmatpush2.xpose.msra.mxu0 0.0
        %1945 = vmatprep.subr.mxu0 0.0
        %1946 = vmatpush2.xpose.msra.mxu0 0.0
        %1947 = vmatprep.subr.mxu0 0.0
        %1948 = vmatpush2.xpose.msra.mxu0 0.0
        %1949 = vmatprep.subr.mxu0 0.0
        %1950 = vmatpush2.xpose.msra.mxu0 0.0
        %1951 = vmatprep.mubr.f32.mxu0 0.0
        %1952 = vmatmul.mubr.f32.gmra.mxu0 %v1879
        %v1953 = vpop.f32.mrf.mxu0
        %v1954 = vadd.f32 0.0, %v1953
        %v1955 = vpop.f32.mrf.mxu0
        %1956 = vdwg.mxu0
        %v1957 = vmul.f32 %v1954, 0.35355338
        %vm1958 = vcmask 130048
        %v1959 = vsel %vm1958, %v1957, -inf
        %1960 = vmax.xlane.f32.xlu0 %v1959
        %v1961 = vpop.xlane.xlu0 %1960
        %v1962 = vsub.f32 %v1957, %v1961
        %v1963 = vmul.f32 %v1962, 1.442695
        %v1964 = vpow.pop %v1963
        %v1965 = vsel %vm1958, %v1964, 0.0
        %1966 = vadd.xlane.f32.xlu0 %v1965
        %v1967 = vpop.xlane.xlu0 %1966
        %v1968 = vrcp.pop %v1967
        %v1969 = vmul.f32 %v1964, %v1968
        %1970 = vst.msk [vmem:[%s647] sm:$0xff] %vm1958, %v1969
        %1971 = vrot.lane.b32.xlu0 %v1740, 120
        %v1972 = vpop.permute.xlu0 %1971
        %1973 = vrot.lane.b32.xlu0 %v1831, 120
        %v1974 = vpop.permute.xlu0 %1973
        %1975 = vrot.lane.b32.xlu0 %v1836, 120
        %v1976 = vpop.permute.xlu0 %1975
        %v1977 = vsel %vm808, %v1972, 0
        %v1979 = vsel %vm808, %v1974, 0
        %v1981 = vsel %vm808, %v1976, 0
        %1983 = vmatprep.subr.mxu0 0.0
        %1984 = vmatpush1.xpose.msra.mxu0 0.0
        %1985 = vmatprep.subr.mxu0 0.0
        %1986 = vmatpush1.xpose.msra.mxu0 0.0
        %1987 = vmatprep.subr.mxu0 0.0
        %1988 = vmatpush1.xpose.msra.mxu0 0.0
        %1989 = vmatprep.subr.mxu0 0.0
        %1990 = vmatpush1.xpose.msra.mxu0 0.0
        %1991 = vmatprep.subr.mxu0 0.0
        %1992 = vmatpush1.xpose.msra.mxu0 0.0
        %1993 = vmatprep.subr.mxu0 0.0
        %1994 = vmatpush1.xpose.msra.mxu0 0.0
        %1995 = vmatprep.subr.mxu0 0.0
        %1996 = vmatpush1.xpose.msra.mxu0 0.0
        %1997 = vmatprep.subr.mxu0 0.0
        %1998 = vmatpush1.xpose.msra.mxu0 0.0
        %1999 = vmatprep.subr.mxu0 0.0
        %2000 = vmatpush1.xpose.msra.mxu0 0.0
        %2001 = vmatprep.subr.mxu0 0.0
        %2002 = vmatpush1.xpose.msra.mxu0 0.0
        %2003 = vmatprep.subr.mxu0 0.0
        %2004 = vmatpush1.xpose.msra.mxu0 0.0
        %2005 = vmatprep.subr.mxu0 0.0
        %2006 = vmatpush1.xpose.msra.mxu0 0.0
        %2007 = vmatprep.subr.mxu0 0.0
        %2008 = vmatpush1.xpose.msra.mxu0 0.0
        %2009 = vmatprep.subr.mxu0 0.0
        %2010 = vmatpush1.xpose.msra.mxu0 0.0
        %2011 = vmatprep.subr.mxu0 0.0
        %2012 = vmatpush1.xpose.msra.mxu0 %v1981
        %2013 = vmatprep.subr.mxu0 0.0
        %2014 = vmatpush1.xpose.msra.mxu0 %v1979
        %2015 = vmatprep.subr.mxu0 0.0
        %2016 = vmatpush2.xpose.msra.mxu0 0.0
        %2017 = vmatprep.subr.mxu0 0.0
        %2018 = vmatpush2.xpose.msra.mxu0 0.0
        %2019 = vmatprep.subr.mxu0 0.0
        %2020 = vmatpush2.xpose.msra.mxu0 0.0
        %2021 = vmatprep.subr.mxu0 0.0
        %2022 = vmatpush2.xpose.msra.mxu0 0.0
        %2023 = vmatprep.subr.mxu0 0.0
        %2024 = vmatpush2.xpose.msra.mxu0 0.0
        %2025 = vmatprep.subr.mxu0 0.0
        %2026 = vmatpush2.xpose.msra.mxu0 0.0
        %2027 = vmatprep.subr.mxu0 0.0
        %2028 = vmatpush2.xpose.msra.mxu0 0.0
        %2029 = vmatprep.subr.mxu0 0.0
        %2030 = vmatpush2.xpose.msra.mxu0 0.0
        %2031 = vmatprep.subr.mxu0 0.0
        %2032 = vmatpush2.xpose.msra.mxu0 0.0
        %2033 = vmatprep.subr.mxu0 0.0
        %2034 = vmatpush2.xpose.msra.mxu0 0.0
        %2035 = vmatprep.subr.mxu0 0.0
        %2036 = vmatpush2.xpose.msra.mxu0 0.0
        %2037 = vmatprep.subr.mxu0 0.0
        %2038 = vmatpush2.xpose.msra.mxu0 0.0
        %2039 = vmatprep.subr.mxu0 0.0
        %2040 = vmatpush2.xpose.msra.mxu0 0.0
        %2041 = vmatprep.subr.mxu0 0.0
        %2042 = vmatpush2.xpose.msra.mxu0 0.0
        %2043 = vmatprep.subr.mxu0 0.0
        %2044 = vmatpush2.xpose.msra.mxu0 0.0
        %2045 = vmatprep.subr.mxu0 0.0
        %2046 = vmatpush2.xpose.msra.mxu0 0.0
        %2047 = vmatprep.mubr.f32.mxu0 0.0
        %2048 = vmatmul.mubr.f32.gmra.mxu0 %v1977
        %v2049 = vpop.f32.mrf.mxu0
        %v2050 = vadd.f32 0.0, %v2049
        %v2051 = vpop.f32.mrf.mxu0
        %2052 = vdwg.mxu0
        %v2053 = vmul.f32 %v2050, 0.35355338
        %v2054 = vsel %vm1958, %v2053, -inf
        %2055 = vmax.xlane.f32.xlu0 %v2054
        %v2056 = vpop.xlane.xlu0 %2055
        %v2057 = vsub.f32 %v2053, %v2056
        %v2058 = vmul.f32 %v2057, 1.442695
        %v2059 = vpow.pop %v2058
        %v2060 = vsel %vm1958, %v2059, 0.0
        %2061 = vadd.xlane.f32.xlu0 %v2060
        %v2062 = vpop.xlane.xlu0 %2061
        %v2063 = vrcp.pop %v2062
        %v2064 = vmul.f32 %v2059, %v2063
        %s2065 = scalar_lea.vmem %s647, 8 [#allocation15]
        %2066 = vst.msk [vmem:[%s2065] sm:$0xff] %vm1958, %v2064
        %2067 = vrot.lane.b32.xlu0 %v1740, 112
        %v2068 = vpop.permute.xlu0 %2067
        %2069 = vrot.lane.b32.xlu0 %v1831, 112
        %v2070 = vpop.permute.xlu0 %2069
        %2071 = vrot.lane.b32.xlu0 %v1836, 112
        %v2072 = vpop.permute.xlu0 %2071
        %v2073 = vsel %vm808, %v2068, 0
        %v2075 = vsel %vm808, %v2070, 0
        %v2077 = vsel %vm808, %v2072, 0
        %2079 = vmatprep.subr.mxu0 0.0
        %2080 = vmatpush1.xpose.msra.mxu0 0.0
        %2081 = vmatprep.subr.mxu0 0.0
        %2082 = vmatpush1.xpose.msra.mxu0 0.0
        %2083 = vmatprep.subr.mxu0 0.0
        %2084 = vmatpush1.xpose.msra.mxu0 0.0
        %2085 = vmatprep.subr.mxu0 0.0
        %2086 = vmatpush1.xpose.msra.mxu0 0.0
        %2087 = vmatprep.subr.mxu0 0.0
        %2088 = vmatpush1.xpose.msra.mxu0 0.0
        %2089 = vmatprep.subr.mxu0 0.0
        %2090 = vmatpush1.xpose.msra.mxu0 0.0
        %2091 = vmatprep.subr.mxu0 0.0
        %2092 = vmatpush1.xpose.msra.mxu0 0.0
        %2093 = vmatprep.subr.mxu0 0.0
        %2094 = vmatpush1.xpose.msra.mxu0 0.0
        %2095 = vmatprep.subr.mxu0 0.0
        %2096 = vmatpush1.xpose.msra.mxu0 0.0
        %2097 = vmatprep.subr.mxu0 0.0
        %2098 = vmatpush1.xpose.msra.mxu0 0.0
        %2099 = vmatprep.subr.mxu0 0.0
        %2100 = vmatpush1.xpose.msra.mxu0 0.0
        %2101 = vmatprep.subr.mxu0 0.0
        %2102 = vmatpush1.xpose.msra.mxu0 0.0
        %2103 = vmatprep.subr.mxu0 0.0
        %2104 = vmatpush1.xpose.msra.mxu0 0.0
        %2105 = vmatprep.subr.mxu0 0.0
        %2106 = vmatpush1.xpose.msra.mxu0 0.0
        %2107 = vmatprep.subr.mxu0 0.0
        %2108 = vmatpush1.xpose.msra.mxu0 %v2077
        %2109 = vmatprep.subr.mxu0 0.0
        %2110 = vmatpush1.xpose.msra.mxu0 %v2075
        %2111 = vmatprep.subr.mxu0 0.0
        %2112 = vmatpush2.xpose.msra.mxu0 0.0
        %2113 = vmatprep.subr.mxu0 0.0
        %2114 = vmatpush2.xpose.msra.mxu0 0.0
        %2115 = vmatprep.subr.mxu0 0.0
        %2116 = vmatpush2.xpose.msra.mxu0 0.0
        %2117 = vmatprep.subr.mxu0 0.0
        %2118 = vmatpush2.xpose.msra.mxu0 0.0
        %2119 = vmatprep.subr.mxu0 0.0
        %2120 = vmatpush2.xpose.msra.mxu0 0.0
        %2121 = vmatprep.subr.mxu0 0.0
        %2122 = vmatpush2.xpose.msra.mxu0 0.0
        %2123 = vmatprep.subr.mxu0 0.0
        %2124 = vmatpush2.xpose.msra.mxu0 0.0
        %2125 = vmatprep.subr.mxu0 0.0
        %2126 = vmatpush2.xpose.msra.mxu0 0.0
        %2127 = vmatprep.subr.mxu0 0.0
        %2128 = vmatpush2.xpose.msra.mxu0 0.0
        %2129 = vmatprep.subr.mxu0 0.0
        %2130 = vmatpush2.xpose.msra.mxu0 0.0
        %2131 = vmatprep.subr.mxu0 0.0
        %2132 = vmatpush2.xpose.msra.mxu0 0.0
        %2133 = vmatprep.subr.mxu0 0.0
        %2134 = vmatpush2.xpose.msra.mxu0 0.0
        %2135 = vmatprep.subr.mxu0 0.0
        %2136 = vmatpush2.xpose.msra.mxu0 0.0
        %2137 = vmatprep.subr.mxu0 0.0
        %2138 = vmatpush2.xpose.msra.mxu0 0.0
        %2139 = vmatprep.subr.mxu0 0.0
        %2140 = vmatpush2.xpose.msra.mxu0 0.0
        %2141 = vmatprep.subr.mxu0 0.0
        %2142 = vmatpush2.xpose.msra.mxu0 0.0
        %2143 = vmatprep.mubr.f32.mxu0 0.0
        %2144 = vmatmul.mubr.f32.gmra.mxu0 %v2073
        %v2145 = vpop.f32.mrf.mxu0
        %v2146 = vadd.f32 0.0, %v2145
        %v2147 = vpop.f32.mrf.mxu0
        %2148 = vdwg.mxu0
        %v2149 = vmul.f32 %v2146, 0.35355338
        %v2150 = vsel %vm1958, %v2149, -inf
        %2151 = vmax.xlane.f32.xlu0 %v2150
        %v2152 = vpop.xlane.xlu0 %2151
        %v2153 = vsub.f32 %v2149, %v2152
        %v2154 = vmul.f32 %v2153, 1.442695
        %v2155 = vpow.pop %v2154
        %v2156 = vsel %vm1958, %v2155, 0.0
        %2157 = vadd.xlane.f32.xlu0 %v2156
        %v2158 = vpop.xlane.xlu0 %2157
        %v2159 = vrcp.pop %v2158
        %v2160 = vmul.f32 %v2155, %v2159
        %s2161 = scalar_lea.vmem %s647, 16 [#allocation15]
        %2162 = vst.msk [vmem:[%s2161] sm:$0xff] %vm1958, %v2160
        %2163 = vrot.lane.b32.xlu0 %v1740, 104
        %v2164 = vpop.permute.xlu0 %2163
        %2165 = vrot.lane.b32.xlu0 %v1831, 104
        %v2166 = vpop.permute.xlu0 %2165
        %2167 = vrot.lane.b32.xlu0 %v1836, 104
        %v2168 = vpop.permute.xlu0 %2167
        %v2169 = vsel %vm808, %v2164, 0
        %v2171 = vsel %vm808, %v2166, 0
        %v2173 = vsel %vm808, %v2168, 0
        %2175 = vmatprep.subr.mxu0 0.0
        %2176 = vmatpush1.xpose.msra.mxu0 0.0
        %2177 = vmatprep.subr.mxu0 0.0
        %2178 = vmatpush1.xpose.msra.mxu0 0.0
        %2179 = vmatprep.subr.mxu0 0.0
        %2180 = vmatpush1.xpose.msra.mxu0 0.0
        %2181 = vmatprep.subr.mxu0 0.0
        %2182 = vmatpush1.xpose.msra.mxu0 0.0
        %2183 = vmatprep.subr.mxu0 0.0
        %2184 = vmatpush1.xpose.msra.mxu0 0.0
        %2185 = vmatprep.subr.mxu0 0.0
        %2186 = vmatpush1.xpose.msra.mxu0 0.0
        %2187 = vmatprep.subr.mxu0 0.0
        %2188 = vmatpush1.xpose.msra.mxu0 0.0
        %2189 = vmatprep.subr.mxu0 0.0
        %2190 = vmatpush1.xpose.msra.mxu0 0.0
        %2191 = vmatprep.subr.mxu0 0.0
        %2192 = vmatpush1.xpose.msra.mxu0 0.0
        %2193 = vmatprep.subr.mxu0 0.0
        %2194 = vmatpush1.xpose.msra.mxu0 0.0
        %2195 = vmatprep.subr.mxu0 0.0
        %2196 = vmatpush1.xpose.msra.mxu0 0.0
        %2197 = vmatprep.subr.mxu0 0.0
        %2198 = vmatpush1.xpose.msra.mxu0 0.0
        %2199 = vmatprep.subr.mxu0 0.0
        %2200 = vmatpush1.xpose.msra.mxu0 0.0
        %2201 = vmatprep.subr.mxu0 0.0
        %2202 = vmatpush1.xpose.msra.mxu0 0.0
        %2203 = vmatprep.subr.mxu0 0.0
        %2204 = vmatpush1.xpose.msra.mxu0 %v2173
        %2205 = vmatprep.subr.mxu0 0.0
        %2206 = vmatpush1.xpose.msra.mxu0 %v2171
        %2207 = vmatprep.subr.mxu0 0.0
        %2208 = vmatpush2.xpose.msra.mxu0 0.0
        %2209 = vmatprep.subr.mxu0 0.0
        %2210 = vmatpush2.xpose.msra.mxu0 0.0
        %2211 = vmatprep.subr.mxu0 0.0
        %2212 = vmatpush2.xpose.msra.mxu0 0.0
        %2213 = vmatprep.subr.mxu0 0.0
        %2214 = vmatpush2.xpose.msra.mxu0 0.0
        %2215 = vmatprep.subr.mxu0 0.0
        %2216 = vmatpush2.xpose.msra.mxu0 0.0
        %2217 = vmatprep.subr.mxu0 0.0
        %2218 = vmatpush2.xpose.msra.mxu0 0.0
        %2219 = vmatprep.subr.mxu0 0.0
        %2220 = vmatpush2.xpose.msra.mxu0 0.0
        %2221 = vmatprep.subr.mxu0 0.0
        %2222 = vmatpush2.xpose.msra.mxu0 0.0
        %2223 = vmatprep.subr.mxu0 0.0
        %2224 = vmatpush2.xpose.msra.mxu0 0.0
        %2225 = vmatprep.subr.mxu0 0.0
        %2226 = vmatpush2.xpose.msra.mxu0 0.0
        %2227 = vmatprep.subr.mxu0 0.0
        %2228 = vmatpush2.xpose.msra.mxu0 0.0
        %2229 = vmatprep.subr.mxu0 0.0
        %2230 = vmatpush2.xpose.msra.mxu0 0.0
        %2231 = vmatprep.subr.mxu0 0.0
        %2232 = vmatpush2.xpose.msra.mxu0 0.0
        %2233 = vmatprep.subr.mxu0 0.0
        %2234 = vmatpush2.xpose.msra.mxu0 0.0
        %2235 = vmatprep.subr.mxu0 0.0
        %2236 = vmatpush2.xpose.msra.mxu0 0.0
        %2237 = vmatprep.subr.mxu0 0.0
        %2238 = vmatpush2.xpose.msra.mxu0 0.0
        %2239 = vmatprep.mubr.f32.mxu0 0.0
        %2240 = vmatmul.mubr.f32.gmra.mxu0 %v2169
        %v2241 = vpop.f32.mrf.mxu0
        %v2242 = vadd.f32 0.0, %v2241
        %v2243 = vpop.f32.mrf.mxu0
        %2244 = vdwg.mxu0
        %v2245 = vmul.f32 %v2242, 0.35355338
        %v2246 = vsel %vm1958, %v2245, -inf
        %2247 = vmax.xlane.f32.xlu0 %v2246
        %v2248 = vpop.xlane.xlu0 %2247
        %v2249 = vsub.f32 %v2245, %v2248
        %v2250 = vmul.f32 %v2249, 1.442695
        %v2251 = vpow.pop %v2250
        %v2252 = vsel %vm1958, %v2251, 0.0
        %2253 = vadd.xlane.f32.xlu0 %v2252
        %v2254 = vpop.xlane.xlu0 %2253
        %v2255 = vrcp.pop %v2254
        %v2256 = vmul.f32 %v2251, %v2255
        %s2257 = scalar_lea.vmem %s647, 24 [#allocation15]
        %2258 = vst.msk [vmem:[%s2257] sm:$0xff] %vm1958, %v2256
        %v2260 = vsel %vm808, %v1745, 0
        %v2263 = vsel %vm808, %v1841, 0
        %v2266 = vsel %vm808, %v1846, 0
        %2268 = vmatprep.subr.mxu0 0.0
        %2269 = vmatpush1.xpose.msra.mxu0 0.0
        %2270 = vmatprep.subr.mxu0 0.0
        %2271 = vmatpush1.xpose.msra.mxu0 0.0
        %2272 = vmatprep.subr.mxu0 0.0
        %2273 = vmatpush1.xpose.msra.mxu0 0.0
        %2274 = vmatprep.subr.mxu0 0.0
        %2275 = vmatpush1.xpose.msra.mxu0 0.0
        %2276 = vmatprep.subr.mxu0 0.0
        %2277 = vmatpush1.xpose.msra.mxu0 0.0
        %2278 = vmatprep.subr.mxu0 0.0
        %2279 = vmatpush1.xpose.msra.mxu0 0.0
        %2280 = vmatprep.subr.mxu0 0.0
        %2281 = vmatpush1.xpose.msra.mxu0 0.0
        %2282 = vmatprep.subr.mxu0 0.0
        %2283 = vmatpush1.xpose.msra.mxu0 0.0
        %2284 = vmatprep.subr.mxu0 0.0
        %2285 = vmatpush1.xpose.msra.mxu0 0.0
        %2286 = vmatprep.subr.mxu0 0.0
        %2287 = vmatpush1.xpose.msra.mxu0 0.0
        %2288 = vmatprep.subr.mxu0 0.0
        %2289 = vmatpush1.xpose.msra.mxu0 0.0
        %2290 = vmatprep.subr.mxu0 0.0
        %2291 = vmatpush1.xpose.msra.mxu0 0.0
        %2292 = vmatprep.subr.mxu0 0.0
        %2293 = vmatpush1.xpose.msra.mxu0 0.0
        %2294 = vmatprep.subr.mxu0 0.0
        %2295 = vmatpush1.xpose.msra.mxu0 0.0
        %2296 = vmatprep.subr.mxu0 0.0
        %2297 = vmatpush1.xpose.msra.mxu0 %v2266
        %2298 = vmatprep.subr.mxu0 0.0
        %2299 = vmatpush1.xpose.msra.mxu0 %v2263
        %2300 = vmatprep.subr.mxu0 0.0
        %2301 = vmatpush2.xpose.msra.mxu0 0.0
        %2302 = vmatprep.subr.mxu0 0.0
        %2303 = vmatpush2.xpose.msra.mxu0 0.0
        %2304 = vmatprep.subr.mxu0 0.0
        %2305 = vmatpush2.xpose.msra.mxu0 0.0
        %2306 = vmatprep.subr.mxu0 0.0
        %2307 = vmatpush2.xpose.msra.mxu0 0.0
        %2308 = vmatprep.subr.mxu0 0.0
        %2309 = vmatpush2.xpose.msra.mxu0 0.0
        %2310 = vmatprep.subr.mxu0 0.0
        %2311 = vmatpush2.xpose.msra.mxu0 0.0
        %2312 = vmatprep.subr.mxu0 0.0
        %2313 = vmatpush2.xpose.msra.mxu0 0.0
        %2314 = vmatprep.subr.mxu0 0.0
        %2315 = vmatpush2.xpose.msra.mxu0 0.0
        %2316 = vmatprep.subr.mxu0 0.0
        %2317 = vmatpush2.xpose.msra.mxu0 0.0
        %2318 = vmatprep.subr.mxu0 0.0
        %2319 = vmatpush2.xpose.msra.mxu0 0.0
        %2320 = vmatprep.subr.mxu0 0.0
        %2321 = vmatpush2.xpose.msra.mxu0 0.0
        %2322 = vmatprep.subr.mxu0 0.0
        %2323 = vmatpush2.xpose.msra.mxu0 0.0
        %2324 = vmatprep.subr.mxu0 0.0
        %2325 = vmatpush2.xpose.msra.mxu0 0.0
        %2326 = vmatprep.subr.mxu0 0.0
        %2327 = vmatpush2.xpose.msra.mxu0 0.0
        %2328 = vmatprep.subr.mxu0 0.0
        %2329 = vmatpush2.xpose.msra.mxu0 0.0
        %2330 = vmatprep.subr.mxu0 0.0
        %2331 = vmatpush2.xpose.msra.mxu0 0.0
        %2332 = vmatprep.mubr.f32.mxu0 0.0
        %2333 = vmatmul.mubr.f32.gmra.mxu0 %v2260
        %v2334 = vpop.f32.mrf.mxu0
        %v2335 = vadd.f32 0.0, %v2334
        %v2336 = vpop.f32.mrf.mxu0
        %2337 = vdwg.mxu0
        %v2338 = vmul.f32 %v2335, 0.35355338
        %v2339 = vsel %vm1958, %v2338, -inf
        %2340 = vmax.xlane.f32.xlu0 %v2339
        %v2341 = vpop.xlane.xlu0 %2340
        %v2342 = vsub.f32 %v2338, %v2341
        %v2343 = vmul.f32 %v2342, 1.442695
        %v2344 = vpow.pop %v2343
        %v2345 = vsel %vm1958, %v2344, 0.0
        %2346 = vadd.xlane.f32.xlu0 %v2345
        %v2347 = vpop.xlane.xlu0 %2346
        %v2348 = vrcp.pop %v2347
        %v2349 = vmul.f32 %v2344, %v2348
        %s2350 = scalar_lea.vmem %s647, 32 [#allocation15]
        %2351 = vst.msk [vmem:[%s2350] sm:$0xff] %vm1958, %v2349
        %2352 = vrot.lane.b32.xlu0 %v1745, 120
        %v2353 = vpop.permute.xlu0 %2352
        %2354 = vrot.lane.b32.xlu0 %v1841, 120
        %v2355 = vpop.permute.xlu0 %2354
        %2356 = vrot.lane.b32.xlu0 %v1846, 120
        %v2357 = vpop.permute.xlu0 %2356
        %v2358 = vsel %vm808, %v2353, 0
        %v2360 = vsel %vm808, %v2355, 0
        %v2362 = vsel %vm808, %v2357, 0
        %2364 = vmatprep.subr.mxu0 0.0
        %2365 = vmatpush1.xpose.msra.mxu0 0.0
        %2366 = vmatprep.subr.mxu0 0.0
        %2367 = vmatpush1.xpose.msra.mxu0 0.0
        %2368 = vmatprep.subr.mxu0 0.0
        %2369 = vmatpush1.xpose.msra.mxu0 0.0
        %2370 = vmatprep.subr.mxu0 0.0
        %2371 = vmatpush1.xpose.msra.mxu0 0.0
        %2372 = vmatprep.subr.mxu0 0.0
        %2373 = vmatpush1.xpose.msra.mxu0 0.0
        %2374 = vmatprep.subr.mxu0 0.0
        %2375 = vmatpush1.xpose.msra.mxu0 0.0
        %2376 = vmatprep.subr.mxu0 0.0
        %2377 = vmatpush1.xpose.msra.mxu0 0.0
        %2378 = vmatprep.subr.mxu0 0.0
        %2379 = vmatpush1.xpose.msra.mxu0 0.0
        %2380 = vmatprep.subr.mxu0 0.0
        %2381 = vmatpush1.xpose.msra.mxu0 0.0
        %2382 = vmatprep.subr.mxu0 0.0
        %2383 = vmatpush1.xpose.msra.mxu0 0.0
        %2384 = vmatprep.subr.mxu0 0.0
        %2385 = vmatpush1.xpose.msra.mxu0 0.0
        %2386 = vmatprep.subr.mxu0 0.0
        %2387 = vmatpush1.xpose.msra.mxu0 0.0
        %2388 = vmatprep.subr.mxu0 0.0
        %2389 = vmatpush1.xpose.msra.mxu0 0.0
        %2390 = vmatprep.subr.mxu0 0.0
        %2391 = vmatpush1.xpose.msra.mxu0 0.0
        %2392 = vmatprep.subr.mxu0 0.0
        %2393 = vmatpush1.xpose.msra.mxu0 %v2362
        %2394 = vmatprep.subr.mxu0 0.0
        %2395 = vmatpush1.xpose.msra.mxu0 %v2360
        %2396 = vmatprep.subr.mxu0 0.0
        %2397 = vmatpush2.xpose.msra.mxu0 0.0
        %2398 = vmatprep.subr.mxu0 0.0
        %2399 = vmatpush2.xpose.msra.mxu0 0.0
        %2400 = vmatprep.subr.mxu0 0.0
        %2401 = vmatpush2.xpose.msra.mxu0 0.0
        %2402 = vmatprep.subr.mxu0 0.0
        %2403 = vmatpush2.xpose.msra.mxu0 0.0
        %2404 = vmatprep.subr.mxu0 0.0
        %2405 = vmatpush2.xpose.msra.mxu0 0.0
        %2406 = vmatprep.subr.mxu0 0.0
        %2407 = vmatpush2.xpose.msra.mxu0 0.0
        %2408 = vmatprep.subr.mxu0 0.0
        %2409 = vmatpush2.xpose.msra.mxu0 0.0
        %2410 = vmatprep.subr.mxu0 0.0
        %2411 = vmatpush2.xpose.msra.mxu0 0.0
        %2412 = vmatprep.subr.mxu0 0.0
        %2413 = vmatpush2.xpose.msra.mxu0 0.0
        %2414 = vmatprep.subr.mxu0 0.0
        %2415 = vmatpush2.xpose.msra.mxu0 0.0
        %2416 = vmatprep.subr.mxu0 0.0
        %2417 = vmatpush2.xpose.msra.mxu0 0.0
        %2418 = vmatprep.subr.mxu0 0.0
        %2419 = vmatpush2.xpose.msra.mxu0 0.0
        %2420 = vmatprep.subr.mxu0 0.0
        %2421 = vmatpush2.xpose.msra.mxu0 0.0
        %2422 = vmatprep.subr.mxu0 0.0
        %2423 = vmatpush2.xpose.msra.mxu0 0.0
        %2424 = vmatprep.subr.mxu0 0.0
        %2425 = vmatpush2.xpose.msra.mxu0 0.0
        %2426 = vmatprep.subr.mxu0 0.0
        %2427 = vmatpush2.xpose.msra.mxu0 0.0
        %2428 = vmatprep.mubr.f32.mxu0 0.0
        %2429 = vmatmul.mubr.f32.gmra.mxu0 %v2358
        %v2430 = vpop.f32.mrf.mxu0
        %v2431 = vadd.f32 0.0, %v2430
        %v2432 = vpop.f32.mrf.mxu0
        %2433 = vdwg.mxu0
        %v2434 = vmul.f32 %v2431, 0.35355338
        %v2435 = vsel %vm1958, %v2434, -inf
        %2436 = vmax.xlane.f32.xlu0 %v2435
        %v2437 = vpop.xlane.xlu0 %2436
        %v2438 = vsub.f32 %v2434, %v2437
        %v2439 = vmul.f32 %v2438, 1.442695
        %v2440 = vpow.pop %v2439
        %v2441 = vsel %vm1958, %v2440, 0.0
        %2442 = vadd.xlane.f32.xlu0 %v2441
        %v2443 = vpop.xlane.xlu0 %2442
        %v2444 = vrcp.pop %v2443
        %v2445 = vmul.f32 %v2440, %v2444
        %s2446 = scalar_lea.vmem %s647, 40 [#allocation15]
        %2447 = vst.msk [vmem:[%s2446] sm:$0xff] %vm1958, %v2445
        %2448 = vrot.lane.b32.xlu0 %v1745, 112
        %v2449 = vpop.permute.xlu0 %2448
        %2450 = vrot.lane.b32.xlu0 %v1841, 112
        %v2451 = vpop.permute.xlu0 %2450
        %2452 = vrot.lane.b32.xlu0 %v1846, 112
        %v2453 = vpop.permute.xlu0 %2452
        %v2454 = vsel %vm808, %v2449, 0
        %v2456 = vsel %vm808, %v2451, 0
        %v2458 = vsel %vm808, %v2453, 0
        %2460 = vmatprep.subr.mxu0 0.0
        %2461 = vmatpush1.xpose.msra.mxu0 0.0
        %2462 = vmatprep.subr.mxu0 0.0
        %2463 = vmatpush1.xpose.msra.mxu0 0.0
        %2464 = vmatprep.subr.mxu0 0.0
        %2465 = vmatpush1.xpose.msra.mxu0 0.0
        %2466 = vmatprep.subr.mxu0 0.0
        %2467 = vmatpush1.xpose.msra.mxu0 0.0
        %2468 = vmatprep.subr.mxu0 0.0
        %2469 = vmatpush1.xpose.msra.mxu0 0.0
        %2470 = vmatprep.subr.mxu0 0.0
        %2471 = vmatpush1.xpose.msra.mxu0 0.0
        %2472 = vmatprep.subr.mxu0 0.0
        %2473 = vmatpush1.xpose.msra.mxu0 0.0
        %2474 = vmatprep.subr.mxu0 0.0
        %2475 = vmatpush1.xpose.msra.mxu0 0.0
        %2476 = vmatprep.subr.mxu0 0.0
        %2477 = vmatpush1.xpose.msra.mxu0 0.0
        %2478 = vmatprep.subr.mxu0 0.0
        %2479 = vmatpush1.xpose.msra.mxu0 0.0
        %2480 = vmatprep.subr.mxu0 0.0
        %2481 = vmatpush1.xpose.msra.mxu0 0.0
        %2482 = vmatprep.subr.mxu0 0.0
        %2483 = vmatpush1.xpose.msra.mxu0 0.0
        %2484 = vmatprep.subr.mxu0 0.0
        %2485 = vmatpush1.xpose.msra.mxu0 0.0
        %2486 = vmatprep.subr.mxu0 0.0
        %2487 = vmatpush1.xpose.msra.mxu0 0.0
        %2488 = vmatprep.subr.mxu0 0.0
        %2489 = vmatpush1.xpose.msra.mxu0 %v2458
        %2490 = vmatprep.subr.mxu0 0.0
        %2491 = vmatpush1.xpose.msra.mxu0 %v2456
        %2492 = vmatprep.subr.mxu0 0.0
        %2493 = vmatpush2.xpose.msra.mxu0 0.0
        %2494 = vmatprep.subr.mxu0 0.0
        %2495 = vmatpush2.xpose.msra.mxu0 0.0
        %2496 = vmatprep.subr.mxu0 0.0
        %2497 = vmatpush2.xpose.msra.mxu0 0.0
        %2498 = vmatprep.subr.mxu0 0.0
        %2499 = vmatpush2.xpose.msra.mxu0 0.0
        %2500 = vmatprep.subr.mxu0 0.0
        %2501 = vmatpush2.xpose.msra.mxu0 0.0
        %2502 = vmatprep.subr.mxu0 0.0
        %2503 = vmatpush2.xpose.msra.mxu0 0.0
        %2504 = vmatprep.subr.mxu0 0.0
        %2505 = vmatpush2.xpose.msra.mxu0 0.0
        %2506 = vmatprep.subr.mxu0 0.0
        %2507 = vmatpush2.xpose.msra.mxu0 0.0
        %2508 = vmatprep.subr.mxu0 0.0
        %2509 = vmatpush2.xpose.msra.mxu0 0.0
        %2510 = vmatprep.subr.mxu0 0.0
        %2511 = vmatpush2.xpose.msra.mxu0 0.0
        %2512 = vmatprep.subr.mxu0 0.0
        %2513 = vmatpush2.xpose.msra.mxu0 0.0
        %2514 = vmatprep.subr.mxu0 0.0
        %2515 = vmatpush2.xpose.msra.mxu0 0.0
        %2516 = vmatprep.subr.mxu0 0.0
        %2517 = vmatpush2.xpose.msra.mxu0 0.0
        %2518 = vmatprep.subr.mxu0 0.0
        %2519 = vmatpush2.xpose.msra.mxu0 0.0
        %2520 = vmatprep.subr.mxu0 0.0
        %2521 = vmatpush2.xpose.msra.mxu0 0.0
        %2522 = vmatprep.subr.mxu0 0.0
        %2523 = vmatpush2.xpose.msra.mxu0 0.0
        %2524 = vmatprep.mubr.f32.mxu0 0.0
        %2525 = vmatmul.mubr.f32.gmra.mxu0 %v2454
        %v2526 = vpop.f32.mrf.mxu0
        %v2527 = vadd.f32 0.0, %v2526
        %v2528 = vpop.f32.mrf.mxu0
        %2529 = vdwg.mxu0
        %v2530 = vmul.f32 %v2527, 0.35355338
        %v2531 = vsel %vm1958, %v2530, -inf
        %2532 = vmax.xlane.f32.xlu0 %v2531
        %v2533 = vpop.xlane.xlu0 %2532
        %v2534 = vsub.f32 %v2530, %v2533
        %v2535 = vmul.f32 %v2534, 1.442695
        %v2536 = vpow.pop %v2535
        %v2537 = vsel %vm1958, %v2536, 0.0
        %2538 = vadd.xlane.f32.xlu0 %v2537
        %v2539 = vpop.xlane.xlu0 %2538
        %v2540 = vrcp.pop %v2539
        %v2541 = vmul.f32 %v2536, %v2540
        %s2542 = scalar_lea.vmem %s647, 48 [#allocation15]
        %2543 = vst.msk [vmem:[%s2542] sm:$0xff] %vm1958, %v2541
        %2544 = vrot.lane.b32.xlu0 %v1745, 104
        %v2545 = vpop.permute.xlu0 %2544
        %2546 = vrot.lane.b32.xlu0 %v1841, 104
        %v2547 = vpop.permute.xlu0 %2546
        %2548 = vrot.lane.b32.xlu0 %v1846, 104
        %v2549 = vpop.permute.xlu0 %2548
        %v2550 = vsel %vm808, %v2545, 0
        %v2552 = vsel %vm808, %v2547, 0
        %v2554 = vsel %vm808, %v2549, 0
        %2556 = vmatprep.subr.mxu0 0.0
        %2557 = vmatpush1.xpose.msra.mxu0 0.0
        %2558 = vmatprep.subr.mxu0 0.0
        %2559 = vmatpush1.xpose.msra.mxu0 0.0
        %2560 = vmatprep.subr.mxu0 0.0
        %2561 = vmatpush1.xpose.msra.mxu0 0.0
        %2562 = vmatprep.subr.mxu0 0.0
        %2563 = vmatpush1.xpose.msra.mxu0 0.0
        %2564 = vmatprep.subr.mxu0 0.0
        %2565 = vmatpush1.xpose.msra.mxu0 0.0
        %2566 = vmatprep.subr.mxu0 0.0
        %2567 = vmatpush1.xpose.msra.mxu0 0.0
        %2568 = vmatprep.subr.mxu0 0.0
        %2569 = vmatpush1.xpose.msra.mxu0 0.0
        %2570 = vmatprep.subr.mxu0 0.0
        %2571 = vmatpush1.xpose.msra.mxu0 0.0
        %2572 = vmatprep.subr.mxu0 0.0
        %2573 = vmatpush1.xpose.msra.mxu0 0.0
        %2574 = vmatprep.subr.mxu0 0.0
        %2575 = vmatpush1.xpose.msra.mxu0 0.0
        %2576 = vmatprep.subr.mxu0 0.0
        %2577 = vmatpush1.xpose.msra.mxu0 0.0
        %2578 = vmatprep.subr.mxu0 0.0
        %2579 = vmatpush1.xpose.msra.mxu0 0.0
        %2580 = vmatprep.subr.mxu0 0.0
        %2581 = vmatpush1.xpose.msra.mxu0 0.0
        %2582 = vmatprep.subr.mxu0 0.0
        %2583 = vmatpush1.xpose.msra.mxu0 0.0
        %2584 = vmatprep.subr.mxu0 0.0
        %2585 = vmatpush1.xpose.msra.mxu0 %v2554
        %2586 = vmatprep.subr.mxu0 0.0
        %2587 = vmatpush1.xpose.msra.mxu0 %v2552
        %2588 = vmatprep.subr.mxu0 0.0
        %2589 = vmatpush2.xpose.msra.mxu0 0.0
        %2590 = vmatprep.subr.mxu0 0.0
        %2591 = vmatpush2.xpose.msra.mxu0 0.0
        %2592 = vmatprep.subr.mxu0 0.0
        %2593 = vmatpush2.xpose.msra.mxu0 0.0
        %2594 = vmatprep.subr.mxu0 0.0
        %2595 = vmatpush2.xpose.msra.mxu0 0.0
        %2596 = vmatprep.subr.mxu0 0.0
        %2597 = vmatpush2.xpose.msra.mxu0 0.0
        %2598 = vmatprep.subr.mxu0 0.0
        %2599 = vmatpush2.xpose.msra.mxu0 0.0
        %2600 = vmatprep.subr.mxu0 0.0
        %2601 = vmatpush2.xpose.msra.mxu0 0.0
        %2602 = vmatprep.subr.mxu0 0.0
        %2603 = vmatpush2.xpose.msra.mxu0 0.0
        %2604 = vmatprep.subr.mxu0 0.0
        %2605 = vmatpush2.xpose.msra.mxu0 0.0
        %2606 = vmatprep.subr.mxu0 0.0
        %2607 = vmatpush2.xpose.msra.mxu0 0.0
        %2608 = vmatprep.subr.mxu0 0.0
        %2609 = vmatpush2.xpose.msra.mxu0 0.0
        %2610 = vmatprep.subr.mxu0 0.0
        %2611 = vmatpush2.xpose.msra.mxu0 0.0
        %2612 = vmatprep.subr.mxu0 0.0
        %2613 = vmatpush2.xpose.msra.mxu0 0.0
        %2614 = vmatprep.subr.mxu0 0.0
        %2615 = vmatpush2.xpose.msra.mxu0 0.0
        %2616 = vmatprep.subr.mxu0 0.0
        %2617 = vmatpush2.xpose.msra.mxu0 0.0
        %2618 = vmatprep.subr.mxu0 0.0
        %2619 = vmatpush2.xpose.msra.mxu0 0.0
        %2620 = vmatprep.mubr.f32.mxu0 0.0
        %2621 = vmatmul.mubr.f32.gmra.mxu0 %v2550
        %v2622 = vpop.f32.mrf.mxu0
        %v2623 = vadd.f32 0.0, %v2622
        %v2624 = vpop.f32.mrf.mxu0
        %2625 = vdwg.mxu0
        %v2626 = vmul.f32 %v2623, 0.35355338
        %v2627 = vsel %vm1958, %v2626, -inf
        %2628 = vmax.xlane.f32.xlu0 %v2627
        %v2629 = vpop.xlane.xlu0 %2628
        %v2630 = vsub.f32 %v2626, %v2629
        %v2631 = vmul.f32 %v2630, 1.442695
        %v2632 = vpow.pop %v2631
        %v2633 = vsel %vm1958, %v2632, 0.0
        %2634 = vadd.xlane.f32.xlu0 %v2633
        %v2635 = vpop.xlane.xlu0 %2634
        %v2636 = vrcp.pop %v2635
        %v2637 = vmul.f32 %v2632, %v2636
        %s2638 = scalar_lea.vmem %s647, 56 [#allocation15]
        %2639 = vst.msk [vmem:[%s2638] sm:$0xff] %vm1958, %v2637
        %v2640 = vld [vmem:[#allocation3] sm:$0xff]
        %v2641 = vld [vmem:[#allocation3 + $0x8] sm:$0xff]
        %v2642 = vld [vmem:[%s555] sm:$0xff]
        %v2643 = vld [vmem:[%s555 + $0x8] sm:$0xff]
        %v2644 = vld [vmem:[%s555 + $0x10] sm:$0xff]
        %v2645 = vld [vmem:[%s555 + $0x18] sm:$0xff]
        %v2647 = vsel %vm693, %v2640, 0
        %v2650 = vsel %vm693, %v2641, 0
        %2652 = vmatprep.subr.mxu0 0.0
        %2653 = vmatpush1.msra.mxu0 0.0
        %2654 = vmatprep.subr.mxu0 0.0
        %2655 = vmatpush1.msra.mxu0 0.0
        %2656 = vmatprep.subr.mxu0 0.0
        %2657 = vmatpush1.msra.mxu0 0.0
        %2658 = vmatprep.subr.mxu0 0.0
        %2659 = vmatpush1.msra.mxu0 0.0
        %2660 = vmatprep.subr.mxu0 0.0
        %2661 = vmatpush1.msra.mxu0 0.0
        %2662 = vmatprep.subr.mxu0 0.0
        %2663 = vmatpush1.msra.mxu0 0.0
        %2664 = vmatprep.subr.mxu0 0.0
        %2665 = vmatpush1.msra.mxu0 0.0
        %2666 = vmatprep.subr.mxu0 0.0
        %2667 = vmatpush1.msra.mxu0 0.0
        %2668 = vmatprep.subr.mxu0 0.0
        %2669 = vmatpush1.msra.mxu0 0.0
        %2670 = vmatprep.subr.mxu0 0.0
        %2671 = vmatpush1.msra.mxu0 0.0
        %2672 = vmatprep.subr.mxu0 0.0
        %2673 = vmatpush1.msra.mxu0 0.0
        %2674 = vmatprep.subr.mxu0 0.0
        %2675 = vmatpush1.msra.mxu0 0.0
        %2676 = vmatprep.subr.mxu0 0.0
        %2677 = vmatpush1.msra.mxu0 %v2645
        %2678 = vmatprep.subr.mxu0 0.0
        %2679 = vmatpush1.msra.mxu0 %v2644
        %2680 = vmatprep.subr.mxu0 0.0
        %2681 = vmatpush1.msra.mxu0 %v2643
        %2682 = vmatprep.subr.mxu0 0.0
        %2683 = vmatpush1.msra.mxu0 %v2642
        %2684 = vmatprep.subr.mxu0 0.0
        %2685 = vmatpush2.msra.mxu0 0.0
        %2686 = vmatprep.subr.mxu0 0.0
        %2687 = vmatpush2.msra.mxu0 0.0
        %2688 = vmatprep.subr.mxu0 0.0
        %2689 = vmatpush2.msra.mxu0 0.0
        %2690 = vmatprep.subr.mxu0 0.0
        %2691 = vmatpush2.msra.mxu0 0.0
        %2692 = vmatprep.subr.mxu0 0.0
        %2693 = vmatpush2.msra.mxu0 0.0
        %2694 = vmatprep.subr.mxu0 0.0
        %2695 = vmatpush2.msra.mxu0 0.0
        %2696 = vmatprep.subr.mxu0 0.0
        %2697 = vmatpush2.msra.mxu0 0.0
        %2698 = vmatprep.subr.mxu0 0.0
        %2699 = vmatpush2.msra.mxu0 0.0
        %2700 = vmatprep.subr.mxu0 0.0
        %2701 = vmatpush2.msra.mxu0 0.0
        %2702 = vmatprep.subr.mxu0 0.0
        %2703 = vmatpush2.msra.mxu0 0.0
        %2704 = vmatprep.subr.mxu0 0.0
        %2705 = vmatpush2.msra.mxu0 0.0
        %2706 = vmatprep.subr.mxu0 0.0
        %2707 = vmatpush2.msra.mxu0 0.0
        %2708 = vmatprep.subr.mxu0 0.0
        %2709 = vmatpush2.msra.mxu0 0.0
        %2710 = vmatprep.subr.mxu0 0.0
        %2711 = vmatpush2.msra.mxu0 0.0
        %2712 = vmatprep.subr.mxu0 0.0
        %2713 = vmatpush2.msra.mxu0 0.0
        %2714 = vmatprep.subr.mxu0 0.0
        %2715 = vmatpush2.msra.mxu0 0.0
        %2716 = vmatprep.mubr.f32.mxu0 0.0
        %2717 = vmatmul.mubr.f32.gmra.mxu0 %v2647
        %v2718 = vpop.f32.mrf.mxu0
        %v2719 = vadd.f32 0.0, %v2718
        %v2720 = vpop.f32.mrf.mxu0
        %2721 = vmatprep.mubr.f32.mxu0 0.0
        %2722 = vmatmul.mubr.f32.gmra.mxu0 %v2650
        %v2723 = vpop.f32.mrf.mxu0
        %v2724 = vadd.f32 0.0, %v2723
        %v2725 = vpop.f32.mrf.mxu0
        %2726 = vdwg.mxu0
        %v2727 = vadd.f32 %v1661, %v2719
        %v2728 = vadd.f32 %v1662, %v2724
        %v2729 = vsel %vm693, %v2727, 0.0
        %2730 = vadd.xlane.f32.xlu0 %v2729
        %v2731 = vpop.xlane.xlu0 %2730
        %v2732 = vsel %vm693, %v2728, 0.0
        %2733 = vadd.xlane.f32.xlu0 %v2732
        %v2734 = vpop.xlane.xlu0 %2733
        %v2735 = vmul.f32 %v2731, %v1642
        %v2736 = vmul.f32 %v2734, %v1642
        %v2737 = vsub.f32 %v2727, %v2735
        %v2738 = vsub.f32 %v2728, %v2736
        %v2739 = vmul.f32 %v2737, %v2737
        %v2740 = vmul.f32 %v2738, %v2738
        %v2741 = vsel %vm693, %v2739, 0.0
        %2742 = vadd.xlane.f32.xlu0 %v2741
        %v2743 = vpop.xlane.xlu0 %2742
        %v2744 = vsel %vm693, %v2740, 0.0
        %2745 = vadd.xlane.f32.xlu0 %v2744
        %v2746 = vpop.xlane.xlu0 %2745
        %v2747 = vmul.f32 %v2743, %v1642
        %v2748 = vmul.f32 %v2746, %v1642
        %v2749 = vadd.f32 %v2747, 1e-05
        %v2750 = vadd.f32 %v2748, 1e-05
        %v2751 = vrsqrt.pop %v2749
        %v2752 = vrsqrt.pop %v2750
        %v2753 = vmul.f32 %v2737, %v2751
        %v2754 = vmul.f32 %v2738, %v2752
        %v2755 = vld [vmem:[%s564] sm:$0xff]
        %v2756 = vld [vmem:[%s564 + $0x8] sm:$0xff]
        %v2757 = vld [vmem:[%s564 + $0x10] sm:$0xff]
        %v2758 = vld [vmem:[%s564 + $0x18] sm:$0xff]
        %v2759 = vld [vmem:[%s665] sm:$0x1]
        %v2761 = vlaneseq
        %v2762 = vshrl.u32 %v2761, 7
        %v2763 = vsub.s32 0, %v2762
        %v2764 = vrot.slane %v2759, %v2763
        %v2767 = vsel %vm693, %v2753, 0
        %v2770 = vsel %vm693, %v2754, 0
        %2772 = vmatprep.subr.mxu0 0.0
        %2773 = vmatpush1.msra.mxu0 0.0
        %2774 = vmatprep.subr.mxu0 0.0
        %2775 = vmatpush1.msra.mxu0 0.0
        %2776 = vmatprep.subr.mxu0 0.0
        %2777 = vmatpush1.msra.mxu0 0.0
        %2778 = vmatprep.subr.mxu0 0.0
        %2779 = vmatpush1.msra.mxu0 0.0
        %2780 = vmatprep.subr.mxu0 0.0
        %2781 = vmatpush1.msra.mxu0 0.0
        %2782 = vmatprep.subr.mxu0 0.0
        %2783 = vmatpush1.msra.mxu0 0.0
        %2784 = vmatprep.subr.mxu0 0.0
        %2785 = vmatpush1.msra.mxu0 0.0
        %2786 = vmatprep.subr.mxu0 0.0
        %2787 = vmatpush1.msra.mxu0 0.0
        %2788 = vmatprep.subr.mxu0 0.0
        %2789 = vmatpush1.msra.mxu0 0.0
        %2790 = vmatprep.subr.mxu0 0.0
        %2791 = vmatpush1.msra.mxu0 0.0
        %2792 = vmatprep.subr.mxu0 0.0
        %2793 = vmatpush1.msra.mxu0 0.0
        %2794 = vmatprep.subr.mxu0 0.0
        %2795 = vmatpush1.msra.mxu0 0.0
        %2796 = vmatprep.subr.mxu0 0.0
        %2797 = vmatpush1.msra.mxu0 %v2758
        %2798 = vmatprep.subr.mxu0 0.0
        %2799 = vmatpush1.msra.mxu0 %v2757
        %2800 = vmatprep.subr.mxu0 0.0
        %2801 = vmatpush1.msra.mxu0 %v2756
        %2802 = vmatprep.subr.mxu0 0.0
        %2803 = vmatpush1.msra.mxu0 %v2755
        %2804 = vmatprep.subr.mxu0 0.0
        %2805 = vmatpush2.msra.mxu0 0.0
        %2806 = vmatprep.subr.mxu0 0.0
        %2807 = vmatpush2.msra.mxu0 0.0
        %2808 = vmatprep.subr.mxu0 0.0
        %2809 = vmatpush2.msra.mxu0 0.0
        %2810 = vmatprep.subr.mxu0 0.0
        %2811 = vmatpush2.msra.mxu0 0.0
        %2812 = vmatprep.subr.mxu0 0.0
        %2813 = vmatpush2.msra.mxu0 0.0
        %2814 = vmatprep.subr.mxu0 0.0
        %2815 = vmatpush2.msra.mxu0 0.0
        %2816 = vmatprep.subr.mxu0 0.0
        %2817 = vmatpush2.msra.mxu0 0.0
        %2818 = vmatprep.subr.mxu0 0.0
        %2819 = vmatpush2.msra.mxu0 0.0
        %2820 = vmatprep.subr.mxu0 0.0
        %2821 = vmatpush2.msra.mxu0 0.0
        %2822 = vmatprep.subr.mxu0 0.0
        %2823 = vmatpush2.msra.mxu0 0.0
        %2824 = vmatprep.subr.mxu0 0.0
        %2825 = vmatpush2.msra.mxu0 0.0
        %2826 = vmatprep.subr.mxu0 0.0
        %2827 = vmatpush2.msra.mxu0 0.0
        %2828 = vmatprep.subr.mxu0 0.0
        %2829 = vmatpush2.msra.mxu0 0.0
        %2830 = vmatprep.subr.mxu0 0.0
        %2831 = vmatpush2.msra.mxu0 0.0
        %2832 = vmatprep.subr.mxu0 0.0
        %2833 = vmatpush2.msra.mxu0 0.0
        %2834 = vmatprep.subr.mxu0 0.0
        %2835 = vmatpush2.msra.mxu0 0.0
        %2836 = vmatprep.mubr.f32.mxu0 0.0
        %2837 = vmatmul.mubr.f32.gmra.mxu0 %v2767
        %v2838 = vpop.f32.mrf.mxu0
        %v2839 = vadd.f32 %v2764, %v2838
        %v2840 = vpop.f32.mrf.mxu0
        %2841 = vmatprep.mubr.f32.mxu0 0.0
        %2842 = vmatmul.mubr.f32.gmra.mxu0 %v2770
        %v2843 = vpop.f32.mrf.mxu0
        %v2844 = vadd.f32 %v2764, %v2843
        %v2845 = vpop.f32.mrf.mxu0
        %2846 = vdwg.mxu0
        %v2847 = vmax.f32 %v2839, 0.0
        %v2848 = vmax.f32 %v2844, 0.0
        %v2849 = vld [vmem:[%s670] sm:$0xff]
        %v2850 = vld [vmem:[%s670 + $0x8] sm:$0xff]
        %v2851 = vld [vmem:[%s670 + $0x10] sm:$0xff]
        %v2852 = vld [vmem:[%s670 + $0x18] sm:$0xff]
        %v2853 = vld [vmem:[%s670 + $0x20] sm:$0xff]
        %v2854 = vld [vmem:[%s670 + $0x28] sm:$0xff]
        %v2855 = vld [vmem:[%s670 + $0x30] sm:$0xff]
        %v2856 = vld [vmem:[%s670 + $0x38] sm:$0xff]
        %v2857 = vld [vmem:[%s673] sm:$0x1]
        %v2859 = vlaneseq
        %v2860 = vshrl.u32 %v2859, 7
        %v2861 = vsub.s32 0, %v2860
        %v2862 = vrot.slane %v2857, %v2861
        %vm2864 = vcmask 523264
        %v2866 = vsel %vm2864, %v2847, 0
        %v2869 = vsel %vm2864, %v2848, 0
        %2871 = vmatprep.subr.mxu0 0.0
        %2872 = vmatpush1.msra.mxu0 0.0
        %2873 = vmatprep.subr.mxu0 0.0
        %2874 = vmatpush1.msra.mxu0 0.0
        %2875 = vmatprep.subr.mxu0 0.0
        %2876 = vmatpush1.msra.mxu0 0.0
        %2877 = vmatprep.subr.mxu0 0.0
        %2878 = vmatpush1.msra.mxu0 0.0
        %2879 = vmatprep.subr.mxu0 0.0
        %2880 = vmatpush1.msra.mxu0 0.0
        %2881 = vmatprep.subr.mxu0 0.0
        %2882 = vmatpush1.msra.mxu0 0.0
        %2883 = vmatprep.subr.mxu0 0.0
        %2884 = vmatpush1.msra.mxu0 0.0
        %2885 = vmatprep.subr.mxu0 0.0
        %2886 = vmatpush1.msra.mxu0 0.0
        %2887 = vmatprep.subr.mxu0 0.0
        %2888 = vmatpush1.msra.mxu0 %v2856
        %2889 = vmatprep.subr.mxu0 0.0
        %2890 = vmatpush1.msra.mxu0 %v2855
        %2891 = vmatprep.subr.mxu0 0.0
        %2892 = vmatpush1.msra.mxu0 %v2854
        %2893 = vmatprep.subr.mxu0 0.0
        %2894 = vmatpush1.msra.mxu0 %v2853
        %2895 = vmatprep.subr.mxu0 0.0
        %2896 = vmatpush1.msra.mxu0 %v2852
        %2897 = vmatprep.subr.mxu0 0.0
        %2898 = vmatpush1.msra.mxu0 %v2851
        %2899 = vmatprep.subr.mxu0 0.0
        %2900 = vmatpush1.msra.mxu0 %v2850
        %2901 = vmatprep.subr.mxu0 0.0
        %2902 = vmatpush1.msra.mxu0 %v2849
        %2903 = vmatprep.subr.mxu0 0.0
        %2904 = vmatpush2.msra.mxu0 0.0
        %2905 = vmatprep.subr.mxu0 0.0
        %2906 = vmatpush2.msra.mxu0 0.0
        %2907 = vmatprep.subr.mxu0 0.0
        %2908 = vmatpush2.msra.mxu0 0.0
        %2909 = vmatprep.subr.mxu0 0.0
        %2910 = vmatpush2.msra.mxu0 0.0
        %2911 = vmatprep.subr.mxu0 0.0
        %2912 = vmatpush2.msra.mxu0 0.0
        %2913 = vmatprep.subr.mxu0 0.0
        %2914 = vmatpush2.msra.mxu0 0.0
        %2915 = vmatprep.subr.mxu0 0.0
        %2916 = vmatpush2.msra.mxu0 0.0
        %2917 = vmatprep.subr.mxu0 0.0
        %2918 = vmatpush2.msra.mxu0 0.0
        %2919 = vmatprep.subr.mxu0 0.0
        %2920 = vmatpush2.msra.mxu0 0.0
        %2921 = vmatprep.subr.mxu0 0.0
        %2922 = vmatpush2.msra.mxu0 0.0
        %2923 = vmatprep.subr.mxu0 0.0
        %2924 = vmatpush2.msra.mxu0 0.0
        %2925 = vmatprep.subr.mxu0 0.0
        %2926 = vmatpush2.msra.mxu0 0.0
        %2927 = vmatprep.subr.mxu0 0.0
        %2928 = vmatpush2.msra.mxu0 0.0
        %2929 = vmatprep.subr.mxu0 0.0
        %2930 = vmatpush2.msra.mxu0 0.0
        %2931 = vmatprep.subr.mxu0 0.0
        %2932 = vmatpush2.msra.mxu0 0.0
        %2933 = vmatprep.subr.mxu0 0.0
        %2934 = vmatpush2.msra.mxu0 0.0
        %2935 = vmatprep.mubr.f32.mxu0 0.0
        %2936 = vmatmul.mubr.f32.gmra.mxu0 %v2866
        %v2937 = vpop.f32.mrf.mxu0
        %v2938 = vadd.f32 %v2862, %v2937
        %v2939 = vpop.f32.mrf.mxu0
        %2940 = vmatprep.mubr.f32.mxu0 0.0
        %2941 = vmatmul.mubr.f32.gmra.mxu0 %v2869
        %v2942 = vpop.f32.mrf.mxu0
        %v2943 = vadd.f32 %v2862, %v2942
        %v2944 = vpop.f32.mrf.mxu0
        %2945 = vdwg.mxu0
        %v2946 = vadd.f32 %v2753, %v2938
        %v2947 = vadd.f32 %v2754, %v2943
        %v2948 = vsel %vm693, %v2946, 0.0
        %2949 = vadd.xlane.f32.xlu0 %v2948
        %v2950 = vpop.xlane.xlu0 %2949
        %v2951 = vsel %vm693, %v2947, 0.0
        %2952 = vadd.xlane.f32.xlu0 %v2951
        %v2953 = vpop.xlane.xlu0 %2952
        %v2954 = vmul.f32 %v2950, %v1642
        %v2955 = vmul.f32 %v2953, %v1642
        %v2956 = vsub.f32 %v2946, %v2954
        %v2957 = vsub.f32 %v2947, %v2955
        %v2958 = vmul.f32 %v2956, %v2956
        %v2959 = vmul.f32 %v2957, %v2957
        %v2960 = vsel %vm693, %v2958, 0.0
        %2961 = vadd.xlane.f32.xlu0 %v2960
        %v2962 = vpop.xlane.xlu0 %2961
        %v2963 = vsel %vm693, %v2959, 0.0
        %2964 = vadd.xlane.f32.xlu0 %v2963
        %v2965 = vpop.xlane.xlu0 %2964
        %v2966 = vmul.f32 %v2962, %v1642
        %v2967 = vmul.f32 %v2965, %v1642
        %v2968 = vadd.f32 %v2966, 1e-05
        %v2969 = vadd.f32 %v2967, 1e-05
        %v2970 = vrsqrt.pop %v2968
        %v2971 = vrsqrt.pop %v2969
        %v2972 = vmul.f32 %v2956, %v2970
        %v2973 = vmul.f32 %v2957, %v2971
        %2974 = vst.msk [vmem:[#allocation2] sm:$0xff] %vm693, %v2972
        %2975 = vst.msk [vmem:[#allocation2 + $0x8] sm:$0xff] %vm693, %v2973
        %2976 = vst.msk [vmem:[#allocation12] sm:$0xff] %vm693, %v2972
        %2977 = vst.msk [vmem:[#allocation12 + $0x8] sm:$0xff] %vm693, %v2973
        %s2978 = sand.u32 %s31, 1
        %s2979 = scalar_lea.sflag [#allocation14], %s2978
        %s2980 = sand.u32 %s336, 1
        %s2981 = smul.addr %s2980, 64
        %s2982 = scalar_lea.vmem [#allocation13], %s2981
        %s2983 = sand.u32 %s31, 1
        %s2984 = scalar_lea.sflag [#allocation14], %s2983
        %s2985 = sand.u32 %s362, 1
        %s2986 = smul.addr %s2985, 64
        %s2987 = scalar_lea.vmem [#allocation15], %s2986
        // Predicated region
        $region89: #{tpu_custom_call.1} parent=63 // pred_check
          %p2988 = pneg %p320
        $region90: #{tpu_custom_call.1} parent=63 // pred_check_branch
          %2990 = sbr.rel (%p2988) target = $region92
        $region91: #{tpu_custom_call.1} parent=63 // pred_region
          %s2992 = ssub.s32 256, 256
          %2993 = vsyncadd [#allocation6], %s2992
          %s2994 = sshll.u32 [#allocation12], 4
          %s2995 = int_to_ptr.vmem [resolvable:$true] %s2994
          %3000 = dma.vmem_to_hbm [thread:$0]  %s2995, 256, %s11, [#allocation6], 128, 128, 8
        $region92: #{tpu_custom_call.1} parent=63 // pred_fallthru
          _
        // Predicated region
        $region93: #{tpu_custom_call.1} parent=63 // pred_check
          %p3001 = pneg %p346
        $region94: #{tpu_custom_call.1} parent=63 // pred_check_branch
          %3003 = sbr.rel (%p3001) target = $region96
        $region95: #{tpu_custom_call.1} parent=63 // pred_region
          %s3005 = ssub.s32 1024, 1024
          %3006 = vsyncadd %s2979, %s3005
          %s3007 = smul.addr %s31, 8
          %s3008 = smul.addr %s3007, 128
          %s3009 = scalar_lea.hbm %s12, %s3008
          %s3010 = sshll.u32 %s2982, 4
          %s3011 = int_to_ptr.vmem [resolvable:$true] %s3010
          %3016 = dma.vmem_to_hbm [thread:$0]  %s3011, 1024, %s3009, %s2979, 128, 128, 8
        $region96: #{tpu_custom_call.1} parent=63 // pred_fallthru
          _
        // Predicated region
        $region97: #{tpu_custom_call.1} parent=63 // pred_check
          %p3017 = pneg %p372
        $region98: #{tpu_custom_call.1} parent=63 // pred_check_branch
          %3019 = sbr.rel (%p3017) target = $region100
        $region99: #{tpu_custom_call.1} parent=63 // pred_region
          %s3021 = ssub.s32 1024, 1024
          %3022 = vsyncadd %s2984, %s3021
          %s3023 = smul.addr %s31, 8
          %s3024 = smul.addr %s3023, 128
          %s3025 = scalar_lea.hbm %s13, %s3024
          %s3026 = sshll.u32 %s2987, 4
          %s3027 = int_to_ptr.vmem [resolvable:$true] %s3026
          %3032 = dma.vmem_to_hbm [thread:$0]  %s3027, 1024, %s3025, %s2984, 128, 128, 8
        $region100: #{tpu_custom_call.1} parent=63 // pred_fallthru
          _
        // Predicated region
        $region101: #{tpu_custom_call.1} parent=63 // pred_check
          %p3033 = pneg %p320
        $region102: #{tpu_custom_call.1} parent=63 // pred_check_branch
          %3035 = sbr.rel (%p3033) target = $region104
        $region103: #{tpu_custom_call.1} parent=63 // pred_region
          %3036 = dma.done [#allocation6], 256
        $region104: #{tpu_custom_call.1} parent=63 // pred_fallthru
          _
      $region64: #{tpu_custom_call.1} parent=5 // pred_fallthru
        _
      %p3037 = scmp.le.s32.totalorder 2, %s26
      // Predicated region
      $region105: #{tpu_custom_call.1} parent=5 // pred_check
        %p3038 = pneg %p3037
      $region106: #{tpu_custom_call.1} parent=5 // pred_check_branch
        %3040 = sbr.rel (%p3038) target = $region108
      $region107: #{tpu_custom_call.1} parent=5 // pred_region
        %s3041 = ssub.s32 %s26, 2
        // Predicated region
        $region109: #{tpu_custom_call.1} parent=107 // pred_check
          %p3042 = pneg %p352
        $region110: #{tpu_custom_call.1} parent=107 // pred_check_branch
          %3044 = sbr.rel (%p3042) target = $region112
        $region111: #{tpu_custom_call.1} parent=107 // pred_region
          %s3045 = sand.u32 %s32, 1
          %s3046 = scalar_lea.sflag [#allocation14], %s3045
          %s3047 = sand.u32 %s337, 1
          %s3048 = smul.addr %s3047, 64
          %s3049 = scalar_lea.vmem [#allocation13], %s3048
          %3050 = dma.done %s3046, 1024
        $region112: #{tpu_custom_call.1} parent=107 // pred_fallthru
          _
        // Predicated region
        $region113: #{tpu_custom_call.1} parent=107 // pred_check
          %p3051 = pneg %p378
        $region114: #{tpu_custom_call.1} parent=107 // pred_check_branch
          %3053 = sbr.rel (%p3051) target = $region116
        $region115: #{tpu_custom_call.1} parent=107 // pred_region
          %s3054 = sand.u32 %s32, 1
          %s3055 = scalar_lea.sflag [#allocation14], %s3054
          %s3056 = sand.u32 %s363, 1
          %s3057 = smul.addr %s3056, 64
          %s3058 = scalar_lea.vmem [#allocation15], %s3057
          %3059 = dma.done %s3055, 1024
        $region116: #{tpu_custom_call.1} parent=107 // pred_fallthru
          _
      $region108: #{tpu_custom_call.1} parent=5 // pred_fallthru
        _
    $region6: #{tpu_custom_call.1} parent=1 // loop_footer
      %s30 = sadd.s32 1, %s26
    $region7: #{tpu_custom_call.1} parent=1 // loop_footer_branch
      %25 = sbr.rel target = $region3
    $region8: #{tpu_custom_call.1} parent=1 // loop_exit
      _
    %3060 = vsyncpa [#allocation5], 1
    %s3061 = scalar_lea.sflag [#allocation5], 1
    %3062 = vsyncpa %s3061, 1
    %3063 = vsyncpa [#allocation8], 1
    %3064 = vsyncpa [#allocation6], 1
    %s3065 = scalar_lea.sflag [#allocation6], 1
    %3066 = vsyncpa %s3065, 1
    %3067 = vsyncpa [#allocation14], 1
    %s3068 = scalar_lea.sflag [#allocation14], 1
    %3069 = vsyncpa %s3068, 1

</llo_original>
